<compile_context>
chip_gen: v6e
topology: v6e:2x2x1
jax: 0.10.0
libtpu: 0.0.40
codegen_flags: <defaults>
</compile_context>

<pallas_src>
import math

import jax
import jax.numpy as jnp
from jax.experimental import pallas as pl
from jax.experimental.pallas import tpu as pltpu


_VMEM_LIMIT = 48 * 1024 * 1024   # safe headroom on v7x (64 MiB/TC), fine on v5e/v6e

_NAMES_1X1 = ("p2_1x1", "p3_1x1", "p4_1x1", "p5_1x1")
# Stacking order (index k) of the eight 3x3 blocks in all (8, ...) tensors.
_NAMES_3X3 = ("p5", "p4", "p3", "p2", "b2", "b3", "b4", "b5")


def _round_up(x, m):
    return ((x + m - 1) // m) * m


def _pick_row_tile(m, target):
    """Largest multiple-of-8 divisor of m that is <= target, capped so the
    (parallel) grid has >= 2 steps when possible (v7x has 2 TensorCores)."""
    if m % 8 != 0:
        return m                      # single block (block dim == full dim is legal)
    cap = min(target, m)
    if m >= 16:
        cap = min(cap, max(8, (m // 2) // 8 * 8))
    for cand in range(cap - cap % 8, 7, -8):
        if m % cand == 0:
            return cand
    return m


# ----------------------------------------------------------------------------
# Kernel A: fused quad 1x1 Conv (BN scale folded) + bias + ReLU + residual sums
# ----------------------------------------------------------------------------
def _quad_1x1_kernel(x2_ref, x3_ref, x4_ref, x5_ref, w_ref, b_ref, o_ref):
    # x*_ref : (tm, Cin) bf16        w_ref : (4, Cin, Coutp) bf16 (scale folded)
    # b_ref  : (4, 1, Coutp) f32     o_ref : (8, tm, Coutp) bf16
    def conv_block(c, x_ref):
        acc = jnp.dot(x_ref[...], w_ref[c], preferred_element_type=jnp.float32)
        return jnp.maximum(acc + b_ref[c], 0.0)

    y2 = conv_block(0, x2_ref)   # mla_p2_1x1
    y3 = conv_block(1, x3_ref)   # mla_p3_1x1
    y4 = conv_block(2, x4_ref)   # mla_p4_1x1
    y5 = conv_block(3, x5_ref)   # mla_p5_1x1

    p4p = y5 + y4                # mla_p4_plus
    p3p = p4p + y3               # mla_p3_plus
    p2p = p3p + y2               # mla_p2_plus
    b3p = y2 + y3                # mla_b3_plus   (b2_plus == y2)
    b4p = b3p + y4               # mla_b4_plus
    b5p = b4p + y5               # mla_b5_plus

    # Outputs ordered as the inputs of _NAMES_3X3 = (p5,p4,p3,p2,b2,b3,b4,b5).
    for k, v in enumerate((y5, p4p, p3p, p2p, y2, b3p, b4p, b5p)):
        o_ref[k] = v.astype(o_ref.dtype)


def _fused_1x1_and_sums(x2, x3, x4, x5, w1, b1, row_tile=512):
    # x*: (M, Cin) bf16 ; w1: (4, Cin, Coutp) bf16 ; b1: (4, 1, Coutp) f32
    m, cin = x2.shape
    coutp = w1.shape[-1]
    tm = _pick_row_tile(m, row_tile)

    act_spec = pl.BlockSpec((tm, cin), lambda i: (i, 0))
    return pl.pallas_call(
        _quad_1x1_kernel,
        out_shape=jax.ShapeDtypeStruct((8, m, coutp), jnp.bfloat16),
        grid=(m // tm,),
        in_specs=[
            act_spec, act_spec, act_spec, act_spec,
            pl.BlockSpec((4, cin, coutp), lambda i: (0, 0, 0)),   # weights (resident)
            pl.BlockSpec((4, 1, coutp), lambda i: (0, 0, 0)),     # folded BN bias
        ],
        out_specs=pl.BlockSpec((8, tm, coutp), lambda i: (0, i, 0)),
        compiler_params=pltpu.CompilerParams(
            dimension_semantics=("parallel",),
            vmem_limit_bytes=_VMEM_LIMIT),
    )(x2, x3, x4, x5, w1, b1)


# ----------------------------------------------------------------------------
# Kernel B: fused 3x3 Conv (BN scale folded) + bias + ReLU for all 8 blocks.
# Halo is built in-kernel: zero rows via leading-dim concat; the +-1 column
# shifts via one shifted copy per dx + an edge mask (no HBM pad, no im2col,
# no per-tap relayout, no extra MXU FLOPs).
# ----------------------------------------------------------------------------
def _oct_3x3_kernel(x_ref, w_ref, b_ref, o_ref):
    # x_ref : (1, 1, H, W, C) bf16     w_ref : (1, 3, 3, C, Co) bf16
    # b_ref : (1, 1, Co) f32           o_ref : (1, 1, H, W, Co) bf16
    h, w, co = o_ref.shape[2], o_ref.shape[3], o_ref.shape[4]
    c = x_ref.shape[4]
    hw = h * w
    ntot = (h + 2) * w

    # Top/bottom zero rows (H halo); flattened so each row is one pixel.
    x = x_ref[0, 0].astype(jnp.float32)                        # (H, W, C)
    zrow = jnp.zeros((1, w, c), jnp.float32)
    xpad = jnp.concatenate([zrow, x, zrow], axis=0)            # (H+2, W, C)
    xf = xpad.reshape(ntot, c)

    # Column position of each flattened row (for the W-edge halo masks).
    colpos = jax.lax.broadcasted_iota(
        jnp.int32, (h + 2, w, c), 1).reshape(ntot, c)

    wk = w_ref[0]                                              # (3, 3, C, Co)
    acc = jnp.zeros((hw, co), jnp.float32)

    for dx in range(3):
        s = dx - 1
        if s == 0:
            shifted = xf
        else:
            # shifted[j] = xf[j + s]; wrapped rows are masked below.
            k = s % ntot
            shifted = jnp.concatenate([xf[k:], xf[:k]], axis=0)
            edge = colpos == (0 if s == -1 else w - 1)         # W halo positions
            shifted = jnp.where(edge, 0.0, shifted)
        sb = shifted.astype(jnp.bfloat16).reshape(h + 2, w, c)
        for dy in range(3):
            slab = sb[dy:dy + h].reshape(hw, c)                # leading-dim slice
            acc = acc + jnp.dot(slab, wk[dy, dx],
                                preferred_element_type=jnp.float32)

    y = jnp.maximum(acc + b_ref[0], 0.0)
    o_ref[0, 0] = y.reshape(h, w, co).astype(o_ref.dtype)


def _fused_3x3(x_all, w3, b3):
    # x_all: (8, N, H, W, C) bf16 ; w3: (8, 3, 3, C, Coutp) bf16 ; b3: (8,1,Coutp)
    n_conv, n, h, w, c = x_all.shape
    coutp = w3.shape[-1]
    return pl.pallas_call(
        _oct_3x3_kernel,
        out_shape=jax.ShapeDtypeStruct((n_conv, n, h, w, coutp), jnp.bfloat16),
        grid=(n_conv, n),   # conv index outer -> weights resident over batch loop
        in_specs=[
            pl.BlockSpec((1, 1, h, w, c), lambda ci, bi: (ci, bi, 0, 0, 0)),
            pl.BlockSpec((1, 3, 3, c, coutp), lambda ci, bi: (ci, 0, 0, 0, 0)),
            pl.BlockSpec((1, 1, coutp), lambda ci, bi: (ci, 0, 0)),
        ],
        out_specs=pl.BlockSpec((1, 1, h, w, coutp),
                               lambda ci, bi: (ci, bi, 0, 0, 0)),
        compiler_params=pltpu.CompilerParams(
            dimension_semantics=("parallel", "parallel"),
            vmem_limit_bytes=_VMEM_LIMIT),
    )(x_all, w3, b3)


# ----------------------------------------------------------------------------
# Parameter init (deterministic, synthetic).  build_norm_layer is modeled as
# inference-mode BatchNorm2d folded into per-channel (scale, bias).
# ----------------------------------------------------------------------------
def init_params(key, in_channels, mla_channels, eps=1e-5):
    params = {}
    for name in _NAMES_1X1 + _NAMES_3X3:
        key, kw, kg, kb, km, kv = jax.random.split(key, 6)
        if name in _NAMES_1X1:
            w = 0.05 * jax.random.normal(
                kw, (1, 1, in_channels, mla_channels), jnp.float32)
        else:
            w = 0.05 * jax.random.normal(
                kw, (3, 3, mla_channels, mla_channels), jnp.float32)
        gamma = 1.0 + 0.1 * jax.random.normal(kg, (mla_channels,), jnp.float32)
        beta = 0.1 * jax.random.normal(kb, (mla_channels,), jnp.float32)
        mean = 0.1 * jax.random.normal(km, (mla_channels,), jnp.float32)
        var = 0.5 + jax.random.uniform(kv, (mla_channels,), jnp.float32)
        scale = gamma / jnp.sqrt(var + eps)
        bias = beta - mean * scale
        params[name] = dict(
            w=w, scale=scale.reshape(1, -1), bias=bias.reshape(1, -1))
    return params


def _prep_params(params, cin, cout, coutp):
    """Fold BN scale into the conv weights, cast to bf16, pad Cout -> coutp."""
    pad_o = coutp - cout
    w1, b1, w3, b3 = [], [], [], []
    for nm in _NAMES_1X1:
        p = params[nm]
        wf = p["w"].reshape(cin, cout) * p["scale"].reshape(1, cout)
        w1.append(jnp.pad(wf, ((0, 0), (0, pad_o))).astype(jnp.bfloat16))
        b1.append(jnp.pad(p["bias"].reshape(1, cout), ((0, 0), (0, pad_o))))
    for nm in _NAMES_3X3:
        p = params[nm]
        wf = p["w"] * p["scale"].reshape(1, 1, 1, cout)
        w3.append(jnp.pad(wf, ((0, 0), (0, 0), (0, pad_o),
                               (0, pad_o))).astype(jnp.bfloat16))
        b3.append(jnp.pad(p["bias"].reshape(1, cout), ((0, 0), (0, pad_o))))
    return jnp.stack(w1), jnp.stack(b1), jnp.stack(w3), jnp.stack(b3)


# ----------------------------------------------------------------------------
# Conv_BIMLA forward (Pallas path)
# ----------------------------------------------------------------------------
def conv_bimla_forward(params, res2, res3, res4, res5, row_tile=512):
    n, hw, cin = res2.shape
    h = w = int(math.sqrt(hw))
    if h * w != hw:
        raise ValueError("Conv_BIMLA expects square feature maps (hw square)")
    cout = params["p2_1x1"]["w"].shape[-1]
    coutp = _round_up(max(cout, 1), 128)     # lane-dense Cout (no-op if %128==0)
    m = n * hw

    w1, b1, w3, b3 = _prep_params(params, cin, cout, coutp)

    # Stage 1: four 1x1 Conv+BN+ReLU blocks + all residual sums, one call.
    xs = [r.reshape(m, cin).astype(jnp.bfloat16) for r in (res2, res3, res4, res5)]
    plus = _fused_1x1_and_sums(*xs, w1, b1, row_tile=row_tile)  # (8, M, Coutp) bf16

    # Stage 2: eight 3x3 Conv+BN+ReLU blocks, one call (halo built in-kernel).
    x_img = plus.reshape(8, n, h, w, coutp)                     # free reshape
    out_all = _fused_3x3(x_img, w3, b3)                         # (8,N,H,W,Coutp) bf16

    # _NAMES_3X3 order -> module return order (b2,b3,b4,b5,p2,p3,p4,p5), NCHW.
    # TODO(synk): if the downstream consumer accepts NHWC, drop this transpose
    # (pure layout pass) and return out_all[..., :cout] directly.
    def finish(x):
        return jnp.transpose(x[..., :cout], (0, 3, 1, 2)).astype(jnp.float32)

    p5, p4, p3, p2, bb2, bb3, bb4, bb5 = (out_all[i] for i in range(8))
    return tuple(map(finish, (bb2, bb3, bb4, bb5, p2, p3, p4, p5)))


# ----------------------------------------------------------------------------
# Pure-JAX reference (same precision policy: bf16 operands, f32 accumulate)
# ----------------------------------------------------------------------------
def _ref_conv_bn_relu(x_nhwc, p, padding):
    wf = (p["w"] * p["scale"].reshape((1,) * (p["w"].ndim - 1) + (-1,))
          ).astype(jnp.bfloat16)
    y = jax.lax.conv_general_dilated(
        x_nhwc.astype(jnp.bfloat16), wf, window_strides=(1, 1), padding=padding,
        dimension_numbers=("NHWC", "HWIO", "NHWC"),
        preferred_element_type=jnp.float32)
    return jnp.maximum(y + p["bias"].reshape(1, 1, 1, -1), 0.0)


def reference_forward(params, res2, res3, res4, res5):
    n, hw, cin = res2.shape
    h = w = int(math.sqrt(hw))
    to_img = lambda x: x.astype(jnp.float32).reshape(n, h, w, cin)
    r2, r3, r4, r5 = map(to_img, (res2, res3, res4, res5))

    c1 = lambda nm, x: _ref_conv_bn_relu(x, params[nm], "VALID")
    c3 = lambda nm, x: _ref_conv_bn_relu(x, params[nm], "SAME")

    y2, y3, y4, y5 = (c1("p2_1x1", r2), c1("p3_1x1", r3),
                      c1("p4_1x1", r4), c1("p5_1x1", r5))
    p4p = y5 + y4
    p3p = p4p + y3
    p2p = p3p + y2
    b2p = y2
    b3p = y2 + y3
    b4p = b3p + y4
    b5p = b4p + y5

    outs = (c3("b2", b2p), c3("b3", b3p), c3("b4", b4p), c3("b5", b5p),
            c3("p2", p2p), c3("p3", p3p), c3("p4", p4p), c3("p5", y5))
    to_nchw = lambda x: jnp.transpose(x, (0, 3, 1, 2)).astype(jnp.float32)
    return tuple(map(to_nchw, outs))


# TODO(synk): @auto_fp16 (mmcv mixed-precision wrapper) has no Pallas
# equivalent; the precision policy here is explicit (bf16 MXU operands and
# bf16 intermediate feature maps, f32 accumulate/bias/ReLU) since
# fp16_enabled=False in the module.

if __name__ == "__main__":
    # Small shapes consistent with the module: tokens (n, hw, in_channels).
    in_channels, mla_channels = 64, 32
    n, h = 2, 8
    hw = h * h

    key = jax.random.PRNGKey(0)
    key, k2, k3, k4, k5 = jax.random.split(key, 5)
    mk = lambda k: jax.random.normal(
        k, (n, hw, in_channels), jnp.float32).astype(jnp.bfloat16)
    res2, res3, res4, res5 = mk(k2), mk(k3), mk(k4), mk(k5)

    params = init_params(jax.random.PRNGKey(1), in_channels, mla_channels)

    fwd = jax.jit(conv_bimla_forward)
    outs = jax.block_until_ready(fwd(params, res2, res3, res4, res5))

    ref_fwd = jax.jit(reference_forward)
    refs = jax.block_until_ready(ref_fwd(params, res2, res3, res4, res5))

    for idx, (o, r) in enumerate(zip(outs, refs)):
        assert o.shape == (n, mla_channels, h, h), (idx, o.shape)
        o32 = o.astype(jnp.float32)
        r32 = r.astype(jnp.float32)
        ok = bool(jnp.all(jnp.abs(o32 - r32) <= 2e-2 + 1e-2 * jnp.abs(r32)))
        if not ok:
            err = float(jnp.max(jnp.abs(o32 - r32)))
            raise AssertionError(f"output {idx}: max abs err {err}")

    print("KERNEL_OK")
</pallas_src>

<mosaic_0001>
module attributes {stable_mosaic.version = 11 : i64} {
  func.func @_quad_1x1_kernel(%arg0: i32, %arg1: memref<64x64xbf16, #tpu.memory_space<vmem>>, %arg2: memref<64x64xbf16, #tpu.memory_space<vmem>>, %arg3: memref<64x64xbf16, #tpu.memory_space<vmem>>, %arg4: memref<64x64xbf16, #tpu.memory_space<vmem>>, %arg5: memref<4x64x128xbf16, #tpu.memory_space<vmem>>, %arg6: memref<4x1x128xf32, #tpu.memory_space<vmem>>, %arg7: memref<8x64x128xbf16, #tpu.memory_space<vmem>>) attributes {dimension_semantics = [#tpu.dimension_semantics<parallel>], iteration_bounds = array<i64: 2>, scalar_prefetch = 0 : i64, scratch_operands = 0 : i64, tpu.core_type = #tpu.core_type<tc>, window_params = [{transform_indices = @transform_0, window_bounds = array<i64: 64, 64>}, {transform_indices = @transform_1, window_bounds = array<i64: 64, 64>}, {transform_indices = @transform_2, window_bounds = array<i64: 64, 64>}, {transform_indices = @transform_3, window_bounds = array<i64: 64, 64>}, {pipeline_mode = #tpu.pipeline_mode<synchronous>, transform_indices = @transform_4, window_bounds = array<i64: 4, 64, 128>}, {pipeline_mode = #tpu.pipeline_mode<synchronous>, transform_indices = @transform_5, window_bounds = array<i64: 4, 1, 128>}, {transform_indices = @transform_6, window_bounds = array<i64: 8, 64, 128>}]} {
    %c0 = arith.constant 0 : index
    %c0_0 = arith.constant 0 : index
    %0 = vector.load %arg1[%c0, %c0_0] : memref<64x64xbf16, #tpu.memory_space<vmem>>, vector<64x64xbf16>
    %c0_1 = arith.constant 0 : index
    %c0_2 = arith.constant 0 : index
    %c0_3 = arith.constant 0 : index
    %1 = vector.load %arg5[%c0_1, %c0_2, %c0_3] : memref<4x64x128xbf16, #tpu.memory_space<vmem>>, vector<1x64x128xbf16>
    %2 = vector.shape_cast %1 : vector<1x64x128xbf16> to vector<64x128xbf16>
    %cst = arith.constant dense<0.000000e+00> : vector<64x128xf32>
    %3 = tpu.matmul %0, %2, %cst {dimension_numbers = #tpu.dot_dimension_numbers<[1], [0], [0], [1], [0, 0, 1, 1], [], []>} : vector<64x64xbf16>, vector<64x128xbf16>, vector<64x128xf32> -> vector<64x128xf32>
    %c0_4 = arith.constant 0 : index
    %c0_5 = arith.constant 0 : index
    %c0_6 = arith.constant 0 : index
    %4 = vector.load %arg6[%c0_4, %c0_5, %c0_6] : memref<4x1x128xf32, #tpu.memory_space<vmem>>, vector<1x1x128xf32>
    %5 = vector.shape_cast %4 : vector<1x1x128xf32> to vector<1x128xf32>
    %6 = vector.broadcast %5 : vector<1x128xf32> to vector<64x128xf32>
    %7 = arith.addf %3, %6 : vector<64x128xf32>
    %cst_7 = arith.constant 0.000000e+00 : f32
    %8 = vector.broadcast %cst_7 : f32 to vector<64x128xf32>
    %9 = arith.maximumf %7, %8 : vector<64x128xf32>
    %c0_8 = arith.constant 0 : index
    %c0_9 = arith.constant 0 : index
    %10 = vector.load %arg2[%c0_8, %c0_9] : memref<64x64xbf16, #tpu.memory_space<vmem>>, vector<64x64xbf16>
    %c1 = arith.constant 1 : index
    %c0_10 = arith.constant 0 : index
    %c0_11 = arith.constant 0 : index
    %11 = vector.load %arg5[%c1, %c0_10, %c0_11] : memref<4x64x128xbf16, #tpu.memory_space<vmem>>, vector<1x64x128xbf16>
    %12 = vector.shape_cast %11 : vector<1x64x128xbf16> to vector<64x128xbf16>
    %cst_12 = arith.constant dense<0.000000e+00> : vector<64x128xf32>
    %13 = tpu.matmul %10, %12, %cst_12 {dimension_numbers = #tpu.dot_dimension_numbers<[1], [0], [0], [1], [0, 0, 1, 1], [], []>} : vector<64x64xbf16>, vector<64x128xbf16>, vector<64x128xf32> -> vector<64x128xf32>
    %c1_13 = arith.constant 1 : index
    %c0_14 = arith.constant 0 : index
    %c0_15 = arith.constant 0 : index
    %14 = vector.load %arg6[%c1_13, %c0_14, %c0_15] : memref<4x1x128xf32, #tpu.memory_space<vmem>>, vector<1x1x128xf32>
    %15 = vector.shape_cast %14 : vector<1x1x128xf32> to vector<1x128xf32>
    %16 = vector.broadcast %15 : vector<1x128xf32> to vector<64x128xf32>
    %17 = arith.addf %13, %16 : vector<64x128xf32>
    %cst_16 = arith.constant 0.000000e+00 : f32
    %18 = vector.broadcast %cst_16 : f32 to vector<64x128xf32>
    %19 = arith.maximumf %17, %18 : vector<64x128xf32>
    %c0_17 = arith.constant 0 : index
    %c0_18 = arith.constant 0 : index
    %20 = vector.load %arg3[%c0_17, %c0_18] : memref<64x64xbf16, #tpu.memory_space<vmem>>, vector<64x64xbf16>
    %c2 = arith.constant 2 : index
    %c0_19 = arith.constant 0 : index
    %c0_20 = arith.constant 0 : index
    %21 = vector.load %arg5[%c2, %c0_19, %c0_20] : memref<4x64x128xbf16, #tpu.memory_space<vmem>>, vector<1x64x128xbf16>
    %22 = vector.shape_cast %21 : vector<1x64x128xbf16> to vector<64x128xbf16>
    %cst_21 = arith.constant dense<0.000000e+00> : vector<64x128xf32>
    %23 = tpu.matmul %20, %22, %cst_21 {dimension_numbers = #tpu.dot_dimension_numbers<[1], [0], [0], [1], [0, 0, 1, 1], [], []>} : vector<64x64xbf16>, vector<64x128xbf16>, vector<64x128xf32> -> vector<64x128xf32>
    %c2_22 = arith.constant 2 : index
    %c0_23 = arith.constant 0 : index
    %c0_24 = arith.constant 0 : index
    %24 = vector.load %arg6[%c2_22, %c0_23, %c0_24] : memref<4x1x128xf32, #tpu.memory_space<vmem>>, vector<1x1x128xf32>
    %25 = vector.shape_cast %24 : vector<1x1x128xf32> to vector<1x128xf32>
    %26 = vector.broadcast %25 : vector<1x128xf32> to vector<64x128xf32>
    %27 = arith.addf %23, %26 : vector<64x128xf32>
    %cst_25 = arith.constant 0.000000e+00 : f32
    %28 = vector.broadcast %cst_25 : f32 to vector<64x128xf32>
    %29 = arith.maximumf %27, %28 : vector<64x128xf32>
    %c0_26 = arith.constant 0 : index
    %c0_27 = arith.constant 0 : index
    %30 = vector.load %arg4[%c0_26, %c0_27] : memref<64x64xbf16, #tpu.memory_space<vmem>>, vector<64x64xbf16>
    %c3 = arith.constant 3 : index
    %c0_28 = arith.constant 0 : index
    %c0_29 = arith.constant 0 : index
    %31 = vector.load %arg5[%c3, %c0_28, %c0_29] : memref<4x64x128xbf16, #tpu.memory_space<vmem>>, vector<1x64x128xbf16>
    %32 = vector.shape_cast %31 : vector<1x64x128xbf16> to vector<64x128xbf16>
    %cst_30 = arith.constant dense<0.000000e+00> : vector<64x128xf32>
    %33 = tpu.matmul %30, %32, %cst_30 {dimension_numbers = #tpu.dot_dimension_numbers<[1], [0], [0], [1], [0, 0, 1, 1], [], []>} : vector<64x64xbf16>, vector<64x128xbf16>, vector<64x128xf32> -> vector<64x128xf32>
    %c3_31 = arith.constant 3 : index
    %c0_32 = arith.constant 0 : index
    %c0_33 = arith.constant 0 : index
    %34 = vector.load %arg6[%c3_31, %c0_32, %c0_33] : memref<4x1x128xf32, #tpu.memory_space<vmem>>, vector<1x1x128xf32>
    %35 = vector.shape_cast %34 : vector<1x1x128xf32> to vector<1x128xf32>
    %36 = vector.broadcast %35 : vector<1x128xf32> to vector<64x128xf32>
    %37 = arith.addf %33, %36 : vector<64x128xf32>
    %cst_34 = arith.constant 0.000000e+00 : f32
    %38 = vector.broadcast %cst_34 : f32 to vector<64x128xf32>
    %39 = arith.maximumf %37, %38 : vector<64x128xf32>
    %40 = arith.addf %39, %29 : vector<64x128xf32>
    %41 = arith.addf %40, %19 : vector<64x128xf32>
    %42 = arith.addf %41, %9 : vector<64x128xf32>
    %43 = arith.addf %9, %19 : vector<64x128xf32>
    %44 = arith.addf %43, %29 : vector<64x128xf32>
    %45 = arith.addf %44, %39 : vector<64x128xf32>
    %46 = arith.truncf %39 : vector<64x128xf32> to vector<64x128xbf16>
    %c0_35 = arith.constant 0 : index
    %c0_36 = arith.constant 0 : index
    %c0_37 = arith.constant 0 : index
    %47 = vector.load %arg7[%c0_35, %c0_36, %c0_37] : memref<8x64x128xbf16, #tpu.memory_space<vmem>>, vector<1x64x128xbf16>
    %48 = vector.shape_cast %47 : vector<1x64x128xbf16> to vector<64x128xbf16>
    %49 = vector.shape_cast %46 : vector<64x128xbf16> to vector<1x64x128xbf16>
    tpu.vector_store %arg7[%c0_35, %c0_36, %c0_37], %49 {strides = array<i32>} : memref<8x64x128xbf16, #tpu.memory_space<vmem>>, vector<1x64x128xbf16>,
    %50 = arith.truncf %40 : vector<64x128xf32> to vector<64x128xbf16>
    %c1_38 = arith.constant 1 : index
    %c0_39 = arith.constant 0 : index
    %c0_40 = arith.constant 0 : index
    %51 = vector.load %arg7[%c1_38, %c0_39, %c0_40] : memref<8x64x128xbf16, #tpu.memory_space<vmem>>, vector<1x64x128xbf16>
    %52 = vector.shape_cast %51 : vector<1x64x128xbf16> to vector<64x128xbf16>
    %53 = vector.shape_cast %50 : vector<64x128xbf16> to vector<1x64x128xbf16>
    tpu.vector_store %arg7[%c1_38, %c0_39, %c0_40], %53 {strides = array<i32>} : memref<8x64x128xbf16, #tpu.memory_space<vmem>>, vector<1x64x128xbf16>,
    %54 = arith.truncf %41 : vector<64x128xf32> to vector<64x128xbf16>
    %c2_41 = arith.constant 2 : index
    %c0_42 = arith.constant 0 : index
    %c0_43 = arith.constant 0 : index
    %55 = vector.load %arg7[%c2_41, %c0_42, %c0_43] : memref<8x64x128xbf16, #tpu.memory_space<vmem>>, vector<1x64x128xbf16>
    %56 = vector.shape_cast %55 : vector<1x64x128xbf16> to vector<64x128xbf16>
    %57 = vector.shape_cast %54 : vector<64x128xbf16> to vector<1x64x128xbf16>
    tpu.vector_store %arg7[%c2_41, %c0_42, %c0_43], %57 {strides = array<i32>} : memref<8x64x128xbf16, #tpu.memory_space<vmem>>, vector<1x64x128xbf16>,
    %58 = arith.truncf %42 : vector<64x128xf32> to vector<64x128xbf16>
    %c3_44 = arith.constant 3 : index
    %c0_45 = arith.constant 0 : index
    %c0_46 = arith.constant 0 : index
    %59 = vector.load %arg7[%c3_44, %c0_45, %c0_46] : memref<8x64x128xbf16, #tpu.memory_space<vmem>>, vector<1x64x128xbf16>
    %60 = vector.shape_cast %59 : vector<1x64x128xbf16> to vector<64x128xbf16>
    %61 = vector.shape_cast %58 : vector<64x128xbf16> to vector<1x64x128xbf16>
    tpu.vector_store %arg7[%c3_44, %c0_45, %c0_46], %61 {strides = array<i32>} : memref<8x64x128xbf16, #tpu.memory_space<vmem>>, vector<1x64x128xbf16>,
    %62 = arith.truncf %9 : vector<64x128xf32> to vector<64x128xbf16>
    %c4 = arith.constant 4 : index
    %c0_47 = arith.constant 0 : index
    %c0_48 = arith.constant 0 : index
    %63 = vector.load %arg7[%c4, %c0_47, %c0_48] : memref<8x64x128xbf16, #tpu.memory_space<vmem>>, vector<1x64x128xbf16>
    %64 = vector.shape_cast %63 : vector<1x64x128xbf16> to vector<64x128xbf16>
    %65 = vector.shape_cast %62 : vector<64x128xbf16> to vector<1x64x128xbf16>
    tpu.vector_store %arg7[%c4, %c0_47, %c0_48], %65 {strides = array<i32>} : memref<8x64x128xbf16, #tpu.memory_space<vmem>>, vector<1x64x128xbf16>,
    %66 = arith.truncf %43 : vector<64x128xf32> to vector<64x128xbf16>
    %c5 = arith.constant 5 : index
    %c0_49 = arith.constant 0 : index
    %c0_50 = arith.constant 0 : index
    %67 = vector.load %arg7[%c5, %c0_49, %c0_50] : memref<8x64x128xbf16, #tpu.memory_space<vmem>>, vector<1x64x128xbf16>
    %68 = vector.shape_cast %67 : vector<1x64x128xbf16> to vector<64x128xbf16>
    %69 = vector.shape_cast %66 : vector<64x128xbf16> to vector<1x64x128xbf16>
    tpu.vector_store %arg7[%c5, %c0_49, %c0_50], %69 {strides = array<i32>} : memref<8x64x128xbf16, #tpu.memory_space<vmem>>, vector<1x64x128xbf16>,
    %70 = arith.truncf %44 : vector<64x128xf32> to vector<64x128xbf16>
    %c6 = arith.constant 6 : index
    %c0_51 = arith.constant 0 : index
    %c0_52 = arith.constant 0 : index
    %71 = vector.load %arg7[%c6, %c0_51, %c0_52] : memref<8x64x128xbf16, #tpu.memory_space<vmem>>, vector<1x64x128xbf16>
    %72 = vector.shape_cast %71 : vector<1x64x128xbf16> to vector<64x128xbf16>
    %73 = vector.shape_cast %70 : vector<64x128xbf16> to vector<1x64x128xbf16>
    tpu.vector_store %arg7[%c6, %c0_51, %c0_52], %73 {strides = array<i32>} : memref<8x64x128xbf16, #tpu.memory_space<vmem>>, vector<1x64x128xbf16>,
    %74 = arith.truncf %45 : vector<64x128xf32> to vector<64x128xbf16>
    %c7 = arith.constant 7 : index
    %c0_53 = arith.constant 0 : index
    %c0_54 = arith.constant 0 : index
    %75 = vector.load %arg7[%c7, %c0_53, %c0_54] : memref<8x64x128xbf16, #tpu.memory_space<vmem>>, vector<1x64x128xbf16>
    %76 = vector.shape_cast %75 : vector<1x64x128xbf16> to vector<64x128xbf16>
    %77 = vector.shape_cast %74 : vector<64x128xbf16> to vector<1x64x128xbf16>
    tpu.vector_store %arg7[%c7, %c0_53, %c0_54], %77 {strides = array<i32>} : memref<8x64x128xbf16, #tpu.memory_space<vmem>>, vector<1x64x128xbf16>,
    return
  }
  func.func @transform_0(%arg0: i32) -> (i32, i32) {
    %c0_i32 = arith.constant 0 : i32
    %c0_i32_0 = arith.constant 0 : i32
    return %arg0, %c0_i32 : i32, i32
  }
  func.func @transform_1(%arg0: i32) -> (i32, i32) {
    %c0_i32 = arith.constant 0 : i32
    %c0_i32_0 = arith.constant 0 : i32
    return %arg0, %c0_i32 : i32, i32
  }
  func.func @transform_2(%arg0: i32) -> (i32, i32) {
    %c0_i32 = arith.constant 0 : i32
    %c0_i32_0 = arith.constant 0 : i32
    return %arg0, %c0_i32 : i32, i32
  }
  func.func @transform_3(%arg0: i32) -> (i32, i32) {
    %c0_i32 = arith.constant 0 : i32
    %c0_i32_0 = arith.constant 0 : i32
    return %arg0, %c0_i32 : i32, i32
  }
  func.func @transform_4(%arg0: i32) -> (i32, i32, i32) {
    %c0_i32 = arith.constant 0 : i32
    %c0_i32_0 = arith.constant 0 : i32
    %c0_i32_1 = arith.constant 0 : i32
    %c0_i32_2 = arith.constant 0 : i32
    return %c0_i32, %c0_i32_0, %c0_i32_1 : i32, i32, i32
  }
  func.func @transform_5(%arg0: i32) -> (i32, i32, i32) {
    %c0_i32 = arith.constant 0 : i32
    %c0_i32_0 = arith.constant 0 : i32
    %c0_i32_1 = arith.constant 0 : i32
    %c0_i32_2 = arith.constant 0 : i32
    return %c0_i32, %c0_i32_0, %c0_i32_1 : i32, i32, i32
  }
  func.func @transform_6(%arg0: i32) -> (i32, i32, i32) {
    %c0_i32 = arith.constant 0 : i32
    %c0_i32_0 = arith.constant 0 : i32
    %c0_i32_1 = arith.constant 0 : i32
    return %c0_i32, %arg0, %c0_i32_0 : i32, i32, i32
  }
}

module attributes {stable_mosaic.version = 11 : i64} {
  func.func @_oct_3x3_kernel(%arg0: i32, %arg1: i32, %arg2: memref<1x1x8x8x128xbf16, #tpu.memory_space<vmem>>, %arg3: memref<1x3x3x128x128xbf16, #tpu.memory_space<vmem>>, %arg4: memref<1x1x128xf32, #tpu.memory_space<vmem>>, %arg5: memref<1x1x8x8x128xbf16, #tpu.memory_space<vmem>>) attributes {dimension_semantics = [#tpu.dimension_semantics<parallel>, #tpu.dimension_semantics<parallel>], iteration_bounds = array<i64: 8, 2>, scalar_prefetch = 0 : i64, scratch_operands = 0 : i64, tpu.core_type = #tpu.core_type<tc>, window_params = [{transform_indices = @transform_0, window_bounds = array<i64: 1, 1, 8, 8, 128>}, {transform_indices = @transform_1, window_bounds = array<i64: 1, 3, 3, 128, 128>}, {transform_indices = @transform_2, window_bounds = array<i64: 1, 1, 128>}, {transform_indices = @transform_3, window_bounds = array<i64: 1, 1, 8, 8, 128>}]} {
    %c0 = arith.constant 0 : index
    %c0_0 = arith.constant 0 : index
    %c0_1 = arith.constant 0 : index
    %c0_2 = arith.constant 0 : index
    %c0_3 = arith.constant 0 : index
    %0 = vector.load %arg2[%c0, %c0_0, %c0_1, %c0_2, %c0_3] : memref<1x1x8x8x128xbf16, #tpu.memory_space<vmem>>, vector<1x1x8x8x128xbf16>
    %1 = vector.shape_cast %0 : vector<1x1x8x8x128xbf16> to vector<8x8x128xbf16>
    %2 = arith.extf %1 : vector<8x8x128xbf16> to vector<8x8x128xf32>
    %cst = arith.constant 0.000000e+00 : f32
    %3 = vector.broadcast %cst : f32 to vector<1x8x128xf32>
    %4 = tpu.concatenate %3, %2, %3 in 0 : vector<1x8x128xf32>, vector<8x8x128xf32>, vector<1x8x128xf32> -> vector<10x8x128xf32>
    %5 = vector.shape_cast %4 : vector<10x8x128xf32> to vector<80x128xf32>
    %6 = tpu.iota {dimensions = array<i32: 1>} : vector<10x8x128xi32>
    %7 = vector.shape_cast %6 : vector<10x8x128xi32> to vector<80x128xi32>
    %c0_4 = arith.constant 0 : index
    %c0_5 = arith.constant 0 : index
    %c0_6 = arith.constant 0 : index
    %c0_7 = arith.constant 0 : index
    %c0_8 = arith.constant 0 : index
    %8 = vector.load %arg3[%c0_4, %c0_5, %c0_6, %c0_7, %c0_8] : memref<1x3x3x128x128xbf16, #tpu.memory_space<vmem>>, vector<1x3x3x128x128xbf16>
    %9 = vector.shape_cast %8 : vector<1x3x3x128x128xbf16> to vector<3x3x128x128xbf16>
    %cst_9 = arith.constant 0.000000e+00 : f32
    %10 = vector.broadcast %cst_9 : f32 to vector<64x128xf32>
    %11 = vector.extract_strided_slice %5 {offsets = [79, 0], sizes = [1, 128], strides = [1, 1]} : vector<80x128xf32> to vector<1x128xf32>
    %12 = vector.extract_strided_slice %5 {offsets = [0, 0], sizes = [79, 128], strides = [1, 1]} : vector<80x128xf32> to vector<79x128xf32>
    %13 = tpu.concatenate %11, %12 in 0 : vector<1x128xf32>, vector<79x128xf32> -> vector<80x128xf32>
    %c0_i32 = arith.constant 0 : i32
    %14 = vector.broadcast %c0_i32 : i32 to vector<80x128xi32>
    %15 = arith.cmpi eq, %7, %14 : vector<80x128xi32>
    %cst_10 = arith.constant 0.000000e+00 : f32
    %16 = vector.broadcast %cst_10 : f32 to vector<80x128xf32>
    %17 = arith.select %15, %16, %13 : vector<80x128xi1>, vector<80x128xf32>
    %18 = arith.truncf %17 : vector<80x128xf32> to vector<80x128xbf16>
    %19 = vector.shape_cast %18 : vector<80x128xbf16> to vector<10x8x128xbf16>
    %20 = vector.extract_strided_slice %19 {offsets = [0, 0, 0], sizes = [8, 8, 128], strides = [1, 1, 1]} : vector<10x8x128xbf16> to vector<8x8x128xbf16>
    %21 = vector.shape_cast %20 : vector<8x8x128xbf16> to vector<64x128xbf16>
    %22 = vector.extract_strided_slice %9 {offsets = [0, 0, 0, 0], sizes = [1, 1, 128, 128], strides = [1, 1, 1, 1]} : vector<3x3x128x128xbf16> to vector<1x1x128x128xbf16>
    %23 = vector.shape_cast %22 : vector<1x1x128x128xbf16> to vector<128x128xbf16>
    %cst_11 = arith.constant dense<0.000000e+00> : vector<64x128xf32>
    %24 = tpu.matmul %21, %23, %cst_11 {dimension_numbers = #tpu.dot_dimension_numbers<[1], [0], [0], [1], [0, 0, 1, 1], [], []>} : vector<64x128xbf16>, vector<128x128xbf16>, vector<64x128xf32> -> vector<64x128xf32>
    %25 = arith.addf %10, %24 : vector<64x128xf32>
    %26 = vector.extract_strided_slice %19 {offsets = [1, 0, 0], sizes = [8, 8, 128], strides = [1, 1, 1]} : vector<10x8x128xbf16> to vector<8x8x128xbf16>
    %27 = vector.shape_cast %26 : vector<8x8x128xbf16> to vector<64x128xbf16>
    %28 = vector.extract_strided_slice %9 {offsets = [1, 0, 0, 0], sizes = [1, 1, 128, 128], strides = [1, 1, 1, 1]} : vector<3x3x128x128xbf16> to vector<1x1x128x128xbf16>
    %29 = vector.shape_cast %28 : vector<1x1x128x128xbf16> to vector<128x128xbf16>
    %cst_12 = arith.constant dense<0.000000e+00> : vector<64x128xf32>
    %30 = tpu.matmul %27, %29, %cst_12 {dimension_numbers = #tpu.dot_dimension_numbers<[1], [0], [0], [1], [0, 0, 1, 1], [], []>} : vector<64x128xbf16>, vector<128x128xbf16>, vector<64x128xf32> -> vector<64x128xf32>
    %31 = arith.addf %25, %30 : vector<64x128xf32>
    %32 = vector.extract_strided_slice %19 {offsets = [2, 0, 0], sizes = [8, 8, 128], strides = [1, 1, 1]} : vector<10x8x128xbf16> to vector<8x8x128xbf16>
    %33 = vector.shape_cast %32 : vector<8x8x128xbf16> to vector<64x128xbf16>
    %34 = vector.extract_strided_slice %9 {offsets = [2, 0, 0, 0], sizes = [1, 1, 128, 128], strides = [1, 1, 1, 1]} : vector<3x3x128x128xbf16> to vector<1x1x128x128xbf16>
    %35 = vector.shape_cast %34 : vector<1x1x128x128xbf16> to vector<128x128xbf16>
    %cst_13 = arith.constant dense<0.000000e+00> : vector<64x128xf32>
    %36 = tpu.matmul %33, %35, %cst_13 {dimension_numbers = #tpu.dot_dimension_numbers<[1], [0], [0], [1], [0, 0, 1, 1], [], []>} : vector<64x128xbf16>, vector<128x128xbf16>, vector<64x128xf32> -> vector<64x128xf32>
    %37 = arith.addf %31, %36 : vector<64x128xf32>
    %38 = arith.truncf %5 : vector<80x128xf32> to vector<80x128xbf16>
    %39 = vector.shape_cast %38 : vector<80x128xbf16> to vector<10x8x128xbf16>
    %40 = vector.extract_strided_slice %39 {offsets = [0, 0, 0], sizes = [8, 8, 128], strides = [1, 1, 1]} : vector<10x8x128xbf16> to vector<8x8x128xbf16>
    %41 = vector.shape_cast %40 : vector<8x8x128xbf16> to vector<64x128xbf16>
    %42 = vector.extract_strided_slice %9 {offsets = [0, 1, 0, 0], sizes = [1, 1, 128, 128], strides = [1, 1, 1, 1]} : vector<3x3x128x128xbf16> to vector<1x1x128x128xbf16>
    %43 = vector.shape_cast %42 : vector<1x1x128x128xbf16> to vector<128x128xbf16>
    %cst_14 = arith.constant dense<0.000000e+00> : vector<64x128xf32>
    %44 = tpu.matmul %41, %43, %cst_14 {dimension_numbers = #tpu.dot_dimension_numbers<[1], [0], [0], [1], [0, 0, 1, 1], [], []>} : vector<64x128xbf16>, vector<128x128xbf16>, vector<64x128xf32> -> vector<64x128xf32>
    %45 = arith.addf %37, %44 : vector<64x128xf32>
    %46 = vector.extract_strided_slice %39 {offsets = [1, 0, 0], sizes = [8, 8, 128], strides = [1, 1, 1]} : vector<10x8x128xbf16> to vector<8x8x128xbf16>
    %47 = vector.shape_cast %46 : vector<8x8x128xbf16> to vector<64x128xbf16>
    %48 = vector.extract_strided_slice %9 {offsets = [1, 1, 0, 0], sizes = [1, 1, 128, 128], strides = [1, 1, 1, 1]} : vector<3x3x128x128xbf16> to vector<1x1x128x128xbf16>
    %49 = vector.shape_cast %48 : vector<1x1x128x128xbf16> to vector<128x128xbf16>
    %cst_15 = arith.constant dense<0.000000e+00> : vector<64x128xf32>
    %50 = tpu.matmul %47, %49, %cst_15 {dimension_numbers = #tpu.dot_dimension_numbers<[1], [0], [0], [1], [0, 0, 1, 1], [], []>} : vector<64x128xbf16>, vector<128x128xbf16>, vector<64x128xf32> -> vector<64x128xf32>
    %51 = arith.addf %45, %50 : vector<64x128xf32>
    %52 = vector.extract_strided_slice %39 {offsets = [2, 0, 0], sizes = [8, 8, 128], strides = [1, 1, 1]} : vector<10x8x128xbf16> to vector<8x8x128xbf16>
    %53 = vector.shape_cast %52 : vector<8x8x128xbf16> to vector<64x128xbf16>
    %54 = vector.extract_strided_slice %9 {offsets = [2, 1, 0, 0], sizes = [1, 1, 128, 128], strides = [1, 1, 1, 1]} : vector<3x3x128x128xbf16> to vector<1x1x128x128xbf16>
    %55 = vector.shape_cast %54 : vector<1x1x128x128xbf16> to vector<128x128xbf16>
    %cst_16 = arith.constant dense<0.000000e+00> : vector<64x128xf32>
    %56 = tpu.matmul %53, %55, %cst_16 {dimension_numbers = #tpu.dot_dimension_numbers<[1], [0], [0], [1], [0, 0, 1, 1], [], []>} : vector<64x128xbf16>, vector<128x128xbf16>, vector<64x128xf32> -> vector<64x128xf32>
    %57 = arith.addf %51, %56 : vector<64x128xf32>
    %58 = vector.extract_strided_slice %5 {offsets = [1, 0], sizes = [79, 128], strides = [1, 1]} : vector<80x128xf32> to vector<79x128xf32>
    %59 = vector.extract_strided_slice %5 {offsets = [0, 0], sizes = [1, 128], strides = [1, 1]} : vector<80x128xf32> to vector<1x128xf32>
    %60 = tpu.concatenate %58, %59 in 0 : vector<79x128xf32>, vector<1x128xf32> -> vector<80x128xf32>
    %c7_i32 = arith.constant 7 : i32
    %61 = vector.broadcast %c7_i32 : i32 to vector<80x128xi32>
    %62 = arith.cmpi eq, %7, %61 : vector<80x128xi32>
    %cst_17 = arith.constant 0.000000e+00 : f32
    %63 = vector.broadcast %cst_17 : f32 to vector<80x128xf32>
    %64 = arith.select %62, %63, %60 : vector<80x128xi1>, vector<80x128xf32>
    %65 = arith.truncf %64 : vector<80x128xf32> to vector<80x128xbf16>
    %66 = vector.shape_cast %65 : vector<80x128xbf16> to vector<10x8x128xbf16>
    %67 = vector.extract_strided_slice %66 {offsets = [0, 0, 0], sizes = [8, 8, 128], strides = [1, 1, 1]} : vector<10x8x128xbf16> to vector<8x8x128xbf16>
    %68 = vector.shape_cast %67 : vector<8x8x128xbf16> to vector<64x128xbf16>
    %69 = vector.extract_strided_slice %9 {offsets = [0, 2, 0, 0], sizes = [1, 1, 128, 128], strides = [1, 1, 1, 1]} : vector<3x3x128x128xbf16> to vector<1x1x128x128xbf16>
    %70 = vector.shape_cast %69 : vector<1x1x128x128xbf16> to vector<128x128xbf16>
    %cst_18 = arith.constant dense<0.000000e+00> : vector<64x128xf32>
    %71 = tpu.matmul %68, %70, %cst_18 {dimension_numbers = #tpu.dot_dimension_numbers<[1], [0], [0], [1], [0, 0, 1, 1], [], []>} : vector<64x128xbf16>, vector<128x128xbf16>, vector<64x128xf32> -> vector<64x128xf32>
    %72 = arith.addf %57, %71 : vector<64x128xf32>
    %73 = vector.extract_strided_slice %66 {offsets = [1, 0, 0], sizes = [8, 8, 128], strides = [1, 1, 1]} : vector<10x8x128xbf16> to vector<8x8x128xbf16>
    %74 = vector.shape_cast %73 : vector<8x8x128xbf16> to vector<64x128xbf16>
    %75 = vector.extract_strided_slice %9 {offsets = [1, 2, 0, 0], sizes = [1, 1, 128, 128], strides = [1, 1, 1, 1]} : vector<3x3x128x128xbf16> to vector<1x1x128x128xbf16>
    %76 = vector.shape_cast %75 : vector<1x1x128x128xbf16> to vector<128x128xbf16>
    %cst_19 = arith.constant dense<0.000000e+00> : vector<64x128xf32>
    %77 = tpu.matmul %74, %76, %cst_19 {dimension_numbers = #tpu.dot_dimension_numbers<[1], [0], [0], [1], [0, 0, 1, 1], [], []>} : vector<64x128xbf16>, vector<128x128xbf16>, vector<64x128xf32> -> vector<64x128xf32>
    %78 = arith.addf %72, %77 : vector<64x128xf32>
    %79 = vector.extract_strided_slice %66 {offsets = [2, 0, 0], sizes = [8, 8, 128], strides = [1, 1, 1]} : vector<10x8x128xbf16> to vector<8x8x128xbf16>
    %80 = vector.shape_cast %79 : vector<8x8x128xbf16> to vector<64x128xbf16>
    %81 = vector.extract_strided_slice %9 {offsets = [2, 2, 0, 0], sizes = [1, 1, 128, 128], strides = [1, 1, 1, 1]} : vector<3x3x128x128xbf16> to vector<1x1x128x128xbf16>
    %82 = vector.shape_cast %81 : vector<1x1x128x128xbf16> to vector<128x128xbf16>
    %cst_20 = arith.constant dense<0.000000e+00> : vector<64x128xf32>
    %83 = tpu.matmul %80, %82, %cst_20 {dimension_numbers = #tpu.dot_dimension_numbers<[1], [0], [0], [1], [0, 0, 1, 1], [], []>} : vector<64x128xbf16>, vector<128x128xbf16>, vector<64x128xf32> -> vector<64x128xf32>
    %84 = arith.addf %78, %83 : vector<64x128xf32>
    %c0_21 = arith.constant 0 : index
    %c0_22 = arith.constant 0 : index
    %c0_23 = arith.constant 0 : index
    %85 = vector.load %arg4[%c0_21, %c0_22, %c0_23] : memref<1x1x128xf32, #tpu.memory_space<vmem>>, vector<1x1x128xf32>
    %86 = vector.shape_cast %85 : vector<1x1x128xf32> to vector<1x128xf32>
    %87 = vector.broadcast %86 : vector<1x128xf32> to vector<64x128xf32>
    %88 = arith.addf %84, %87 : vector<64x128xf32>
    %cst_24 = arith.constant 0.000000e+00 : f32
    %89 = vector.broadcast %cst_24 : f32 to vector<64x128xf32>
    %90 = arith.maximumf %88, %89 : vector<64x128xf32>
    %91 = vector.shape_cast %90 : vector<64x128xf32> to vector<8x8x128xf32>
    %92 = arith.truncf %91 : vector<8x8x128xf32> to vector<8x8x128xbf16>
    %c0_25 = arith.constant 0 : index
    %c0_26 = arith.constant 0 : index
    %c0_27 = arith.constant 0 : index
    %c0_28 = arith.constant 0 : index
    %c0_29 = arith.constant 0 : index
    %93 = vector.load %arg5[%c0_25, %c0_26, %c0_27, %c0_28, %c0_29] : memref<1x1x8x8x128xbf16, #tpu.memory_space<vmem>>, vector<1x1x8x8x128xbf16>
    %94 = vector.shape_cast %93 : vector<1x1x8x8x128xbf16> to vector<8x8x128xbf16>
    %95 = vector.shape_cast %92 : vector<8x8x128xbf16> to vector<1x1x8x8x128xbf16>
    tpu.vector_store %arg5[%c0_25, %c0_26, %c0_27, %c0_28, %c0_29], %95 {strides = array<i32>} : memref<1x1x8x8x128xbf16, #tpu.memory_space<vmem>>, vector<1x1x8x8x128xbf16>,
    return
  }
  func.func @transform_0(%arg0: i32, %arg1: i32) -> (i32, i32, i32, i32, i32) {
    %c0_i32 = arith.constant 0 : i32
    %c0_i32_0 = arith.constant 0 : i32
    %c0_i32_1 = arith.constant 0 : i32
    %c0_i32_2 = arith.constant 0 : i32
    return %arg0, %arg1, %c0_i32, %c0_i32_0, %c0_i32_1 : i32, i32, i32, i32, i32
  }
  func.func @transform_1(%arg0: i32, %arg1: i32) -> (i32, i32, i32, i32, i32) {
    %c0_i32 = arith.constant 0 : i32
    %c0_i32_0 = arith.constant 0 : i32
    %c0_i32_1 = arith.constant 0 : i32
    %c0_i32_2 = arith.constant 0 : i32
    %c0_i32_3 = arith.constant 0 : i32
    return %arg0, %c0_i32, %c0_i32_0, %c0_i32_1, %c0_i32_2 : i32, i32, i32, i32, i32
  }
  func.func @transform_2(%arg0: i32, %arg1: i32) -> (i32, i32, i32) {
    %c0_i32 = arith.constant 0 : i32
    %c0_i32_0 = arith.constant 0 : i32
    %c0_i32_1 = arith.constant 0 : i32
    return %arg0, %c0_i32, %c0_i32_0 : i32, i32, i32
  }
  func.func @transform_3(%arg0: i32, %arg1: i32) -> (i32, i32, i32, i32, i32) {
    %c0_i32 = arith.constant 0 : i32
    %c0_i32_0 = arith.constant 0 : i32
    %c0_i32_1 = arith.constant 0 : i32
    %c0_i32_2 = arith.constant 0 : i32
    return %arg0, %arg1, %c0_i32, %c0_i32_0, %c0_i32_1 : i32, i32, i32, i32, i32
  }
}

</mosaic_0001>

<llo_original>
// kernel: conv_bimla_forward.2
$region0: #{conv_bimla_forward.2}
  #allocation0 [shape = 'u32[]', space=smem, size = 0x4, offset = 0x4, fixed_abs, tag = 'smem constant byte address 0x4 - core index']
  #allocation1 [shape = 'u32[144,128]{1,0:T(1,128)}', space=vmem, size = 0x12000, scoped, tag = 'internal scratch']
  %s0 = inlined_call_operand.hbm [shape: bf16[128,64], index: 0, kind: input, shape index: {}]
  %s1 = inlined_call_operand.hbm [shape: bf16[128,64], index: 1, kind: input, shape index: {}]
  %s2 = inlined_call_operand.hbm [shape: bf16[128,64], index: 2, kind: input, shape index: {}]
  %s3 = inlined_call_operand.hbm [shape: bf16[128,64], index: 3, kind: input, shape index: {}]
  %s4 = inlined_call_operand.vmem [shape: bf16[4,64,128], index: 4, kind: input, shape index: {}]
  %s5 = inlined_call_operand.vmem [shape: f32[4,1,128], index: 5, kind: input, shape index: {}]
  %s6 = inlined_call_operand.vmem [shape: bf16[8,128,128], index: 6, kind: output, shape index: {}]
  %s7 = sld [smem:[#allocation0]]
  $region110: #{conv_bimla_forward.2} parent=0
    _
  %s9 = ssub.s32 1, %s7
  %s10 = scalar_select 0, %s9, %s7
  $region1: #{conv_bimla_forward.2} parent=0
    #allocation2 [shape = 'u8[32768]{0}', space=vmem, size = 0x8000, scoped, tag = 'input window, operand 0']
    #allocation3 [shape = 's32[2]{0}', space=sflag, size = 0x8, scoped, tag = 'scoped memory for conv_bimla_forward.2']
    #allocation4 [shape = 'u8[32768]{0}', space=vmem, size = 0x8000, scoped, tag = 'input window, operand 1']
    #allocation5 [shape = 's32[2]{0}', space=sflag, size = 0x8, scoped, tag = 'scoped memory for conv_bimla_forward.2']
    #allocation6 [shape = 'u8[32768]{0}', space=vmem, size = 0x8000, scoped, tag = 'input window, operand 2']
    #allocation7 [shape = 'u8[32768]{0}', space=vmem, size = 0x8000, scoped, tag = 'input window, operand 3']
    #allocation8 [shape = 's32[2]{0}', space=sflag, size = 0x8, scoped, tag = 'scoped memory for conv_bimla_forward.2']
    #allocation9 [shape = 'u8[262144]{0}', space=vmem, size = 0x40000, scoped, tag = 'output window, operand 0']
    %11 = vsyncpa [#allocation3], 0
    %s12 = scalar_lea.sflag [#allocation3], 1
    %13 = vsyncpa %s12, 0
    %14 = vsyncpa [#allocation5], 0
    %s15 = scalar_lea.sflag [#allocation5], 1
    %16 = vsyncpa %s15, 0
    %17 = vsyncpa [#allocation8], 0
    %s18 = scalar_lea.sflag [#allocation8], 1
    %19 = vsyncpa %s18, 0
    loop: start=0, step=1, limit=4
    $region2: #{conv_bimla_forward.2} parent=1 // loop_pre_header
      _
    $region3: #{conv_bimla_forward.2} parent=1 // loop_header
      %s21 = sphi 0, %s25
      %p22 = scmp.ge.s32.totalorder %s21, 4
      %s31 = sphi 0, %s33
      %s34 = sphi 0, %s31
      %s35 = sphi 0, %s34
      %s51 = sphi 0, %s35
      %s57 = sphi 0, %s59
      %s60 = sphi 0, %s57
      %s61 = sphi 0, %s60
      %s77 = sphi 0, %s61
      %s83 = sphi 0, %s85
      %s86 = sphi 0, %s83
      %s87 = sphi 0, %s86
      %s103 = sphi 0, %s87
      %s109 = sphi 0, %s111
      %s112 = sphi 0, %s109
      %s113 = sphi 0, %s112
      %s129 = sphi 0, %s113
      %s133 = sphi 0, %s133
      %s135 = sphi 0, %s133
      %s136 = sphi 0, %s135
      %s150 = sphi 0, %s136
      %s154 = sphi 0, %s154
      %s156 = sphi 0, %s154
      %s157 = sphi 0, %s156
      %s171 = sphi 0, %s157
      %s177 = sphi 0, %s179
      %s180 = sphi 0, %s177
      %s181 = sphi 0, %s180
      %s197 = sphi 0, %s181
    $region4: #{conv_bimla_forward.2} parent=1 // loop_header_branch
      %24 = sbr.rel (%p22) target = $region8
    $region5: #{conv_bimla_forward.2} parent=1 // loop_body
      %s26 = ssub.s32 %s21, 1
      %s27 = ssub.s32 %s21, 2
      %s28 = sadd.s32 %s21, 1
      %s29 = ssub.s32 %s21, %s28
      %p30 = scmp.eq.s32.totalorder %s29, 0
      %s32 = sadd.s32 %s31, 1
      %s33 = scalar_select %p30, %s31, %s32
      %p36 = pneg %p30
      %p37 = scmp.eq.s32.totalorder %s21, 1
      %p38 = por %p36, %p37
      %p39 = scmp.ne.s32.totalorder %s31, %s34
      %p40 = scmp.eq.s32.totalorder %s21, 0
      %p41 = por %p39, %p40
      %p42 = scmp.ne.s32.totalorder %s31, %s34
      %p43 = scmp.eq.s32.totalorder %s26, 1
      %p44 = por %p42, %p43
      %p45 = scmp.ne.s32.totalorder %s34, %s35
      %p46 = scmp.eq.s32.totalorder %s26, 0
      %p47 = por %p45, %p46
      %p48 = scmp.ne.s32.totalorder %s34, %s35
      %p49 = scmp.eq.s32.totalorder %s27, 1
      %p50 = por %p48, %p49
      %p52 = scmp.ne.s32.totalorder %s35, %s51
      %p53 = scmp.eq.s32.totalorder %s27, 0
      %p54 = por %p52, %p53
      %s55 = ssub.s32 %s21, %s28
      %p56 = scmp.eq.s32.totalorder %s55, 0
      %s58 = sadd.s32 %s57, 1
      %s59 = scalar_select %p56, %s57, %s58
      %p62 = pneg %p56
      %p63 = scmp.eq.s32.totalorder %s21, 1
      %p64 = por %p62, %p63
      %p65 = scmp.ne.s32.totalorder %s57, %s60
      %p66 = scmp.eq.s32.totalorder %s21, 0
      %p67 = por %p65, %p66
      %p68 = scmp.ne.s32.totalorder %s57, %s60
      %p69 = scmp.eq.s32.totalorder %s26, 1
      %p70 = por %p68, %p69
      %p71 = scmp.ne.s32.totalorder %s60, %s61
      %p72 = scmp.eq.s32.totalorder %s26, 0
      %p73 = por %p71, %p72
      %p74 = scmp.ne.s32.totalorder %s60, %s61
      %p75 = scmp.eq.s32.totalorder %s27, 1
      %p76 = por %p74, %p75
      %p78 = scmp.ne.s32.totalorder %s61, %s77
      %p79 = scmp.eq.s32.totalorder %s27, 0
      %p80 = por %p78, %p79
      %s81 = ssub.s32 %s21, %s28
      %p82 = scmp.eq.s32.totalorder %s81, 0
      %s84 = sadd.s32 %s83, 1
      %s85 = scalar_select %p82, %s83, %s84
      %p88 = pneg %p82
      %p89 = scmp.eq.s32.totalorder %s21, 1
      %p90 = por %p88, %p89
      %p91 = scmp.ne.s32.totalorder %s83, %s86
      %p92 = scmp.eq.s32.totalorder %s21, 0
      %p93 = por %p91, %p92
      %p94 = scmp.ne.s32.totalorder %s83, %s86
      %p95 = scmp.eq.s32.totalorder %s26, 1
      %p96 = por %p94, %p95
      %p97 = scmp.ne.s32.totalorder %s86, %s87
      %p98 = scmp.eq.s32.totalorder %s26, 0
      %p99 = por %p97, %p98
      %p100 = scmp.ne.s32.totalorder %s86, %s87
      %p101 = scmp.eq.s32.totalorder %s27, 1
      %p102 = por %p100, %p101
      %p104 = scmp.ne.s32.totalorder %s87, %s103
      %p105 = scmp.eq.s32.totalorder %s27, 0
      %p106 = por %p104, %p105
      %s107 = ssub.s32 %s21, %s28
      %p108 = scmp.eq.s32.totalorder %s107, 0
      %s110 = sadd.s32 %s109, 1
      %s111 = scalar_select %p108, %s109, %s110
      %p114 = pneg %p108
      %p115 = scmp.eq.s32.totalorder %s21, 1
      %p116 = por %p114, %p115
      %p117 = scmp.ne.s32.totalorder %s109, %s112
      %p118 = scmp.eq.s32.totalorder %s21, 0
      %p119 = por %p117, %p118
      %p120 = scmp.ne.s32.totalorder %s109, %s112
      %p121 = scmp.eq.s32.totalorder %s26, 1
      %p122 = por %p120, %p121
      %p123 = scmp.ne.s32.totalorder %s112, %s113
      %p124 = scmp.eq.s32.totalorder %s26, 0
      %p125 = por %p123, %p124
      %p126 = scmp.ne.s32.totalorder %s112, %s113
      %p127 = scmp.eq.s32.totalorder %s27, 1
      %p128 = por %p126, %p127
      %p130 = scmp.ne.s32.totalorder %s113, %s129
      %p131 = scmp.eq.s32.totalorder %s27, 0
      %p132 = por %p130, %p131
      %s134 = sadd.s32 %s133, 1
      %p137 = scmp.eq.s32.totalorder %s21, 1
      %p138 = scmp.ne.s32.totalorder %s133, %s135
      %p139 = scmp.eq.s32.totalorder %s21, 0
      %p140 = por %p138, %p139
      %p141 = scmp.ne.s32.totalorder %s133, %s135
      %p142 = scmp.eq.s32.totalorder %s26, 1
      %p143 = por %p141, %p142
      %p144 = scmp.ne.s32.totalorder %s135, %s136
      %p145 = scmp.eq.s32.totalorder %s26, 0
      %p146 = por %p144, %p145
      %p147 = scmp.ne.s32.totalorder %s135, %s136
      %p148 = scmp.eq.s32.totalorder %s27, 1
      %p149 = por %p147, %p148
      %p151 = scmp.ne.s32.totalorder %s136, %s150
      %p152 = scmp.eq.s32.totalorder %s27, 0
      %p153 = por %p151, %p152
      %s155 = sadd.s32 %s154, 1
      %p158 = scmp.eq.s32.totalorder %s21, 1
      %p159 = scmp.ne.s32.totalorder %s154, %s156
      %p160 = scmp.eq.s32.totalorder %s21, 0
      %p161 = por %p159, %p160
      %p162 = scmp.ne.s32.totalorder %s154, %s156
      %p163 = scmp.eq.s32.totalorder %s26, 1
      %p164 = por %p162, %p163
      %p165 = scmp.ne.s32.totalorder %s156, %s157
      %p166 = scmp.eq.s32.totalorder %s26, 0
      %p167 = por %p165, %p166
      %p168 = scmp.ne.s32.totalorder %s156, %s157
      %p169 = scmp.eq.s32.totalorder %s27, 1
      %p170 = por %p168, %p169
      %p172 = scmp.ne.s32.totalorder %s157, %s171
      %p173 = scmp.eq.s32.totalorder %s27, 0
      %p174 = por %p172, %p173
      %s175 = ssub.s32 %s21, %s28
      %p176 = scmp.eq.s32.totalorder %s175, 0
      %s178 = sadd.s32 %s177, 1
      %s179 = scalar_select %p176, %s177, %s178
      %p182 = pneg %p176
      %p183 = scmp.eq.s32.totalorder %s21, 1
      %p184 = por %p182, %p183
      %p185 = scmp.ne.s32.totalorder %s177, %s180
      %p186 = scmp.eq.s32.totalorder %s21, 0
      %p187 = por %p185, %p186
      %p188 = scmp.ne.s32.totalorder %s177, %s180
      %p189 = scmp.eq.s32.totalorder %s26, 1
      %p190 = por %p188, %p189
      %p191 = scmp.ne.s32.totalorder %s180, %s181
      %p192 = scmp.eq.s32.totalorder %s26, 0
      %p193 = por %p191, %p192
      %p194 = scmp.ne.s32.totalorder %s180, %s181
      %p195 = scmp.eq.s32.totalorder %s27, 1
      %p196 = por %p194, %p195
      %p198 = scmp.ne.s32.totalorder %s181, %s197
      %p199 = scmp.eq.s32.totalorder %s27, 0
      %p200 = por %p198, %p199
      %p201 = scmp.le.s32.totalorder 1, %s21
      %p202 = scmp.lt.s32.totalorder %s21, 3
      %p203 = pnand %p201, %p202
      %p204 = pneg %p203
      // Predicated region
      $region9: #{conv_bimla_forward.2} parent=5 // pred_check
        _
      $region10: #{conv_bimla_forward.2} parent=5 // pred_check_branch
        %206 = sbr.rel (%p203) target = $region12
      $region11: #{conv_bimla_forward.2} parent=5 // pred_region
        %s207 = ssub.s32 %s21, 1
        // Predicated region
        $region13: #{conv_bimla_forward.2} parent=11 // pred_check
          %p208 = pneg %p146
        $region14: #{conv_bimla_forward.2} parent=11 // pred_check_branch
          %210 = sbr.rel (%p208) target = $region16
        $region15: #{conv_bimla_forward.2} parent=11 // pred_region
          _
        $region16: #{conv_bimla_forward.2} parent=11 // pred_fallthru
          _
        // Predicated region
        $region17: #{conv_bimla_forward.2} parent=11 // pred_check
          %p211 = pneg %p167
        $region18: #{conv_bimla_forward.2} parent=11 // pred_check_branch
          %213 = sbr.rel (%p211) target = $region20
        $region19: #{conv_bimla_forward.2} parent=11 // pred_region
          _
        $region20: #{conv_bimla_forward.2} parent=11 // pred_fallthru
          _
      $region12: #{conv_bimla_forward.2} parent=5 // pred_fallthru
        _
      %p214 = scmp.lt.s32.totalorder %s21, 2
      // Predicated region
      $region21: #{conv_bimla_forward.2} parent=5 // pred_check
        %p215 = pneg %p214
      $region22: #{conv_bimla_forward.2} parent=5 // pred_check_branch
        %217 = sbr.rel (%p215) target = $region24
      $region23: #{conv_bimla_forward.2} parent=5 // pred_region
        // Predicated region
        $region25: #{conv_bimla_forward.2} parent=23 // pred_check
          %p218 = pneg %p41
        $region26: #{conv_bimla_forward.2} parent=23 // pred_check_branch
          %220 = sbr.rel (%p218) target = $region28
        $region27: #{conv_bimla_forward.2} parent=23 // pred_region
          %s221 = sand.u32 %s31, 1
          %s222 = scalar_lea.sflag [#allocation3], %s221
          %s223 = sand.u32 %s31, 1
          %s224 = smul.addr %s223, 32
          %s225 = scalar_lea.vmem [#allocation2], %s224
          %s226 = smul.u32 8, %s21
          %s228 = ssub.s32 512, 512
          %229 = vsyncadd %s222, %s228
          %s230 = smul.addr %s226, 64
          %s231 = scalar_lea.hbm %s0, %s230
          %s232 = sshll.u32 %s225, 4
          %s233 = int_to_ptr.vmem [resolvable:$true] %s232
          %238 = dma.hbm_to_vmem [thread:$0]  %s231, 512, %s233, %s222, 64, 64, 4
        $region28: #{conv_bimla_forward.2} parent=23 // pred_fallthru
          _
        // Predicated region
        $region29: #{conv_bimla_forward.2} parent=23 // pred_check
          %p239 = pneg %p67
        $region30: #{conv_bimla_forward.2} parent=23 // pred_check_branch
          %241 = sbr.rel (%p239) target = $region32
        $region31: #{conv_bimla_forward.2} parent=23 // pred_region
          %s242 = sand.u32 %s21, 1
          %s243 = scalar_lea.sflag [#allocation5], %s242
          %s244 = sand.u32 %s57, 1
          %s245 = smul.addr %s244, 32
          %s246 = scalar_lea.vmem [#allocation4], %s245
          %s247 = smul.u32 8, %s21
          %s249 = ssub.s32 512, 512
          %250 = vsyncadd %s243, %s249
          %s251 = smul.addr %s247, 64
          %s252 = scalar_lea.hbm %s1, %s251
          %s253 = sshll.u32 %s246, 4
          %s254 = int_to_ptr.vmem [resolvable:$true] %s253
          %259 = dma.hbm_to_vmem [thread:$0]  %s252, 512, %s254, %s243, 64, 64, 4
        $region32: #{conv_bimla_forward.2} parent=23 // pred_fallthru
          _
        // Predicated region
        $region33: #{conv_bimla_forward.2} parent=23 // pred_check
          %p260 = pneg %p93
        $region34: #{conv_bimla_forward.2} parent=23 // pred_check_branch
          %262 = sbr.rel (%p260) target = $region36
        $region35: #{conv_bimla_forward.2} parent=23 // pred_region
          %s263 = sand.u32 %s21, 1
          %s264 = scalar_lea.sflag [#allocation5], %s263
          %s265 = sand.u32 %s83, 1
          %s266 = smul.addr %s265, 32
          %s267 = scalar_lea.vmem [#allocation6], %s266
          %s268 = smul.u32 8, %s21
          %s270 = ssub.s32 512, 512
          %271 = vsyncadd %s264, %s270
          %s272 = smul.addr %s268, 64
          %s273 = scalar_lea.hbm %s2, %s272
          %s274 = sshll.u32 %s267, 4
          %s275 = int_to_ptr.vmem [resolvable:$true] %s274
          %280 = dma.hbm_to_vmem [thread:$0]  %s273, 512, %s275, %s264, 64, 64, 4
        $region36: #{conv_bimla_forward.2} parent=23 // pred_fallthru
          _
        // Predicated region
        $region37: #{conv_bimla_forward.2} parent=23 // pred_check
          %p281 = pneg %p119
        $region38: #{conv_bimla_forward.2} parent=23 // pred_check_branch
          %283 = sbr.rel (%p281) target = $region40
        $region39: #{conv_bimla_forward.2} parent=23 // pred_region
          %s284 = sand.u32 %s109, 1
          %s285 = scalar_lea.sflag [#allocation8], %s284
          %s286 = sand.u32 %s109, 1
          %s287 = smul.addr %s286, 32
          %s288 = scalar_lea.vmem [#allocation7], %s287
          %s289 = smul.u32 8, %s21
          %s291 = ssub.s32 512, 512
          %292 = vsyncadd %s285, %s291
          %s293 = smul.addr %s289, 64
          %s294 = scalar_lea.hbm %s3, %s293
          %s295 = sshll.u32 %s288, 4
          %s296 = int_to_ptr.vmem [resolvable:$true] %s295
          %301 = dma.hbm_to_vmem [thread:$0]  %s294, 512, %s296, %s285, 64, 64, 4
        $region40: #{conv_bimla_forward.2} parent=23 // pred_fallthru
          _
      $region24: #{conv_bimla_forward.2} parent=5 // pred_fallthru
        _
      %p302 = scmp.le.s32.totalorder 1, %s21
      %p303 = scmp.lt.s32.totalorder %s21, 3
      %p304 = pnand %p302, %p303
      %p305 = pneg %p304
      // Predicated region
      $region41: #{conv_bimla_forward.2} parent=5 // pred_check
        _
      $region42: #{conv_bimla_forward.2} parent=5 // pred_check_branch
        %307 = sbr.rel (%p304) target = $region44
      $region43: #{conv_bimla_forward.2} parent=5 // pred_region
        %s308 = ssub.s32 %s21, 1
        %s309 = sand.u32 %s34, 1
        %s310 = scalar_lea.sflag [#allocation3], %s309
        %s311 = sand.u32 %s34, 1
        %s312 = smul.addr %s311, 32
        %s313 = scalar_lea.vmem [#allocation2], %s312
        // Predicated region
        $region45: #{conv_bimla_forward.2} parent=43 // pred_check
          %p314 = pneg %p47
        $region46: #{conv_bimla_forward.2} parent=43 // pred_check_branch
          %316 = sbr.rel (%p314) target = $region48
        $region47: #{conv_bimla_forward.2} parent=43 // pred_region
          %317 = dma.done %s310, 512
        $region48: #{conv_bimla_forward.2} parent=43 // pred_fallthru
          _
        %s318 = sand.u32 %s26, 1
        %s319 = scalar_lea.sflag [#allocation5], %s318
        %s320 = sand.u32 %s60, 1
        %s321 = smul.addr %s320, 32
        %s322 = scalar_lea.vmem [#allocation4], %s321
        // Predicated region
        $region49: #{conv_bimla_forward.2} parent=43 // pred_check
          %p323 = pneg %p73
        $region50: #{conv_bimla_forward.2} parent=43 // pred_check_branch
          %325 = sbr.rel (%p323) target = $region52
        $region51: #{conv_bimla_forward.2} parent=43 // pred_region
          %326 = dma.done %s319, 512
        $region52: #{conv_bimla_forward.2} parent=43 // pred_fallthru
          _
        %s327 = sand.u32 %s26, 1
        %s328 = scalar_lea.sflag [#allocation5], %s327
        %s329 = sand.u32 %s86, 1
        %s330 = smul.addr %s329, 32
        %s331 = scalar_lea.vmem [#allocation6], %s330
        // Predicated region
        $region53: #{conv_bimla_forward.2} parent=43 // pred_check
          %p332 = pneg %p99
        $region54: #{conv_bimla_forward.2} parent=43 // pred_check_branch
          %334 = sbr.rel (%p332) target = $region56
        $region55: #{conv_bimla_forward.2} parent=43 // pred_region
          %335 = dma.done %s328, 512
        $region56: #{conv_bimla_forward.2} parent=43 // pred_fallthru
          _
        %s336 = sand.u32 %s112, 1
        %s337 = scalar_lea.sflag [#allocation8], %s336
        %s338 = sand.u32 %s112, 1
        %s339 = smul.addr %s338, 32
        %s340 = scalar_lea.vmem [#allocation7], %s339
        // Predicated region
        $region57: #{conv_bimla_forward.2} parent=43 // pred_check
          %p341 = pneg %p125
        $region58: #{conv_bimla_forward.2} parent=43 // pred_check_branch
          %343 = sbr.rel (%p341) target = $region60
        $region59: #{conv_bimla_forward.2} parent=43 // pred_region
          %344 = dma.done %s337, 512
        $region60: #{conv_bimla_forward.2} parent=43 // pred_fallthru
          _
        %s345 = sand.u32 %s34, 1
        %s346 = scalar_lea.sflag [#allocation3], %s345
        %s347 = sand.u32 %s34, 1
        %s348 = smul.addr %s347, 32
        %s349 = scalar_lea.vmem [#allocation2], %s348
        %p350 = pneg %p47
        %p351 = pneg %p44
        %s352 = sand.u32 %s26, 1
        %s353 = scalar_lea.sflag [#allocation5], %s352
        %s354 = sand.u32 %s60, 1
        %s355 = smul.addr %s354, 32
        %s356 = scalar_lea.vmem [#allocation4], %s355
        %p357 = pneg %p73
        %p358 = pneg %p70
        %s359 = sand.u32 %s26, 1
        %s360 = scalar_lea.sflag [#allocation5], %s359
        %s361 = sand.u32 %s86, 1
        %s362 = smul.addr %s361, 32
        %s363 = scalar_lea.vmem [#allocation6], %s362
        %p364 = pneg %p99
        %p365 = pneg %p96
        %s366 = sand.u32 %s112, 1
        %s367 = scalar_lea.sflag [#allocation8], %s366
        %s368 = sand.u32 %s112, 1
        %s369 = smul.addr %s368, 32
        %s370 = scalar_lea.vmem [#allocation7], %s369
        %p371 = pneg %p125
        %p372 = pneg %p122
        %p373 = pneg %p146
        %p374 = pneg %p143
        %p375 = pneg %p167
        %p376 = pneg %p164
        %p377 = pneg %p193
        %p378 = pneg %p190
        %s379 = sand.u32 %s180, 1
        %s380 = sand.u32 %s180, 1
        %s381 = smul.addr %s380, 256
        %s382 = scalar_lea.vmem [#allocation9], %s381
        %s383 = smul.u32 8, %s26
        %s384 = smul.u32 8, %s26
        %s385 = smul.u32 8, %s26
        %s386 = smul.u32 8, %s26
        %s387 = smul.u32 8, %s26
        %v389 = vld [vmem:[%s313] sm:$0xf]
        %v390 = vld [vmem:[%s313 + $0x4] sm:$0xf]
        %v391 = vld [vmem:[%s313 + $0x8] sm:$0xf]
        %v392 = vld [vmem:[%s313 + $0xc] sm:$0xf]
        %v393 = vld [vmem:[%s313 + $0x10] sm:$0xf]
        %v394 = vld [vmem:[%s313 + $0x14] sm:$0xf]
        %v395 = vld [vmem:[%s313 + $0x18] sm:$0xf]
        %v396 = vld [vmem:[%s313 + $0x1c] sm:$0xf]
        %v397 = vld [vmem:[%s4] sm:$0xf]
        %v398 = vld [vmem:[%s4 + $0x4] sm:$0xf]
        %v399 = vld [vmem:[%s4 + $0x8] sm:$0xf]
        %v400 = vld [vmem:[%s4 + $0xc] sm:$0xf]
        %v401 = vld [vmem:[%s4 + $0x10] sm:$0xf]
        %v402 = vld [vmem:[%s4 + $0x14] sm:$0xf]
        %v403 = vld [vmem:[%s4 + $0x18] sm:$0xf]
        %v404 = vld [vmem:[%s4 + $0x1c] sm:$0xf]
        %v405 = vld [vmem:[%s5] sm:$0x1]
        %v407 = vlaneseq
        %v408 = vshrl.u32 %v407, 7
        %v409 = vsub.s32 0, %v408
        %v410 = vrot.slane %v405, %v409
        %v420 = vunpack.c.l.b16 %v389
        %v421 = vunpack.c.l.b16 %v390
        %v422 = vunpack.c.l.b16 %v391
        %v423 = vunpack.c.l.b16 %v392
        %v424 = vunpack.c.l.b16 %v393
        %v425 = vunpack.c.l.b16 %v394
        %v426 = vunpack.c.l.b16 %v395
        %v427 = vunpack.c.l.b16 %v396
        %v428 = vpack.c.b16 %v421, %v420
        %v429 = vpack.c.b16 %v423, %v422
        %v430 = vpack.c.b16 %v425, %v424
        %v431 = vpack.c.b16 %v427, %v426
        %v440 = vunpack.c.l.b16 %v397
        %v441 = vunpack.c.l.b16 %v398
        %v442 = vunpack.c.l.b16 %v399
        %v443 = vunpack.c.l.b16 %v400
        %v444 = vunpack.c.l.b16 %v401
        %v445 = vunpack.c.l.b16 %v402
        %v446 = vunpack.c.l.b16 %v403
        %v447 = vunpack.c.l.b16 %v404
        %v448 = vpack.c.b16 %v441, %v440
        %v449 = vpack.c.b16 %v443, %v442
        %v450 = vpack.c.b16 %v445, %v444
        %v451 = vpack.c.b16 %v447, %v446
        %vm456 = vcmask 523264
        %v458 = vsel %vm456, %v428, 0
        %v461 = vsel %vm456, %v429, 0
        %v464 = vsel %vm456, %v430, 0
        %v467 = vsel %vm456, %v431, 0
        %469 = vmatprep.subr.bf16.mxu0 0
        %470 = vmatpush1.bf16.msra.mxu0 0
        %471 = vmatprep.subr.bf16.mxu0 0
        %472 = vmatpush1.bf16.msra.mxu0 0
        %473 = vmatprep.subr.bf16.mxu0 0
        %474 = vmatpush1.bf16.msra.mxu0 0
        %475 = vmatprep.subr.bf16.mxu0 0
        %476 = vmatpush1.bf16.msra.mxu0 0
        %477 = vmatprep.subr.bf16.mxu0 0
        %478 = vmatpush1.bf16.msra.mxu0 %v451
        %479 = vmatprep.subr.bf16.mxu0 0
        %480 = vmatpush1.bf16.msra.mxu0 %v450
        %481 = vmatprep.subr.bf16.mxu0 0
        %482 = vmatpush1.bf16.msra.mxu0 %v449
        %483 = vmatprep.subr.bf16.mxu0 0
        %484 = vmatpush1.bf16.msra.mxu0 %v448
        %485 = vmatprep.subr.bf16.mxu0 0
        %486 = vmatpush2.bf16.msra.mxu0 0
        %487 = vmatprep.subr.bf16.mxu0 0
        %488 = vmatpush2.bf16.msra.mxu0 0
        %489 = vmatprep.subr.bf16.mxu0 0
        %490 = vmatpush2.bf16.msra.mxu0 0
        %491 = vmatprep.subr.bf16.mxu0 0
        %492 = vmatpush2.bf16.msra.mxu0 0
        %493 = vmatprep.subr.bf16.mxu0 0
        %494 = vmatpush2.bf16.msra.mxu0 0
        %495 = vmatprep.subr.bf16.mxu0 0
        %496 = vmatpush2.bf16.msra.mxu0 0
        %497 = vmatprep.subr.bf16.mxu0 0
        %498 = vmatpush2.bf16.msra.mxu0 0
        %499 = vmatprep.subr.bf16.mxu0 0
        %500 = vmatpush2.bf16.msra.mxu0 0
        %501 = vmatprep.mubr.bf16.mxu0 0
        %502 = vmatmul.mubr.bf16.gmra.mxu0 %v458
        %v503 = vpop.f32.mrf.mxu0
        %v504 = vadd.f32 %v410, %v503
        %v505 = vpop.f32.mrf.mxu0
        %v506 = vpop.f32.mrf.mxu0
        %v507 = vadd.f32 %v410, %v506
        %v508 = vpop.f32.mrf.mxu0
        %509 = vmatprep.mubr.bf16.mxu0 0
        %510 = vmatmul.mubr.bf16.gmra.mxu0 %v461
        %v511 = vpop.f32.mrf.mxu0
        %v512 = vadd.f32 %v410, %v511
        %v513 = vpop.f32.mrf.mxu0
        %v514 = vpop.f32.mrf.mxu0
        %v515 = vadd.f32 %v410, %v514
        %v516 = vpop.f32.mrf.mxu0
        %517 = vmatprep.mubr.bf16.mxu0 0
        %518 = vmatmul.mubr.bf16.gmra.mxu0 %v464
        %v519 = vpop.f32.mrf.mxu0
        %v520 = vadd.f32 %v410, %v519
        %v521 = vpop.f32.mrf.mxu0
        %v522 = vpop.f32.mrf.mxu0
        %v523 = vadd.f32 %v410, %v522
        %v524 = vpop.f32.mrf.mxu0
        %525 = vmatprep.mubr.bf16.mxu0 0
        %526 = vmatmul.mubr.bf16.gmra.mxu0 %v467
        %v527 = vpop.f32.mrf.mxu0
        %v528 = vadd.f32 %v410, %v527
        %v529 = vpop.f32.mrf.mxu0
        %v530 = vpop.f32.mrf.mxu0
        %v531 = vadd.f32 %v410, %v530
        %v532 = vpop.f32.mrf.mxu0
        %533 = vdwg.mxu0
        %v534 = vmax.f32 %v504, 0.0
        %v535 = vmax.f32 %v507, 0.0
        %v536 = vmax.f32 %v512, 0.0
        %v537 = vmax.f32 %v515, 0.0
        %v538 = vmax.f32 %v520, 0.0
        %v539 = vmax.f32 %v523, 0.0
        %v540 = vmax.f32 %v528, 0.0
        %v541 = vmax.f32 %v531, 0.0
        %v542 = vld [vmem:[%s322] sm:$0xf]
        %v543 = vld [vmem:[%s322 + $0x4] sm:$0xf]
        %v544 = vld [vmem:[%s322 + $0x8] sm:$0xf]
        %v545 = vld [vmem:[%s322 + $0xc] sm:$0xf]
        %v546 = vld [vmem:[%s322 + $0x10] sm:$0xf]
        %v547 = vld [vmem:[%s322 + $0x14] sm:$0xf]
        %v548 = vld [vmem:[%s322 + $0x18] sm:$0xf]
        %v549 = vld [vmem:[%s322 + $0x1c] sm:$0xf]
        %s550 = scalar_lea.vmem %s4, 32
        %v551 = vld [vmem:[%s550] sm:$0xf]
        %v552 = vld [vmem:[%s550 + $0x4] sm:$0xf]
        %v553 = vld [vmem:[%s550 + $0x8] sm:$0xf]
        %v554 = vld [vmem:[%s550 + $0xc] sm:$0xf]
        %v555 = vld [vmem:[%s550 + $0x10] sm:$0xf]
        %v556 = vld [vmem:[%s550 + $0x14] sm:$0xf]
        %v557 = vld [vmem:[%s550 + $0x18] sm:$0xf]
        %v558 = vld [vmem:[%s550 + $0x1c] sm:$0xf]
        %s559 = scalar_lea.vmem %s5, 1
        %v560 = vld [vmem:[%s559] sm:$0x1]
        %v562 = vlaneseq
        %v563 = vshrl.u32 %v562, 7
        %v564 = vsub.s32 0, %v563
        %v565 = vrot.slane %v560, %v564
        %v575 = vunpack.c.l.b16 %v542
        %v576 = vunpack.c.l.b16 %v543
        %v577 = vunpack.c.l.b16 %v544
        %v578 = vunpack.c.l.b16 %v545
        %v579 = vunpack.c.l.b16 %v546
        %v580 = vunpack.c.l.b16 %v547
        %v581 = vunpack.c.l.b16 %v548
        %v582 = vunpack.c.l.b16 %v549
        %v583 = vpack.c.b16 %v576, %v575
        %v584 = vpack.c.b16 %v578, %v577
        %v585 = vpack.c.b16 %v580, %v579
        %v586 = vpack.c.b16 %v582, %v581
        %v595 = vunpack.c.l.b16 %v551
        %v596 = vunpack.c.l.b16 %v552
        %v597 = vunpack.c.l.b16 %v553
        %v598 = vunpack.c.l.b16 %v554
        %v599 = vunpack.c.l.b16 %v555
        %v600 = vunpack.c.l.b16 %v556
        %v601 = vunpack.c.l.b16 %v557
        %v602 = vunpack.c.l.b16 %v558
        %v603 = vpack.c.b16 %v596, %v595
        %v604 = vpack.c.b16 %v598, %v597
        %v605 = vpack.c.b16 %v600, %v599
        %v606 = vpack.c.b16 %v602, %v601
        %v612 = vsel %vm456, %v583, 0
        %v615 = vsel %vm456, %v584, 0
        %v618 = vsel %vm456, %v585, 0
        %v621 = vsel %vm456, %v586, 0
        %623 = vmatprep.subr.bf16.mxu0 0
        %624 = vmatpush1.bf16.msra.mxu0 0
        %625 = vmatprep.subr.bf16.mxu0 0
        %626 = vmatpush1.bf16.msra.mxu0 0
        %627 = vmatprep.subr.bf16.mxu0 0
        %628 = vmatpush1.bf16.msra.mxu0 0
        %629 = vmatprep.subr.bf16.mxu0 0
        %630 = vmatpush1.bf16.msra.mxu0 0
        %631 = vmatprep.subr.bf16.mxu0 0
        %632 = vmatpush1.bf16.msra.mxu0 %v606
        %633 = vmatprep.subr.bf16.mxu0 0
        %634 = vmatpush1.bf16.msra.mxu0 %v605
        %635 = vmatprep.subr.bf16.mxu0 0
        %636 = vmatpush1.bf16.msra.mxu0 %v604
        %637 = vmatprep.subr.bf16.mxu0 0
        %638 = vmatpush1.bf16.msra.mxu0 %v603
        %639 = vmatprep.subr.bf16.mxu0 0
        %640 = vmatpush2.bf16.msra.mxu0 0
        %641 = vmatprep.subr.bf16.mxu0 0
        %642 = vmatpush2.bf16.msra.mxu0 0
        %643 = vmatprep.subr.bf16.mxu0 0
        %644 = vmatpush2.bf16.msra.mxu0 0
        %645 = vmatprep.subr.bf16.mxu0 0
        %646 = vmatpush2.bf16.msra.mxu0 0
        %647 = vmatprep.subr.bf16.mxu0 0
        %648 = vmatpush2.bf16.msra.mxu0 0
        %649 = vmatprep.subr.bf16.mxu0 0
        %650 = vmatpush2.bf16.msra.mxu0 0
        %651 = vmatprep.subr.bf16.mxu0 0
        %652 = vmatpush2.bf16.msra.mxu0 0
        %653 = vmatprep.subr.bf16.mxu0 0
        %654 = vmatpush2.bf16.msra.mxu0 0
        %655 = vmatprep.mubr.bf16.mxu0 0
        %656 = vmatmul.mubr.bf16.gmra.mxu0 %v612
        %v657 = vpop.f32.mrf.mxu0
        %v658 = vadd.f32 %v565, %v657
        %v659 = vpop.f32.mrf.mxu0
        %v660 = vpop.f32.mrf.mxu0
        %v661 = vadd.f32 %v565, %v660
        %v662 = vpop.f32.mrf.mxu0
        %663 = vmatprep.mubr.bf16.mxu0 0
        %664 = vmatmul.mubr.bf16.gmra.mxu0 %v615
        %v665 = vpop.f32.mrf.mxu0
        %v666 = vadd.f32 %v565, %v665
        %v667 = vpop.f32.mrf.mxu0
        %v668 = vpop.f32.mrf.mxu0
        %v669 = vadd.f32 %v565, %v668
        %v670 = vpop.f32.mrf.mxu0
        %671 = vmatprep.mubr.bf16.mxu0 0
        %672 = vmatmul.mubr.bf16.gmra.mxu0 %v618
        %v673 = vpop.f32.mrf.mxu0
        %v674 = vadd.f32 %v565, %v673
        %v675 = vpop.f32.mrf.mxu0
        %v676 = vpop.f32.mrf.mxu0
        %v677 = vadd.f32 %v565, %v676
        %v678 = vpop.f32.mrf.mxu0
        %679 = vmatprep.mubr.bf16.mxu0 0
        %680 = vmatmul.mubr.bf16.gmra.mxu0 %v621
        %v681 = vpop.f32.mrf.mxu0
        %v682 = vadd.f32 %v565, %v681
        %v683 = vpop.f32.mrf.mxu0
        %v684 = vpop.f32.mrf.mxu0
        %v685 = vadd.f32 %v565, %v684
        %v686 = vpop.f32.mrf.mxu0
        %687 = vdwg.mxu0
        %v688 = vmax.f32 %v658, 0.0
        %v689 = vmax.f32 %v661, 0.0
        %v690 = vmax.f32 %v666, 0.0
        %v691 = vmax.f32 %v669, 0.0
        %v692 = vmax.f32 %v674, 0.0
        %v693 = vmax.f32 %v677, 0.0
        %v694 = vmax.f32 %v682, 0.0
        %v695 = vmax.f32 %v685, 0.0
        %v696 = vld [vmem:[%s331] sm:$0xf]
        %v697 = vld [vmem:[%s331 + $0x4] sm:$0xf]
        %v698 = vld [vmem:[%s331 + $0x8] sm:$0xf]
        %v699 = vld [vmem:[%s331 + $0xc] sm:$0xf]
        %v700 = vld [vmem:[%s331 + $0x10] sm:$0xf]
        %v701 = vld [vmem:[%s331 + $0x14] sm:$0xf]
        %v702 = vld [vmem:[%s331 + $0x18] sm:$0xf]
        %v703 = vld [vmem:[%s331 + $0x1c] sm:$0xf]
        %s704 = scalar_lea.vmem %s4, 64
        %v705 = vld [vmem:[%s704] sm:$0xf]
        %v706 = vld [vmem:[%s704 + $0x4] sm:$0xf]
        %v707 = vld [vmem:[%s704 + $0x8] sm:$0xf]
        %v708 = vld [vmem:[%s704 + $0xc] sm:$0xf]
        %v709 = vld [vmem:[%s704 + $0x10] sm:$0xf]
        %v710 = vld [vmem:[%s704 + $0x14] sm:$0xf]
        %v711 = vld [vmem:[%s704 + $0x18] sm:$0xf]
        %v712 = vld [vmem:[%s704 + $0x1c] sm:$0xf]
        %s713 = scalar_lea.vmem %s5, 2
        %v714 = vld [vmem:[%s713] sm:$0x1]
        %v716 = vlaneseq
        %v717 = vshrl.u32 %v716, 7
        %v718 = vsub.s32 0, %v717
        %v719 = vrot.slane %v714, %v718
        %v729 = vunpack.c.l.b16 %v696
        %v730 = vunpack.c.l.b16 %v697
        %v731 = vunpack.c.l.b16 %v698
        %v732 = vunpack.c.l.b16 %v699
        %v733 = vunpack.c.l.b16 %v700
        %v734 = vunpack.c.l.b16 %v701
        %v735 = vunpack.c.l.b16 %v702
        %v736 = vunpack.c.l.b16 %v703
        %v737 = vpack.c.b16 %v730, %v729
        %v738 = vpack.c.b16 %v732, %v731
        %v739 = vpack.c.b16 %v734, %v733
        %v740 = vpack.c.b16 %v736, %v735
        %v749 = vunpack.c.l.b16 %v705
        %v750 = vunpack.c.l.b16 %v706
        %v751 = vunpack.c.l.b16 %v707
        %v752 = vunpack.c.l.b16 %v708
        %v753 = vunpack.c.l.b16 %v709
        %v754 = vunpack.c.l.b16 %v710
        %v755 = vunpack.c.l.b16 %v711
        %v756 = vunpack.c.l.b16 %v712
        %v757 = vpack.c.b16 %v750, %v749
        %v758 = vpack.c.b16 %v752, %v751
        %v759 = vpack.c.b16 %v754, %v753
        %v760 = vpack.c.b16 %v756, %v755
        %v766 = vsel %vm456, %v737, 0
        %v769 = vsel %vm456, %v738, 0
        %v772 = vsel %vm456, %v739, 0
        %v775 = vsel %vm456, %v740, 0
        %777 = vmatprep.subr.bf16.mxu0 0
        %778 = vmatpush1.bf16.msra.mxu0 0
        %779 = vmatprep.subr.bf16.mxu0 0
        %780 = vmatpush1.bf16.msra.mxu0 0
        %781 = vmatprep.subr.bf16.mxu0 0
        %782 = vmatpush1.bf16.msra.mxu0 0
        %783 = vmatprep.subr.bf16.mxu0 0
        %784 = vmatpush1.bf16.msra.mxu0 0
        %785 = vmatprep.subr.bf16.mxu0 0
        %786 = vmatpush1.bf16.msra.mxu0 %v760
        %787 = vmatprep.subr.bf16.mxu0 0
        %788 = vmatpush1.bf16.msra.mxu0 %v759
        %789 = vmatprep.subr.bf16.mxu0 0
        %790 = vmatpush1.bf16.msra.mxu0 %v758
        %791 = vmatprep.subr.bf16.mxu0 0
        %792 = vmatpush1.bf16.msra.mxu0 %v757
        %793 = vmatprep.subr.bf16.mxu0 0
        %794 = vmatpush2.bf16.msra.mxu0 0
        %795 = vmatprep.subr.bf16.mxu0 0
        %796 = vmatpush2.bf16.msra.mxu0 0
        %797 = vmatprep.subr.bf16.mxu0 0
        %798 = vmatpush2.bf16.msra.mxu0 0
        %799 = vmatprep.subr.bf16.mxu0 0
        %800 = vmatpush2.bf16.msra.mxu0 0
        %801 = vmatprep.subr.bf16.mxu0 0
        %802 = vmatpush2.bf16.msra.mxu0 0
        %803 = vmatprep.subr.bf16.mxu0 0
        %804 = vmatpush2.bf16.msra.mxu0 0
        %805 = vmatprep.subr.bf16.mxu0 0
        %806 = vmatpush2.bf16.msra.mxu0 0
        %807 = vmatprep.subr.bf16.mxu0 0
        %808 = vmatpush2.bf16.msra.mxu0 0
        %809 = vmatprep.mubr.bf16.mxu0 0
        %810 = vmatmul.mubr.bf16.gmra.mxu0 %v766
        %v811 = vpop.f32.mrf.mxu0
        %v812 = vadd.f32 %v719, %v811
        %v813 = vpop.f32.mrf.mxu0
        %v814 = vpop.f32.mrf.mxu0
        %v815 = vadd.f32 %v719, %v814
        %v816 = vpop.f32.mrf.mxu0
        %817 = vmatprep.mubr.bf16.mxu0 0
        %818 = vmatmul.mubr.bf16.gmra.mxu0 %v769
        %v819 = vpop.f32.mrf.mxu0
        %v820 = vadd.f32 %v719, %v819
        %v821 = vpop.f32.mrf.mxu0
        %v822 = vpop.f32.mrf.mxu0
        %v823 = vadd.f32 %v719, %v822
        %v824 = vpop.f32.mrf.mxu0
        %825 = vmatprep.mubr.bf16.mxu0 0
        %826 = vmatmul.mubr.bf16.gmra.mxu0 %v772
        %v827 = vpop.f32.mrf.mxu0
        %v828 = vadd.f32 %v719, %v827
        %v829 = vpop.f32.mrf.mxu0
        %v830 = vpop.f32.mrf.mxu0
        %v831 = vadd.f32 %v719, %v830
        %v832 = vpop.f32.mrf.mxu0
        %833 = vmatprep.mubr.bf16.mxu0 0
        %834 = vmatmul.mubr.bf16.gmra.mxu0 %v775
        %v835 = vpop.f32.mrf.mxu0
        %v836 = vadd.f32 %v719, %v835
        %v837 = vpop.f32.mrf.mxu0
        %v838 = vpop.f32.mrf.mxu0
        %v839 = vadd.f32 %v719, %v838
        %v840 = vpop.f32.mrf.mxu0
        %841 = vdwg.mxu0
        %v842 = vmax.f32 %v812, 0.0
        %v843 = vmax.f32 %v815, 0.0
        %v844 = vmax.f32 %v820, 0.0
        %v845 = vmax.f32 %v823, 0.0
        %v846 = vmax.f32 %v828, 0.0
        %v847 = vmax.f32 %v831, 0.0
        %v848 = vmax.f32 %v836, 0.0
        %v849 = vmax.f32 %v839, 0.0
        %v850 = vld [vmem:[%s340] sm:$0xf]
        %v851 = vld [vmem:[%s340 + $0x4] sm:$0xf]
        %v852 = vld [vmem:[%s340 + $0x8] sm:$0xf]
        %v853 = vld [vmem:[%s340 + $0xc] sm:$0xf]
        %v854 = vld [vmem:[%s340 + $0x10] sm:$0xf]
        %v855 = vld [vmem:[%s340 + $0x14] sm:$0xf]
        %v856 = vld [vmem:[%s340 + $0x18] sm:$0xf]
        %v857 = vld [vmem:[%s340 + $0x1c] sm:$0xf]
        %s858 = scalar_lea.vmem %s4, 96
        %v859 = vld [vmem:[%s858] sm:$0xf]
        %v860 = vld [vmem:[%s858 + $0x4] sm:$0xf]
        %v861 = vld [vmem:[%s858 + $0x8] sm:$0xf]
        %v862 = vld [vmem:[%s858 + $0xc] sm:$0xf]
        %v863 = vld [vmem:[%s858 + $0x10] sm:$0xf]
        %v864 = vld [vmem:[%s858 + $0x14] sm:$0xf]
        %v865 = vld [vmem:[%s858 + $0x18] sm:$0xf]
        %v866 = vld [vmem:[%s858 + $0x1c] sm:$0xf]
        %s867 = scalar_lea.vmem %s5, 3
        %v868 = vld [vmem:[%s867] sm:$0x1]
        %v870 = vlaneseq
        %v871 = vshrl.u32 %v870, 7
        %v872 = vsub.s32 0, %v871
        %v873 = vrot.slane %v868, %v872
        %v883 = vunpack.c.l.b16 %v850
        %v884 = vunpack.c.l.b16 %v851
        %v885 = vunpack.c.l.b16 %v852
        %v886 = vunpack.c.l.b16 %v853
        %v887 = vunpack.c.l.b16 %v854
        %v888 = vunpack.c.l.b16 %v855
        %v889 = vunpack.c.l.b16 %v856
        %v890 = vunpack.c.l.b16 %v857
        %v891 = vpack.c.b16 %v884, %v883
        %v892 = vpack.c.b16 %v886, %v885
        %v893 = vpack.c.b16 %v888, %v887
        %v894 = vpack.c.b16 %v890, %v889
        %v903 = vunpack.c.l.b16 %v859
        %v904 = vunpack.c.l.b16 %v860
        %v905 = vunpack.c.l.b16 %v861
        %v906 = vunpack.c.l.b16 %v862
        %v907 = vunpack.c.l.b16 %v863
        %v908 = vunpack.c.l.b16 %v864
        %v909 = vunpack.c.l.b16 %v865
        %v910 = vunpack.c.l.b16 %v866
        %v911 = vpack.c.b16 %v904, %v903
        %v912 = vpack.c.b16 %v906, %v905
        %v913 = vpack.c.b16 %v908, %v907
        %v914 = vpack.c.b16 %v910, %v909
        %v920 = vsel %vm456, %v891, 0
        %v923 = vsel %vm456, %v892, 0
        %v926 = vsel %vm456, %v893, 0
        %v929 = vsel %vm456, %v894, 0
        %931 = vmatprep.subr.bf16.mxu0 0
        %932 = vmatpush1.bf16.msra.mxu0 0
        %933 = vmatprep.subr.bf16.mxu0 0
        %934 = vmatpush1.bf16.msra.mxu0 0
        %935 = vmatprep.subr.bf16.mxu0 0
        %936 = vmatpush1.bf16.msra.mxu0 0
        %937 = vmatprep.subr.bf16.mxu0 0
        %938 = vmatpush1.bf16.msra.mxu0 0
        %939 = vmatprep.subr.bf16.mxu0 0
        %940 = vmatpush1.bf16.msra.mxu0 %v914
        %941 = vmatprep.subr.bf16.mxu0 0
        %942 = vmatpush1.bf16.msra.mxu0 %v913
        %943 = vmatprep.subr.bf16.mxu0 0
        %944 = vmatpush1.bf16.msra.mxu0 %v912
        %945 = vmatprep.subr.bf16.mxu0 0
        %946 = vmatpush1.bf16.msra.mxu0 %v911
        %947 = vmatprep.subr.bf16.mxu0 0
        %948 = vmatpush2.bf16.msra.mxu0 0
        %949 = vmatprep.subr.bf16.mxu0 0
        %950 = vmatpush2.bf16.msra.mxu0 0
        %951 = vmatprep.subr.bf16.mxu0 0
        %952 = vmatpush2.bf16.msra.mxu0 0
        %953 = vmatprep.subr.bf16.mxu0 0
        %954 = vmatpush2.bf16.msra.mxu0 0
        %955 = vmatprep.subr.bf16.mxu0 0
        %956 = vmatpush2.bf16.msra.mxu0 0
        %957 = vmatprep.subr.bf16.mxu0 0
        %958 = vmatpush2.bf16.msra.mxu0 0
        %959 = vmatprep.subr.bf16.mxu0 0
        %960 = vmatpush2.bf16.msra.mxu0 0
        %961 = vmatprep.subr.bf16.mxu0 0
        %962 = vmatpush2.bf16.msra.mxu0 0
        %963 = vmatprep.mubr.bf16.mxu0 0
        %964 = vmatmul.mubr.bf16.gmra.mxu0 %v920
        %v965 = vpop.f32.mrf.mxu0
        %v966 = vadd.f32 %v873, %v965
        %v967 = vpop.f32.mrf.mxu0
        %v968 = vpop.f32.mrf.mxu0
        %v969 = vadd.f32 %v873, %v968
        %v970 = vpop.f32.mrf.mxu0
        %971 = vmatprep.mubr.bf16.mxu0 0
        %972 = vmatmul.mubr.bf16.gmra.mxu0 %v923
        %v973 = vpop.f32.mrf.mxu0
        %v974 = vadd.f32 %v873, %v973
        %v975 = vpop.f32.mrf.mxu0
        %v976 = vpop.f32.mrf.mxu0
        %v977 = vadd.f32 %v873, %v976
        %v978 = vpop.f32.mrf.mxu0
        %979 = vmatprep.mubr.bf16.mxu0 0
        %980 = vmatmul.mubr.bf16.gmra.mxu0 %v926
        %v981 = vpop.f32.mrf.mxu0
        %v982 = vadd.f32 %v873, %v981
        %v983 = vpop.f32.mrf.mxu0
        %v984 = vpop.f32.mrf.mxu0
        %v985 = vadd.f32 %v873, %v984
        %v986 = vpop.f32.mrf.mxu0
        %987 = vmatprep.mubr.bf16.mxu0 0
        %988 = vmatmul.mubr.bf16.gmra.mxu0 %v929
        %v989 = vpop.f32.mrf.mxu0
        %v990 = vadd.f32 %v873, %v989
        %v991 = vpop.f32.mrf.mxu0
        %v992 = vpop.f32.mrf.mxu0
        %v993 = vadd.f32 %v873, %v992
        %v994 = vpop.f32.mrf.mxu0
        %995 = vdwg.mxu0
        %v996 = vmax.f32 %v966, 0.0
        %v997 = vmax.f32 %v969, 0.0
        %v998 = vmax.f32 %v974, 0.0
        %v999 = vmax.f32 %v977, 0.0
        %v1000 = vmax.f32 %v982, 0.0
        %v1001 = vmax.f32 %v985, 0.0
        %v1002 = vmax.f32 %v990, 0.0
        %v1003 = vmax.f32 %v993, 0.0
        %v1004 = vadd.f32 %v996, %v842
        %v1005 = vadd.f32 %v997, %v843
        %v1006 = vadd.f32 %v998, %v844
        %v1007 = vadd.f32 %v999, %v845
        %v1008 = vadd.f32 %v1000, %v846
        %v1009 = vadd.f32 %v1001, %v847
        %v1010 = vadd.f32 %v1002, %v848
        %v1011 = vadd.f32 %v1003, %v849
        %v1012 = vadd.f32 %v1004, %v688
        %v1013 = vadd.f32 %v1005, %v689
        %v1014 = vadd.f32 %v1006, %v690
        %v1015 = vadd.f32 %v1007, %v691
        %v1016 = vadd.f32 %v1008, %v692
        %v1017 = vadd.f32 %v1009, %v693
        %v1018 = vadd.f32 %v1010, %v694
        %v1019 = vadd.f32 %v1011, %v695
        %v1020 = vadd.f32 %v1012, %v534
        %v1021 = vadd.f32 %v1013, %v535
        %v1022 = vadd.f32 %v1014, %v536
        %v1023 = vadd.f32 %v1015, %v537
        %v1024 = vadd.f32 %v1016, %v538
        %v1025 = vadd.f32 %v1017, %v539
        %v1026 = vadd.f32 %v1018, %v540
        %v1027 = vadd.f32 %v1019, %v541
        %v1028 = vadd.f32 %v534, %v688
        %v1029 = vadd.f32 %v535, %v689
        %v1030 = vadd.f32 %v536, %v690
        %v1031 = vadd.f32 %v537, %v691
        %v1032 = vadd.f32 %v538, %v692
        %v1033 = vadd.f32 %v539, %v693
        %v1034 = vadd.f32 %v540, %v694
        %v1035 = vadd.f32 %v541, %v695
        %v1036 = vadd.f32 %v1028, %v842
        %v1037 = vadd.f32 %v1029, %v843
        %v1038 = vadd.f32 %v1030, %v844
        %v1039 = vadd.f32 %v1031, %v845
        %v1040 = vadd.f32 %v1032, %v846
        %v1041 = vadd.f32 %v1033, %v847
        %v1042 = vadd.f32 %v1034, %v848
        %v1043 = vadd.f32 %v1035, %v849
        %v1044 = vadd.f32 %v1036, %v996
        %v1045 = vadd.f32 %v1037, %v997
        %v1046 = vadd.f32 %v1038, %v998
        %v1047 = vadd.f32 %v1039, %v999
        %v1048 = vadd.f32 %v1040, %v1000
        %v1049 = vadd.f32 %v1041, %v1001
        %v1050 = vadd.f32 %v1042, %v1002
        %v1051 = vadd.f32 %v1043, %v1003
        %v1052 = vpack.c.bf16 %v997, %v996
        %v1053 = vpack.c.bf16 %v999, %v998
        %v1054 = vpack.c.bf16 %v1001, %v1000
        %v1055 = vpack.c.bf16 %v1003, %v1002
        %v1060 = vunpack.c.l.b16 %v1052
        %v1061 = vunpack.c.h.b16 %v1052
        %v1062 = vunpack.c.l.b16 %v1053
        %v1063 = vunpack.c.h.b16 %v1053
        %v1064 = vunpack.c.l.b16 %v1054
        %v1065 = vunpack.c.h.b16 %v1054
        %v1066 = vunpack.c.l.b16 %v1055
        %v1067 = vunpack.c.h.b16 %v1055
        %v1068 = vpack.c.b16 %v1060, %v1060
        %v1069 = vpack.c.b16 %v1061, %v1061
        %v1070 = vpack.c.b16 %v1062, %v1062
        %v1071 = vpack.c.b16 %v1063, %v1063
        %v1072 = vpack.c.b16 %v1064, %v1064
        %v1073 = vpack.c.b16 %v1065, %v1065
        %v1074 = vpack.c.b16 %v1066, %v1066
        %v1075 = vpack.c.b16 %v1067, %v1067
        %1084 = vst [vmem:[%s382] sm:$0xf] %v1068
        %1085 = vst [vmem:[%s382 + $0x4] sm:$0xf] %v1069
        %1086 = vst [vmem:[%s382 + $0x8] sm:$0xf] %v1070
        %1087 = vst [vmem:[%s382 + $0xc] sm:$0xf] %v1071
        %1088 = vst [vmem:[%s382 + $0x10] sm:$0xf] %v1072
        %1089 = vst [vmem:[%s382 + $0x14] sm:$0xf] %v1073
        %1090 = vst [vmem:[%s382 + $0x18] sm:$0xf] %v1074
        %1091 = vst [vmem:[%s382 + $0x1c] sm:$0xf] %v1075
        %v1092 = vpack.c.bf16 %v1005, %v1004
        %v1093 = vpack.c.bf16 %v1007, %v1006
        %v1094 = vpack.c.bf16 %v1009, %v1008
        %v1095 = vpack.c.bf16 %v1011, %v1010
        %v1100 = vunpack.c.l.b16 %v1092
        %v1101 = vunpack.c.h.b16 %v1092
        %v1102 = vunpack.c.l.b16 %v1093
        %v1103 = vunpack.c.h.b16 %v1093
        %v1104 = vunpack.c.l.b16 %v1094
        %v1105 = vunpack.c.h.b16 %v1094
        %v1106 = vunpack.c.l.b16 %v1095
        %v1107 = vunpack.c.h.b16 %v1095
        %v1108 = vpack.c.b16 %v1100, %v1100
        %v1109 = vpack.c.b16 %v1101, %v1101
        %v1110 = vpack.c.b16 %v1102, %v1102
        %v1111 = vpack.c.b16 %v1103, %v1103
        %v1112 = vpack.c.b16 %v1104, %v1104
        %v1113 = vpack.c.b16 %v1105, %v1105
        %v1114 = vpack.c.b16 %v1106, %v1106
        %v1115 = vpack.c.b16 %v1107, %v1107
        %s1124 = scalar_lea.vmem %s382, 32 [#allocation9]
        %1125 = vst [vmem:[%s1124] sm:$0xf] %v1108
        %1126 = vst [vmem:[%s1124 + $0x4] sm:$0xf] %v1109
        %1127 = vst [vmem:[%s1124 + $0x8] sm:$0xf] %v1110
        %1128 = vst [vmem:[%s1124 + $0xc] sm:$0xf] %v1111
        %1129 = vst [vmem:[%s1124 + $0x10] sm:$0xf] %v1112
        %1130 = vst [vmem:[%s1124 + $0x14] sm:$0xf] %v1113
        %1131 = vst [vmem:[%s1124 + $0x18] sm:$0xf] %v1114
        %1132 = vst [vmem:[%s1124 + $0x1c] sm:$0xf] %v1115
        %v1133 = vpack.c.bf16 %v1013, %v1012
        %v1134 = vpack.c.bf16 %v1015, %v1014
        %v1135 = vpack.c.bf16 %v1017, %v1016
        %v1136 = vpack.c.bf16 %v1019, %v1018
        %v1141 = vunpack.c.l.b16 %v1133
        %v1142 = vunpack.c.h.b16 %v1133
        %v1143 = vunpack.c.l.b16 %v1134
        %v1144 = vunpack.c.h.b16 %v1134
        %v1145 = vunpack.c.l.b16 %v1135
        %v1146 = vunpack.c.h.b16 %v1135
        %v1147 = vunpack.c.l.b16 %v1136
        %v1148 = vunpack.c.h.b16 %v1136
        %v1149 = vpack.c.b16 %v1141, %v1141
        %v1150 = vpack.c.b16 %v1142, %v1142
        %v1151 = vpack.c.b16 %v1143, %v1143
        %v1152 = vpack.c.b16 %v1144, %v1144
        %v1153 = vpack.c.b16 %v1145, %v1145
        %v1154 = vpack.c.b16 %v1146, %v1146
        %v1155 = vpack.c.b16 %v1147, %v1147
        %v1156 = vpack.c.b16 %v1148, %v1148
        %s1165 = scalar_lea.vmem %s382, 64 [#allocation9]
        %1166 = vst [vmem:[%s1165] sm:$0xf] %v1149
        %1167 = vst [vmem:[%s1165 + $0x4] sm:$0xf] %v1150
        %1168 = vst [vmem:[%s1165 + $0x8] sm:$0xf] %v1151
        %1169 = vst [vmem:[%s1165 + $0xc] sm:$0xf] %v1152
        %1170 = vst [vmem:[%s1165 + $0x10] sm:$0xf] %v1153
        %1171 = vst [vmem:[%s1165 + $0x14] sm:$0xf] %v1154
        %1172 = vst [vmem:[%s1165 + $0x18] sm:$0xf] %v1155
        %1173 = vst [vmem:[%s1165 + $0x1c] sm:$0xf] %v1156
        %v1174 = vpack.c.bf16 %v1021, %v1020
        %v1175 = vpack.c.bf16 %v1023, %v1022
        %v1176 = vpack.c.bf16 %v1025, %v1024
        %v1177 = vpack.c.bf16 %v1027, %v1026
        %v1182 = vunpack.c.l.b16 %v1174
        %v1183 = vunpack.c.h.b16 %v1174
        %v1184 = vunpack.c.l.b16 %v1175
        %v1185 = vunpack.c.h.b16 %v1175
        %v1186 = vunpack.c.l.b16 %v1176
        %v1187 = vunpack.c.h.b16 %v1176
        %v1188 = vunpack.c.l.b16 %v1177
        %v1189 = vunpack.c.h.b16 %v1177
        %v1190 = vpack.c.b16 %v1182, %v1182
        %v1191 = vpack.c.b16 %v1183, %v1183
        %v1192 = vpack.c.b16 %v1184, %v1184
        %v1193 = vpack.c.b16 %v1185, %v1185
        %v1194 = vpack.c.b16 %v1186, %v1186
        %v1195 = vpack.c.b16 %v1187, %v1187
        %v1196 = vpack.c.b16 %v1188, %v1188
        %v1197 = vpack.c.b16 %v1189, %v1189
        %s1206 = scalar_lea.vmem %s382, 96 [#allocation9]
        %1207 = vst [vmem:[%s1206] sm:$0xf] %v1190
        %1208 = vst [vmem:[%s1206 + $0x4] sm:$0xf] %v1191
        %1209 = vst [vmem:[%s1206 + $0x8] sm:$0xf] %v1192
        %1210 = vst [vmem:[%s1206 + $0xc] sm:$0xf] %v1193
        %1211 = vst [vmem:[%s1206 + $0x10] sm:$0xf] %v1194
        %1212 = vst [vmem:[%s1206 + $0x14] sm:$0xf] %v1195
        %1213 = vst [vmem:[%s1206 + $0x18] sm:$0xf] %v1196
        %1214 = vst [vmem:[%s1206 + $0x1c] sm:$0xf] %v1197
        %v1215 = vpack.c.bf16 %v535, %v534
        %v1216 = vpack.c.bf16 %v537, %v536
        %v1217 = vpack.c.bf16 %v539, %v538
        %v1218 = vpack.c.bf16 %v541, %v540
        %v1223 = vunpack.c.l.b16 %v1215
        %v1224 = vunpack.c.h.b16 %v1215
        %v1225 = vunpack.c.l.b16 %v1216
        %v1226 = vunpack.c.h.b16 %v1216
        %v1227 = vunpack.c.l.b16 %v1217
        %v1228 = vunpack.c.h.b16 %v1217
        %v1229 = vunpack.c.l.b16 %v1218
        %v1230 = vunpack.c.h.b16 %v1218
        %v1231 = vpack.c.b16 %v1223, %v1223
        %v1232 = vpack.c.b16 %v1224, %v1224
        %v1233 = vpack.c.b16 %v1225, %v1225
        %v1234 = vpack.c.b16 %v1226, %v1226
        %v1235 = vpack.c.b16 %v1227, %v1227
        %v1236 = vpack.c.b16 %v1228, %v1228
        %v1237 = vpack.c.b16 %v1229, %v1229
        %v1238 = vpack.c.b16 %v1230, %v1230
        %s1247 = scalar_lea.vmem %s382, 128 [#allocation9]
        %1248 = vst [vmem:[%s1247] sm:$0xf] %v1231
        %1249 = vst [vmem:[%s1247 + $0x4] sm:$0xf] %v1232
        %1250 = vst [vmem:[%s1247 + $0x8] sm:$0xf] %v1233
        %1251 = vst [vmem:[%s1247 + $0xc] sm:$0xf] %v1234
        %1252 = vst [vmem:[%s1247 + $0x10] sm:$0xf] %v1235
        %1253 = vst [vmem:[%s1247 + $0x14] sm:$0xf] %v1236
        %1254 = vst [vmem:[%s1247 + $0x18] sm:$0xf] %v1237
        %1255 = vst [vmem:[%s1247 + $0x1c] sm:$0xf] %v1238
        %v1256 = vpack.c.bf16 %v1029, %v1028
        %v1257 = vpack.c.bf16 %v1031, %v1030
        %v1258 = vpack.c.bf16 %v1033, %v1032
        %v1259 = vpack.c.bf16 %v1035, %v1034
        %v1264 = vunpack.c.l.b16 %v1256
        %v1265 = vunpack.c.h.b16 %v1256
        %v1266 = vunpack.c.l.b16 %v1257
        %v1267 = vunpack.c.h.b16 %v1257
        %v1268 = vunpack.c.l.b16 %v1258
        %v1269 = vunpack.c.h.b16 %v1258
        %v1270 = vunpack.c.l.b16 %v1259
        %v1271 = vunpack.c.h.b16 %v1259
        %v1272 = vpack.c.b16 %v1264, %v1264
        %v1273 = vpack.c.b16 %v1265, %v1265
        %v1274 = vpack.c.b16 %v1266, %v1266
        %v1275 = vpack.c.b16 %v1267, %v1267
        %v1276 = vpack.c.b16 %v1268, %v1268
        %v1277 = vpack.c.b16 %v1269, %v1269
        %v1278 = vpack.c.b16 %v1270, %v1270
        %v1279 = vpack.c.b16 %v1271, %v1271
        %s1288 = scalar_lea.vmem %s382, 160 [#allocation9]
        %1289 = vst [vmem:[%s1288] sm:$0xf] %v1272
        %1290 = vst [vmem:[%s1288 + $0x4] sm:$0xf] %v1273
        %1291 = vst [vmem:[%s1288 + $0x8] sm:$0xf] %v1274
        %1292 = vst [vmem:[%s1288 + $0xc] sm:$0xf] %v1275
        %1293 = vst [vmem:[%s1288 + $0x10] sm:$0xf] %v1276
        %1294 = vst [vmem:[%s1288 + $0x14] sm:$0xf] %v1277
        %1295 = vst [vmem:[%s1288 + $0x18] sm:$0xf] %v1278
        %1296 = vst [vmem:[%s1288 + $0x1c] sm:$0xf] %v1279
        %v1297 = vpack.c.bf16 %v1037, %v1036
        %v1298 = vpack.c.bf16 %v1039, %v1038
        %v1299 = vpack.c.bf16 %v1041, %v1040
        %v1300 = vpack.c.bf16 %v1043, %v1042
        %v1305 = vunpack.c.l.b16 %v1297
        %v1306 = vunpack.c.h.b16 %v1297
        %v1307 = vunpack.c.l.b16 %v1298
        %v1308 = vunpack.c.h.b16 %v1298
        %v1309 = vunpack.c.l.b16 %v1299
        %v1310 = vunpack.c.h.b16 %v1299
        %v1311 = vunpack.c.l.b16 %v1300
        %v1312 = vunpack.c.h.b16 %v1300
        %v1313 = vpack.c.b16 %v1305, %v1305
        %v1314 = vpack.c.b16 %v1306, %v1306
        %v1315 = vpack.c.b16 %v1307, %v1307
        %v1316 = vpack.c.b16 %v1308, %v1308
        %v1317 = vpack.c.b16 %v1309, %v1309
        %v1318 = vpack.c.b16 %v1310, %v1310
        %v1319 = vpack.c.b16 %v1311, %v1311
        %v1320 = vpack.c.b16 %v1312, %v1312
        %s1329 = scalar_lea.vmem %s382, 192 [#allocation9]
        %1330 = vst [vmem:[%s1329] sm:$0xf] %v1313
        %1331 = vst [vmem:[%s1329 + $0x4] sm:$0xf] %v1314
        %1332 = vst [vmem:[%s1329 + $0x8] sm:$0xf] %v1315
        %1333 = vst [vmem:[%s1329 + $0xc] sm:$0xf] %v1316
        %1334 = vst [vmem:[%s1329 + $0x10] sm:$0xf] %v1317
        %1335 = vst [vmem:[%s1329 + $0x14] sm:$0xf] %v1318
        %1336 = vst [vmem:[%s1329 + $0x18] sm:$0xf] %v1319
        %1337 = vst [vmem:[%s1329 + $0x1c] sm:$0xf] %v1320
        %v1338 = vpack.c.bf16 %v1045, %v1044
        %v1339 = vpack.c.bf16 %v1047, %v1046
        %v1340 = vpack.c.bf16 %v1049, %v1048
        %v1341 = vpack.c.bf16 %v1051, %v1050
        %v1346 = vunpack.c.l.b16 %v1338
        %v1347 = vunpack.c.h.b16 %v1338
        %v1348 = vunpack.c.l.b16 %v1339
        %v1349 = vunpack.c.h.b16 %v1339
        %v1350 = vunpack.c.l.b16 %v1340
        %v1351 = vunpack.c.h.b16 %v1340
        %v1352 = vunpack.c.l.b16 %v1341
        %v1353 = vunpack.c.h.b16 %v1341
        %v1354 = vpack.c.b16 %v1346, %v1346
        %v1355 = vpack.c.b16 %v1347, %v1347
        %v1356 = vpack.c.b16 %v1348, %v1348
        %v1357 = vpack.c.b16 %v1349, %v1349
        %v1358 = vpack.c.b16 %v1350, %v1350
        %v1359 = vpack.c.b16 %v1351, %v1351
        %v1360 = vpack.c.b16 %v1352, %v1352
        %v1361 = vpack.c.b16 %v1353, %v1353
        %s1370 = scalar_lea.vmem %s382, 224 [#allocation9]
        %1371 = vst [vmem:[%s1370] sm:$0xf] %v1354
        %1372 = vst [vmem:[%s1370 + $0x4] sm:$0xf] %v1355
        %1373 = vst [vmem:[%s1370 + $0x8] sm:$0xf] %v1356
        %1374 = vst [vmem:[%s1370 + $0xc] sm:$0xf] %v1357
        %1375 = vst [vmem:[%s1370 + $0x10] sm:$0xf] %v1358
        %1376 = vst [vmem:[%s1370 + $0x14] sm:$0xf] %v1359
        %1377 = vst [vmem:[%s1370 + $0x18] sm:$0xf] %v1360
        %1378 = vst [vmem:[%s1370 + $0x1c] sm:$0xf] %v1361
        %s1379 = sand.u32 %s180, 1
        %s1380 = sand.u32 %s180, 1
        %s1381 = smul.addr %s1380, 256
        %s1382 = scalar_lea.vmem [#allocation9], %s1381
        // Predicated region
        $region61: #{conv_bimla_forward.2} parent=43 // pred_check
          %p1383 = pneg %p190
        $region62: #{conv_bimla_forward.2} parent=43 // pred_check_branch
          %1385 = sbr.rel (%p1383) target = $region64
        $region63: #{conv_bimla_forward.2} parent=43 // pred_region
          %s1386 = smul.u32 8, %s26
          %s1387 = smul.addr %s1386, 4
          %s1388 = scalar_lea.vmem %s6, %s1387
          // Predicated region
          $region65: #{conv_bimla_forward.2} parent=63 // pred_check
            _
          $region66: #{conv_bimla_forward.2} parent=63 // pred_check_branch
            %1390 = sbr.rel (0) target = $region68
          $region67: #{conv_bimla_forward.2} parent=63 // pred_region
            // Predicated region
            $region69: #{conv_bimla_forward.2} parent=67 // pred_check
              _
            $region70: #{conv_bimla_forward.2} parent=67 // pred_check_branch
              %1392 = sbr.rel target = $region72
            $region71: #{conv_bimla_forward.2} parent=67 // pred_region
              // Predicated region
              $region84: #{conv_bimla_forward.2} parent=71 // pred_check
                _
              $region85: #{conv_bimla_forward.2} parent=71 // pred_check_branch
                %1534 = sbr.rel (0) target = $region87
              $region86: #{conv_bimla_forward.2} parent=71 // pred_region
                loop: start=0, step=1, limit=1
                $region88: #{conv_bimla_forward.2} parent=86 // loop_pre_header
                  _
                $region89: #{conv_bimla_forward.2} parent=86 // loop_header
                  %s1536 = sphi 0, %s1540
                  %p1537 = scmp.ge.s32.totalorder %s1536, 1
                  %s1541 = sphi %s1382, %s1382
                  %s1542 = sphi %s1388, %s1388
                $region90: #{conv_bimla_forward.2} parent=86 // loop_header_branch
                  %1539 = sbr.rel (%p1537) target = $region94
                $region91: #{conv_bimla_forward.2} parent=86 // loop_body
                  _
                $region92: #{conv_bimla_forward.2} parent=86 // loop_footer
                  %s1540 = sadd.s32 1, %s1536
                $region93: #{conv_bimla_forward.2} parent=86 // loop_footer_branch
                  %1535 = sbr.rel target = $region89
                $region94: #{conv_bimla_forward.2} parent=86 // loop_exit
                  _
                %s1544 = ssub.s32 16, 1
                loop: start=0, step=1, limit=1
                $region95: #{conv_bimla_forward.2} parent=86 // loop_pre_header
                  _
                $region96: #{conv_bimla_forward.2} parent=86 // loop_header
                  %s1546 = sphi 0, %s1550
                  %p1547 = scmp.ge.s32.totalorder %s1546, 1
                  %s1551 = sphi %s1382, %s1382
                  %s1552 = sphi %s1388, %s1388
                $region97: #{conv_bimla_forward.2} parent=86 // loop_header_branch
                  %1549 = sbr.rel (%p1547) target = $region101
                $region98: #{conv_bimla_forward.2} parent=86 // loop_body
                  %v1553 = vld [vmem:[%s1551] sm:%s1544]
                  %1554 = vst [vmem:[%s1552] sm:%s1544] %v1553
                  %v1555 = vld [vmem:[%s1551 + $0x4] sm:%s1544]
                  %1556 = vst [vmem:[%s1552 + $0x4] sm:%s1544] %v1555
                  %v1557 = vld [vmem:[%s1551 + $0x8] sm:%s1544]
                  %1558 = vst [vmem:[%s1552 + $0x8] sm:%s1544] %v1557
                  %v1559 = vld [vmem:[%s1551 + $0xc] sm:%s1544]
                  %1560 = vst [vmem:[%s1552 + $0xc] sm:%s1544] %v1559
                  %v1561 = vld [vmem:[%s1551 + $0x10] sm:%s1544]
                  %1562 = vst [vmem:[%s1552 + $0x10] sm:%s1544] %v1561
                  %v1563 = vld [vmem:[%s1551 + $0x14] sm:%s1544]
                  %1564 = vst [vmem:[%s1552 + $0x14] sm:%s1544] %v1563
                  %v1565 = vld [vmem:[%s1551 + $0x18] sm:%s1544]
                  %1566 = vst [vmem:[%s1552 + $0x18] sm:%s1544] %v1565
                  %v1567 = vld [vmem:[%s1551 + $0x1c] sm:%s1544]
                  %1568 = vst [vmem:[%s1552 + $0x1c] sm:%s1544] %v1567
                  %v1569 = vld [vmem:[%s1551 + $0x20] sm:%s1544]
                  %1570 = vst [vmem:[%s1552 + $0x40] sm:%s1544] %v1569
                  %v1571 = vld [vmem:[%s1551 + $0x24] sm:%s1544]
                  %1572 = vst [vmem:[%s1552 + $0x44] sm:%s1544] %v1571
                  %v1573 = vld [vmem:[%s1551 + $0x28] sm:%s1544]
                  %1574 = vst [vmem:[%s1552 + $0x48] sm:%s1544] %v1573
                  %v1575 = vld [vmem:[%s1551 + $0x2c] sm:%s1544]
                  %1576 = vst [vmem:[%s1552 + $0x4c] sm:%s1544] %v1575
                  %v1577 = vld [vmem:[%s1551 + $0x30] sm:%s1544]
                  %1578 = vst [vmem:[%s1552 + $0x50] sm:%s1544] %v1577
                  %v1579 = vld [vmem:[%s1551 + $0x34] sm:%s1544]
                  %1580 = vst [vmem:[%s1552 + $0x54] sm:%s1544] %v1579
                  %v1581 = vld [vmem:[%s1551 + $0x38] sm:%s1544]
                  %1582 = vst [vmem:[%s1552 + $0x58] sm:%s1544] %v1581
                  %v1583 = vld [vmem:[%s1551 + $0x3c] sm:%s1544]
                  %1584 = vst [vmem:[%s1552 + $0x5c] sm:%s1544] %v1583
                  %v1585 = vld [vmem:[%s1551 + $0x40] sm:%s1544]
                  %1586 = vst [vmem:[%s1552 + $0x80] sm:%s1544] %v1585
                  %v1587 = vld [vmem:[%s1551 + $0x44] sm:%s1544]
                  %1588 = vst [vmem:[%s1552 + $0x84] sm:%s1544] %v1587
                  %v1589 = vld [vmem:[%s1551 + $0x48] sm:%s1544]
                  %1590 = vst [vmem:[%s1552 + $0x88] sm:%s1544] %v1589
                  %v1591 = vld [vmem:[%s1551 + $0x4c] sm:%s1544]
                  %1592 = vst [vmem:[%s1552 + $0x8c] sm:%s1544] %v1591
                  %v1593 = vld [vmem:[%s1551 + $0x50] sm:%s1544]
                  %1594 = vst [vmem:[%s1552 + $0x90] sm:%s1544] %v1593
                  %v1595 = vld [vmem:[%s1551 + $0x54] sm:%s1544]
                  %1596 = vst [vmem:[%s1552 + $0x94] sm:%s1544] %v1595
                  %v1597 = vld [vmem:[%s1551 + $0x58] sm:%s1544]
                  %1598 = vst [vmem:[%s1552 + $0x98] sm:%s1544] %v1597
                  %v1599 = vld [vmem:[%s1551 + $0x5c] sm:%s1544]
                  %1600 = vst [vmem:[%s1552 + $0x9c] sm:%s1544] %v1599
                  %v1601 = vld [vmem:[%s1551 + $0x60] sm:%s1544]
                  %1602 = vst [vmem:[%s1552 + $0xc0] sm:%s1544] %v1601
                  %v1603 = vld [vmem:[%s1551 + $0x64] sm:%s1544]
                  %1604 = vst [vmem:[%s1552 + $0xc4] sm:%s1544] %v1603
                  %v1605 = vld [vmem:[%s1551 + $0x68] sm:%s1544]
                  %1606 = vst [vmem:[%s1552 + $0xc8] sm:%s1544] %v1605
                  %v1607 = vld [vmem:[%s1551 + $0x6c] sm:%s1544]
                  %1608 = vst [vmem:[%s1552 + $0xcc] sm:%s1544] %v1607
                  %v1609 = vld [vmem:[%s1551 + $0x70] sm:%s1544]
                  %1610 = vst [vmem:[%s1552 + $0xd0] sm:%s1544] %v1609
                  %v1611 = vld [vmem:[%s1551 + $0x74] sm:%s1544]
                  %1612 = vst [vmem:[%s1552 + $0xd4] sm:%s1544] %v1611
                  %v1613 = vld [vmem:[%s1551 + $0x78] sm:%s1544]
                  %1614 = vst [vmem:[%s1552 + $0xd8] sm:%s1544] %v1613
                  %v1615 = vld [vmem:[%s1551 + $0x7c] sm:%s1544]
                  %1616 = vst [vmem:[%s1552 + $0xdc] sm:%s1544] %v1615
                  %v1617 = vld [vmem:[%s1551 + $0x80] sm:%s1544]
                  %1618 = vst [vmem:[%s1552 + $0x100] sm:%s1544] %v1617
                  %v1619 = vld [vmem:[%s1551 + $0x84] sm:%s1544]
                  %1620 = vst [vmem:[%s1552 + $0x104] sm:%s1544] %v1619
                  %v1621 = vld [vmem:[%s1551 + $0x88] sm:%s1544]
                  %1622 = vst [vmem:[%s1552 + $0x108] sm:%s1544] %v1621
                  %v1623 = vld [vmem:[%s1551 + $0x8c] sm:%s1544]
                  %1624 = vst [vmem:[%s1552 + $0x10c] sm:%s1544] %v1623
                  %v1625 = vld [vmem:[%s1551 + $0x90] sm:%s1544]
                  %1626 = vst [vmem:[%s1552 + $0x110] sm:%s1544] %v1625
                  %v1627 = vld [vmem:[%s1551 + $0x94] sm:%s1544]
                  %1628 = vst [vmem:[%s1552 + $0x114] sm:%s1544] %v1627
                  %v1629 = vld [vmem:[%s1551 + $0x98] sm:%s1544]
                  %1630 = vst [vmem:[%s1552 + $0x118] sm:%s1544] %v1629
                  %v1631 = vld [vmem:[%s1551 + $0x9c] sm:%s1544]
                  %1632 = vst [vmem:[%s1552 + $0x11c] sm:%s1544] %v1631
                  %v1633 = vld [vmem:[%s1551 + $0xa0] sm:%s1544]
                  %1634 = vst [vmem:[%s1552 + $0x140] sm:%s1544] %v1633
                  %v1635 = vld [vmem:[%s1551 + $0xa4] sm:%s1544]
                  %1636 = vst [vmem:[%s1552 + $0x144] sm:%s1544] %v1635
                  %v1637 = vld [vmem:[%s1551 + $0xa8] sm:%s1544]
                  %1638 = vst [vmem:[%s1552 + $0x148] sm:%s1544] %v1637
                  %v1639 = vld [vmem:[%s1551 + $0xac] sm:%s1544]
                  %1640 = vst [vmem:[%s1552 + $0x14c] sm:%s1544] %v1639
                  %v1641 = vld [vmem:[%s1551 + $0xb0] sm:%s1544]
                  %1642 = vst [vmem:[%s1552 + $0x150] sm:%s1544] %v1641
                  %v1643 = vld [vmem:[%s1551 + $0xb4] sm:%s1544]
                  %1644 = vst [vmem:[%s1552 + $0x154] sm:%s1544] %v1643
                  %v1645 = vld [vmem:[%s1551 + $0xb8] sm:%s1544]
                  %1646 = vst [vmem:[%s1552 + $0x158] sm:%s1544] %v1645
                  %v1647 = vld [vmem:[%s1551 + $0xbc] sm:%s1544]
                  %1648 = vst [vmem:[%s1552 + $0x15c] sm:%s1544] %v1647
                  %v1649 = vld [vmem:[%s1551 + $0xc0] sm:%s1544]
                  %1650 = vst [vmem:[%s1552 + $0x180] sm:%s1544] %v1649
                  %v1651 = vld [vmem:[%s1551 + $0xc4] sm:%s1544]
                  %1652 = vst [vmem:[%s1552 + $0x184] sm:%s1544] %v1651
                  %v1653 = vld [vmem:[%s1551 + $0xc8] sm:%s1544]
                  %1654 = vst [vmem:[%s1552 + $0x188] sm:%s1544] %v1653
                  %v1655 = vld [vmem:[%s1551 + $0xcc] sm:%s1544]
                  %1656 = vst [vmem:[%s1552 + $0x18c] sm:%s1544] %v1655
                  %v1657 = vld [vmem:[%s1551 + $0xd0] sm:%s1544]
                  %1658 = vst [vmem:[%s1552 + $0x190] sm:%s1544] %v1657
                  %v1659 = vld [vmem:[%s1551 + $0xd4] sm:%s1544]
                  %1660 = vst [vmem:[%s1552 + $0x194] sm:%s1544] %v1659
                  %v1661 = vld [vmem:[%s1551 + $0xd8] sm:%s1544]
                  %1662 = vst [vmem:[%s1552 + $0x198] sm:%s1544] %v1661
                  %v1663 = vld [vmem:[%s1551 + $0xdc] sm:%s1544]
                  %1664 = vst [vmem:[%s1552 + $0x19c] sm:%s1544] %v1663
                  %v1665 = vld [vmem:[%s1551 + $0xe0] sm:%s1544]
                  %1666 = vst [vmem:[%s1552 + $0x1c0] sm:%s1544] %v1665
                  %v1667 = vld [vmem:[%s1551 + $0xe4] sm:%s1544]
                  %1668 = vst [vmem:[%s1552 + $0x1c4] sm:%s1544] %v1667
                  %v1669 = vld [vmem:[%s1551 + $0xe8] sm:%s1544]
                  %1670 = vst [vmem:[%s1552 + $0x1c8] sm:%s1544] %v1669
                  %v1671 = vld [vmem:[%s1551 + $0xec] sm:%s1544]
                  %1672 = vst [vmem:[%s1552 + $0x1cc] sm:%s1544] %v1671
                  %v1673 = vld [vmem:[%s1551 + $0xf0] sm:%s1544]
                  %1674 = vst [vmem:[%s1552 + $0x1d0] sm:%s1544] %v1673
                  %v1675 = vld [vmem:[%s1551 + $0xf4] sm:%s1544]
                  %1676 = vst [vmem:[%s1552 + $0x1d4] sm:%s1544] %v1675
                  %v1677 = vld [vmem:[%s1551 + $0xf8] sm:%s1544]
                  %1678 = vst [vmem:[%s1552 + $0x1d8] sm:%s1544] %v1677
                  %v1679 = vld [vmem:[%s1551 + $0xfc] sm:%s1544]
                  %1680 = vst [vmem:[%s1552 + $0x1dc] sm:%s1544] %v1679
                $region99: #{conv_bimla_forward.2} parent=86 // loop_footer
                  %s1550 = sadd.s32 1, %s1546
                $region100: #{conv_bimla_forward.2} parent=86 // loop_footer_branch
                  %1545 = sbr.rel target = $region96
                $region101: #{conv_bimla_forward.2} parent=86 // loop_exit
                  _
              $region87: #{conv_bimla_forward.2} parent=71 // pred_fallthru
                _
            $region72: #{conv_bimla_forward.2} parent=67 // pred_fallthru
              _
            // Predicated region
            $region73: #{conv_bimla_forward.2} parent=67 // pred_check
              _
            $region74: #{conv_bimla_forward.2} parent=67 // pred_check_branch
              %1394 = sbr.rel (0) target = $region76
            $region75: #{conv_bimla_forward.2} parent=67 // pred_region
              %s1396 = ssub.s32 16, 1
              loop: start=0, step=1, limit=1
              $region77: #{conv_bimla_forward.2} parent=75 // loop_pre_header
                _
              $region78: #{conv_bimla_forward.2} parent=75 // loop_header
                %s1398 = sphi 0, %s1402
                %p1399 = scmp.ge.s32.totalorder %s1398, 1
                %s1403 = sphi %s1382, %s1382
                %s1404 = sphi %s1388, %s1388
              $region79: #{conv_bimla_forward.2} parent=75 // loop_header_branch
                %1401 = sbr.rel (%p1399) target = $region83
              $region80: #{conv_bimla_forward.2} parent=75 // loop_body
                %v1405 = vld [vmem:[%s1403] sm:%s1396]
                %1406 = vst [vmem:[%s1404] sm:%s1396] %v1405
                %v1407 = vld [vmem:[%s1403 + $0x4] sm:%s1396]
                %1408 = vst [vmem:[%s1404 + $0x4] sm:%s1396] %v1407
                %v1409 = vld [vmem:[%s1403 + $0x8] sm:%s1396]
                %1410 = vst [vmem:[%s1404 + $0x8] sm:%s1396] %v1409
                %v1411 = vld [vmem:[%s1403 + $0xc] sm:%s1396]
                %1412 = vst [vmem:[%s1404 + $0xc] sm:%s1396] %v1411
                %v1413 = vld [vmem:[%s1403 + $0x10] sm:%s1396]
                %1414 = vst [vmem:[%s1404 + $0x10] sm:%s1396] %v1413
                %v1415 = vld [vmem:[%s1403 + $0x14] sm:%s1396]
                %1416 = vst [vmem:[%s1404 + $0x14] sm:%s1396] %v1415
                %v1417 = vld [vmem:[%s1403 + $0x18] sm:%s1396]
                %1418 = vst [vmem:[%s1404 + $0x18] sm:%s1396] %v1417
                %v1419 = vld [vmem:[%s1403 + $0x1c] sm:%s1396]
                %1420 = vst [vmem:[%s1404 + $0x1c] sm:%s1396] %v1419
                %v1421 = vld [vmem:[%s1403 + $0x20] sm:%s1396]
                %1422 = vst [vmem:[%s1404 + $0x40] sm:%s1396] %v1421
                %v1423 = vld [vmem:[%s1403 + $0x24] sm:%s1396]
                %1424 = vst [vmem:[%s1404 + $0x44] sm:%s1396] %v1423
                %v1425 = vld [vmem:[%s1403 + $0x28] sm:%s1396]
                %1426 = vst [vmem:[%s1404 + $0x48] sm:%s1396] %v1425
                %v1427 = vld [vmem:[%s1403 + $0x2c] sm:%s1396]
                %1428 = vst [vmem:[%s1404 + $0x4c] sm:%s1396] %v1427
                %v1429 = vld [vmem:[%s1403 + $0x30] sm:%s1396]
                %1430 = vst [vmem:[%s1404 + $0x50] sm:%s1396] %v1429
                %v1431 = vld [vmem:[%s1403 + $0x34] sm:%s1396]
                %1432 = vst [vmem:[%s1404 + $0x54] sm:%s1396] %v1431
                %v1433 = vld [vmem:[%s1403 + $0x38] sm:%s1396]
                %1434 = vst [vmem:[%s1404 + $0x58] sm:%s1396] %v1433
                %v1435 = vld [vmem:[%s1403 + $0x3c] sm:%s1396]
                %1436 = vst [vmem:[%s1404 + $0x5c] sm:%s1396] %v1435
                %v1437 = vld [vmem:[%s1403 + $0x40] sm:%s1396]
                %1438 = vst [vmem:[%s1404 + $0x80] sm:%s1396] %v1437
                %v1439 = vld [vmem:[%s1403 + $0x44] sm:%s1396]
                %1440 = vst [vmem:[%s1404 + $0x84] sm:%s1396] %v1439
                %v1441 = vld [vmem:[%s1403 + $0x48] sm:%s1396]
                %1442 = vst [vmem:[%s1404 + $0x88] sm:%s1396] %v1441
                %v1443 = vld [vmem:[%s1403 + $0x4c] sm:%s1396]
                %1444 = vst [vmem:[%s1404 + $0x8c] sm:%s1396] %v1443
                %v1445 = vld [vmem:[%s1403 + $0x50] sm:%s1396]
                %1446 = vst [vmem:[%s1404 + $0x90] sm:%s1396] %v1445
                %v1447 = vld [vmem:[%s1403 + $0x54] sm:%s1396]
                %1448 = vst [vmem:[%s1404 + $0x94] sm:%s1396] %v1447
                %v1449 = vld [vmem:[%s1403 + $0x58] sm:%s1396]
                %1450 = vst [vmem:[%s1404 + $0x98] sm:%s1396] %v1449
                %v1451 = vld [vmem:[%s1403 + $0x5c] sm:%s1396]
                %1452 = vst [vmem:[%s1404 + $0x9c] sm:%s1396] %v1451
                %v1453 = vld [vmem:[%s1403 + $0x60] sm:%s1396]
                %1454 = vst [vmem:[%s1404 + $0xc0] sm:%s1396] %v1453
                %v1455 = vld [vmem:[%s1403 + $0x64] sm:%s1396]
                %1456 = vst [vmem:[%s1404 + $0xc4] sm:%s1396] %v1455
                %v1457 = vld [vmem:[%s1403 + $0x68] sm:%s1396]
                %1458 = vst [vmem:[%s1404 + $0xc8] sm:%s1396] %v1457
                %v1459 = vld [vmem:[%s1403 + $0x6c] sm:%s1396]
                %1460 = vst [vmem:[%s1404 + $0xcc] sm:%s1396] %v1459
                %v1461 = vld [vmem:[%s1403 + $0x70] sm:%s1396]
                %1462 = vst [vmem:[%s1404 + $0xd0] sm:%s1396] %v1461
                %v1463 = vld [vmem:[%s1403 + $0x74] sm:%s1396]
                %1464 = vst [vmem:[%s1404 + $0xd4] sm:%s1396] %v1463
                %v1465 = vld [vmem:[%s1403 + $0x78] sm:%s1396]
                %1466 = vst [vmem:[%s1404 + $0xd8] sm:%s1396] %v1465
                %v1467 = vld [vmem:[%s1403 + $0x7c] sm:%s1396]
                %1468 = vst [vmem:[%s1404 + $0xdc] sm:%s1396] %v1467
                %v1469 = vld [vmem:[%s1403 + $0x80] sm:%s1396]
                %1470 = vst [vmem:[%s1404 + $0x100] sm:%s1396] %v1469
                %v1471 = vld [vmem:[%s1403 + $0x84] sm:%s1396]
                %1472 = vst [vmem:[%s1404 + $0x104] sm:%s1396] %v1471
                %v1473 = vld [vmem:[%s1403 + $0x88] sm:%s1396]
                %1474 = vst [vmem:[%s1404 + $0x108] sm:%s1396] %v1473
                %v1475 = vld [vmem:[%s1403 + $0x8c] sm:%s1396]
                %1476 = vst [vmem:[%s1404 + $0x10c] sm:%s1396] %v1475
                %v1477 = vld [vmem:[%s1403 + $0x90] sm:%s1396]
                %1478 = vst [vmem:[%s1404 + $0x110] sm:%s1396] %v1477
                %v1479 = vld [vmem:[%s1403 + $0x94] sm:%s1396]
                %1480 = vst [vmem:[%s1404 + $0x114] sm:%s1396] %v1479
                %v1481 = vld [vmem:[%s1403 + $0x98] sm:%s1396]
                %1482 = vst [vmem:[%s1404 + $0x118] sm:%s1396] %v1481
                %v1483 = vld [vmem:[%s1403 + $0x9c] sm:%s1396]
                %1484 = vst [vmem:[%s1404 + $0x11c] sm:%s1396] %v1483
                %v1485 = vld [vmem:[%s1403 + $0xa0] sm:%s1396]
                %1486 = vst [vmem:[%s1404 + $0x140] sm:%s1396] %v1485
                %v1487 = vld [vmem:[%s1403 + $0xa4] sm:%s1396]
                %1488 = vst [vmem:[%s1404 + $0x144] sm:%s1396] %v1487
                %v1489 = vld [vmem:[%s1403 + $0xa8] sm:%s1396]
                %1490 = vst [vmem:[%s1404 + $0x148] sm:%s1396] %v1489
                %v1491 = vld [vmem:[%s1403 + $0xac] sm:%s1396]
                %1492 = vst [vmem:[%s1404 + $0x14c] sm:%s1396] %v1491
                %v1493 = vld [vmem:[%s1403 + $0xb0] sm:%s1396]
                %1494 = vst [vmem:[%s1404 + $0x150] sm:%s1396] %v1493
                %v1495 = vld [vmem:[%s1403 + $0xb4] sm:%s1396]
                %1496 = vst [vmem:[%s1404 + $0x154] sm:%s1396] %v1495
                %v1497 = vld [vmem:[%s1403 + $0xb8] sm:%s1396]
                %1498 = vst [vmem:[%s1404 + $0x158] sm:%s1396] %v1497
                %v1499 = vld [vmem:[%s1403 + $0xbc] sm:%s1396]
                %1500 = vst [vmem:[%s1404 + $0x15c] sm:%s1396] %v1499
                %v1501 = vld [vmem:[%s1403 + $0xc0] sm:%s1396]
                %1502 = vst [vmem:[%s1404 + $0x180] sm:%s1396] %v1501
                %v1503 = vld [vmem:[%s1403 + $0xc4] sm:%s1396]
                %1504 = vst [vmem:[%s1404 + $0x184] sm:%s1396] %v1503
                %v1505 = vld [vmem:[%s1403 + $0xc8] sm:%s1396]
                %1506 = vst [vmem:[%s1404 + $0x188] sm:%s1396] %v1505
                %v1507 = vld [vmem:[%s1403 + $0xcc] sm:%s1396]
                %1508 = vst [vmem:[%s1404 + $0x18c] sm:%s1396] %v1507
                %v1509 = vld [vmem:[%s1403 + $0xd0] sm:%s1396]
                %1510 = vst [vmem:[%s1404 + $0x190] sm:%s1396] %v1509
                %v1511 = vld [vmem:[%s1403 + $0xd4] sm:%s1396]
                %1512 = vst [vmem:[%s1404 + $0x194] sm:%s1396] %v1511
                %v1513 = vld [vmem:[%s1403 + $0xd8] sm:%s1396]
                %1514 = vst [vmem:[%s1404 + $0x198] sm:%s1396] %v1513
                %v1515 = vld [vmem:[%s1403 + $0xdc] sm:%s1396]
                %1516 = vst [vmem:[%s1404 + $0x19c] sm:%s1396] %v1515
                %v1517 = vld [vmem:[%s1403 + $0xe0] sm:%s1396]
                %1518 = vst [vmem:[%s1404 + $0x1c0] sm:%s1396] %v1517
                %v1519 = vld [vmem:[%s1403 + $0xe4] sm:%s1396]
                %1520 = vst [vmem:[%s1404 + $0x1c4] sm:%s1396] %v1519
                %v1521 = vld [vmem:[%s1403 + $0xe8] sm:%s1396]
                %1522 = vst [vmem:[%s1404 + $0x1c8] sm:%s1396] %v1521
                %v1523 = vld [vmem:[%s1403 + $0xec] sm:%s1396]
                %1524 = vst [vmem:[%s1404 + $0x1cc] sm:%s1396] %v1523
                %v1525 = vld [vmem:[%s1403 + $0xf0] sm:%s1396]
                %1526 = vst [vmem:[%s1404 + $0x1d0] sm:%s1396] %v1525
                %v1527 = vld [vmem:[%s1403 + $0xf4] sm:%s1396]
                %1528 = vst [vmem:[%s1404 + $0x1d4] sm:%s1396] %v1527
                %v1529 = vld [vmem:[%s1403 + $0xf8] sm:%s1396]
                %1530 = vst [vmem:[%s1404 + $0x1d8] sm:%s1396] %v1529
                %v1531 = vld [vmem:[%s1403 + $0xfc] sm:%s1396]
                %1532 = vst [vmem:[%s1404 + $0x1dc] sm:%s1396] %v1531
              $region81: #{conv_bimla_forward.2} parent=75 // loop_footer
                %s1402 = sadd.s32 1, %s1398
              $region82: #{conv_bimla_forward.2} parent=75 // loop_footer_branch
                %1397 = sbr.rel target = $region78
              $region83: #{conv_bimla_forward.2} parent=75 // loop_exit
                _
            $region76: #{conv_bimla_forward.2} parent=67 // pred_fallthru
              _
          $region68: #{conv_bimla_forward.2} parent=63 // pred_fallthru
            _
          %1681 = vnop
        $region64: #{conv_bimla_forward.2} parent=43 // pred_fallthru
          _
      $region44: #{conv_bimla_forward.2} parent=5 // pred_fallthru
        _
      %p1682 = scmp.le.s32.totalorder 2, %s21
      // Predicated region
      $region102: #{conv_bimla_forward.2} parent=5 // pred_check
        %p1683 = pneg %p1682
      $region103: #{conv_bimla_forward.2} parent=5 // pred_check_branch
        %1685 = sbr.rel (%p1683) target = $region105
      $region104: #{conv_bimla_forward.2} parent=5 // pred_region
        %s1686 = ssub.s32 %s21, 2
        // Predicated region
        $region106: #{conv_bimla_forward.2} parent=104 // pred_check
          %p1687 = pneg %p196
        $region107: #{conv_bimla_forward.2} parent=104 // pred_check_branch
          %1689 = sbr.rel (%p1687) target = $region109
        $region108: #{conv_bimla_forward.2} parent=104 // pred_region
          %s1690 = sand.u32 %s181, 1
          %s1691 = sand.u32 %s181, 1
          %s1692 = smul.addr %s1691, 256
          %s1693 = scalar_lea.vmem [#allocation9], %s1692
        $region109: #{conv_bimla_forward.2} parent=104 // pred_fallthru
          _
      $region105: #{conv_bimla_forward.2} parent=5 // pred_fallthru
        _
    $region6: #{conv_bimla_forward.2} parent=1 // loop_footer
      %s25 = sadd.s32 1, %s21
    $region7: #{conv_bimla_forward.2} parent=1 // loop_footer_branch
      %20 = sbr.rel target = $region3
    $region8: #{conv_bimla_forward.2} parent=1 // loop_exit
      _
    %1694 = vsyncpa [#allocation3], 1
    %s1695 = scalar_lea.sflag [#allocation3], 1
    %1696 = vsyncpa %s1695, 1
    %1697 = vsyncpa [#allocation5], 1
    %s1698 = scalar_lea.sflag [#allocation5], 1
    %1699 = vsyncpa %s1698, 1
    %1700 = vsyncpa [#allocation8], 1
    %s1701 = scalar_lea.sflag [#allocation8], 1
    %1702 = vsyncpa %s1701, 1

// kernel: conv_bimla_forward.3
$region0: #{conv_bimla_forward.3}
  #allocation0 [shape = 'u32[]', space=smem, size = 0x4, offset = 0x4, fixed_abs, tag = 'smem constant byte address 0x4 - core index']
  #allocation1 [shape = 'u32[144,128]{1,0:T(1,128)}', space=vmem, size = 0x12000, scoped, tag = 'internal scratch']
  %s0 = inlined_call_operand.vmem [shape: bf16[8,2,8,8,128], index: 0, kind: input, shape index: {}]
  %s1 = inlined_call_operand.vmem [shape: bf16[8,3,3,128,128], index: 1, kind: input, shape index: {}]
  %s2 = inlined_call_operand.vmem [shape: f32[8,1,128], index: 2, kind: input, shape index: {}]
  %s3 = inlined_call_operand.vmem [shape: bf16[8,2,8,8,128], index: 3, kind: output, shape index: {}]
  %s4 = sld [smem:[#allocation0]]
  $region45: #{conv_bimla_forward.3} parent=0
    _
  %s6 = ssub.s32 1, %s4
  %s7 = scalar_select 0, %s6, %s4
  loop: start=0, step=1, limit=18
  $region2: #{conv_bimla_forward.3} parent=0 // loop_pre_header
    _
  $region3: #{conv_bimla_forward.3} parent=0 // loop_header
    %s9 = sphi 0, %s13
    %p10 = scmp.ge.s32.totalorder %s9, 18
    %s16 = sphi 0, %s28
    %s17 = sphi 0, %s24
    %s18 = sphi 0, %s16
    %s19 = sphi 0, %s17
    %s20 = sphi 0, %s18
    %s21 = sphi 0, %s19
    %s33 = sphi 0, %s35
    %s36 = sphi 0, %s33
    %s37 = sphi 0, %s36
    %s53 = sphi 0, %s37
    %s59 = sphi 0, %s61
    %s62 = sphi 0, %s59
    %s63 = sphi 0, %s62
    %s79 = sphi 0, %s63
    %s85 = sphi 0, %s87
    %s88 = sphi 0, %s85
    %s89 = sphi 0, %s88
    %s105 = sphi 0, %s89
    %s113 = sphi 0, %s115
    %s116 = sphi 0, %s113
    %s117 = sphi 0, %s116
    %s133 = sphi 0, %s117
  $region4: #{conv_bimla_forward.3} parent=0 // loop_header_branch
    %12 = sbr.rel (%p10) target = $region8
  $region5: #{conv_bimla_forward.3} parent=0 // loop_body
    %s14 = ssub.s32 %s9, 1
    %s15 = ssub.s32 %s9, 2
    %s22 = sadd.s32 1, %s17
    %p23 = scmp.ge.s32.totalorder %s22, 2
    %s24 = scalar_select %p23, 0, %s22
    %s25 = sadd.s32 1, %s16
    %s26 = scalar_select %p23, %s25, %s16
    %p27 = scmp.ge.s32.totalorder %s26, 8
    %s28 = scalar_select %p27, 0, %s26
    %s29 = ssub.s32 %s16, %s28
    %s30 = ssub.s32 %s17, %s24
    %s31 = sor.u32 %s29, %s30
    %p32 = scmp.eq.s32.totalorder %s31, 0
    %s34 = sadd.s32 %s33, 1
    %s35 = scalar_select %p32, %s33, %s34
    %p38 = pneg %p32
    %p39 = scmp.eq.s32.totalorder %s9, 15
    %p40 = por %p38, %p39
    %p41 = scmp.ne.s32.totalorder %s33, %s36
    %p42 = scmp.eq.s32.totalorder %s9, 0
    %p43 = por %p41, %p42
    %p44 = scmp.ne.s32.totalorder %s33, %s36
    %p45 = scmp.eq.s32.totalorder %s14, 15
    %p46 = por %p44, %p45
    %p47 = scmp.ne.s32.totalorder %s36, %s37
    %p48 = scmp.eq.s32.totalorder %s14, 0
    %p49 = por %p47, %p48
    %p50 = scmp.ne.s32.totalorder %s36, %s37
    %p51 = scmp.eq.s32.totalorder %s15, 15
    %p52 = por %p50, %p51
    %p54 = scmp.ne.s32.totalorder %s37, %s53
    %p55 = scmp.eq.s32.totalorder %s15, 0
    %p56 = por %p54, %p55
    %s57 = ssub.s32 %s16, %s28
    %p58 = scmp.eq.s32.totalorder %s57, 0
    %s60 = sadd.s32 %s59, 1
    %s61 = scalar_select %p58, %s59, %s60
    %p64 = pneg %p58
    %p65 = scmp.eq.s32.totalorder %s9, 15
    %p66 = por %p64, %p65
    %p67 = scmp.ne.s32.totalorder %s59, %s62
    %p68 = scmp.eq.s32.totalorder %s9, 0
    %p69 = por %p67, %p68
    %p70 = scmp.ne.s32.totalorder %s59, %s62
    %p71 = scmp.eq.s32.totalorder %s14, 15
    %p72 = por %p70, %p71
    %p73 = scmp.ne.s32.totalorder %s62, %s63
    %p74 = scmp.eq.s32.totalorder %s14, 0
    %p75 = por %p73, %p74
    %p76 = scmp.ne.s32.totalorder %s62, %s63
    %p77 = scmp.eq.s32.totalorder %s15, 15
    %p78 = por %p76, %p77
    %p80 = scmp.ne.s32.totalorder %s63, %s79
    %p81 = scmp.eq.s32.totalorder %s15, 0
    %p82 = por %p80, %p81
    %s83 = ssub.s32 %s16, %s28
    %p84 = scmp.eq.s32.totalorder %s83, 0
    %s86 = sadd.s32 %s85, 1
    %s87 = scalar_select %p84, %s85, %s86
    %p90 = pneg %p84
    %p91 = scmp.eq.s32.totalorder %s9, 15
    %p92 = por %p90, %p91
    %p93 = scmp.ne.s32.totalorder %s85, %s88
    %p94 = scmp.eq.s32.totalorder %s9, 0
    %p95 = por %p93, %p94
    %p96 = scmp.ne.s32.totalorder %s85, %s88
    %p97 = scmp.eq.s32.totalorder %s14, 15
    %p98 = por %p96, %p97
    %p99 = scmp.ne.s32.totalorder %s88, %s89
    %p100 = scmp.eq.s32.totalorder %s14, 0
    %p101 = por %p99, %p100
    %p102 = scmp.ne.s32.totalorder %s88, %s89
    %p103 = scmp.eq.s32.totalorder %s15, 15
    %p104 = por %p102, %p103
    %p106 = scmp.ne.s32.totalorder %s89, %s105
    %p107 = scmp.eq.s32.totalorder %s15, 0
    %p108 = por %p106, %p107
    %s109 = ssub.s32 %s16, %s28
    %s110 = ssub.s32 %s17, %s24
    %s111 = sor.u32 %s109, %s110
    %p112 = scmp.eq.s32.totalorder %s111, 0
    %s114 = sadd.s32 %s113, 1
    %s115 = scalar_select %p112, %s113, %s114
    %p118 = pneg %p112
    %p119 = scmp.eq.s32.totalorder %s9, 15
    %p120 = por %p118, %p119
    %p121 = scmp.ne.s32.totalorder %s113, %s116
    %p122 = scmp.eq.s32.totalorder %s9, 0
    %p123 = por %p121, %p122
    %p124 = scmp.ne.s32.totalorder %s113, %s116
    %p125 = scmp.eq.s32.totalorder %s14, 15
    %p126 = por %p124, %p125
    %p127 = scmp.ne.s32.totalorder %s116, %s117
    %p128 = scmp.eq.s32.totalorder %s14, 0
    %p129 = por %p127, %p128
    %p130 = scmp.ne.s32.totalorder %s116, %s117
    %p131 = scmp.eq.s32.totalorder %s15, 15
    %p132 = por %p130, %p131
    %p134 = scmp.ne.s32.totalorder %s117, %s133
    %p135 = scmp.eq.s32.totalorder %s15, 0
    %p136 = por %p134, %p135
    %p137 = scmp.le.s32.totalorder 1, %s9
    %p138 = scmp.lt.s32.totalorder %s9, 17
    %p139 = pnand %p137, %p138
    %p140 = pneg %p139
    // Predicated region
    $region9: #{conv_bimla_forward.3} parent=5 // pred_check
      _
    $region10: #{conv_bimla_forward.3} parent=5 // pred_check_branch
      %142 = sbr.rel (%p139) target = $region12
    $region11: #{conv_bimla_forward.3} parent=5 // pred_region
      %s143 = ssub.s32 %s9, 1
    $region12: #{conv_bimla_forward.3} parent=5 // pred_fallthru
      _
    %p144 = scmp.lt.s32.totalorder %s9, 16
    // Predicated region
    $region13: #{conv_bimla_forward.3} parent=5 // pred_check
      %p145 = pneg %p144
    $region14: #{conv_bimla_forward.3} parent=5 // pred_check_branch
      %147 = sbr.rel (%p145) target = $region16
    $region15: #{conv_bimla_forward.3} parent=5 // pred_region
      // Predicated region
      $region17: #{conv_bimla_forward.3} parent=15 // pred_check
        %p148 = pneg %p43
      $region18: #{conv_bimla_forward.3} parent=15 // pred_check_branch
        %150 = sbr.rel (%p148) target = $region20
      $region19: #{conv_bimla_forward.3} parent=15 // pred_region
        %p151 = scmp.lt.s32.totalorder %s16, 7
        %s152 = scalar_select %p151, %s16, 7
        %p153 = scmp.lt.s32.totalorder %s17, 1
        %s154 = scalar_select %p153, %s17, 1
        %s155 = smul.addr %s154, 8
        %s156 = smul.addr %s152, 16
        %s157 = sadd.s32 %s155, %s156
        %s158 = smul.addr %s157, 4
        %s159 = scalar_lea.vmem %s0, %s158
      $region20: #{conv_bimla_forward.3} parent=15 // pred_fallthru
        _
      // Predicated region
      $region21: #{conv_bimla_forward.3} parent=15 // pred_check
        %p160 = pneg %p69
      $region22: #{conv_bimla_forward.3} parent=15 // pred_check_branch
        %162 = sbr.rel (%p160) target = $region24
      $region23: #{conv_bimla_forward.3} parent=15 // pred_region
        %p163 = scmp.lt.s32.totalorder %s16, 7
        %s164 = scalar_select %p163, %s16, 7
        %s165 = smul.addr %s164, 144
        %s166 = smul.addr %s165, 4
        %s167 = scalar_lea.vmem %s1, %s166
      $region24: #{conv_bimla_forward.3} parent=15 // pred_fallthru
        _
      // Predicated region
      $region25: #{conv_bimla_forward.3} parent=15 // pred_check
        %p168 = pneg %p95
      $region26: #{conv_bimla_forward.3} parent=15 // pred_check_branch
        %170 = sbr.rel (%p168) target = $region28
      $region27: #{conv_bimla_forward.3} parent=15 // pred_region
        %p171 = scmp.lt.s32.totalorder %s16, 7
        %s172 = scalar_select %p171, %s16, 7
        %s173 = scalar_lea.vmem %s2, %s172
      $region28: #{conv_bimla_forward.3} parent=15 // pred_fallthru
        _
    $region16: #{conv_bimla_forward.3} parent=5 // pred_fallthru
      _
    %p174 = scmp.le.s32.totalorder 1, %s9
    %p175 = scmp.lt.s32.totalorder %s9, 17
    %p176 = pnand %p174, %p175
    %p177 = pneg %p176
    // Predicated region
    $region29: #{conv_bimla_forward.3} parent=5 // pred_check
      _
    $region30: #{conv_bimla_forward.3} parent=5 // pred_check_branch
      %179 = sbr.rel (%p176) target = $region32
    $region31: #{conv_bimla_forward.3} parent=5 // pred_region
      %s180 = ssub.s32 %s9, 1
      %p181 = scmp.lt.s32.totalorder %s18, 7
      %s182 = scalar_select %p181, %s18, 7
      %p183 = scmp.lt.s32.totalorder %s19, 1
      %s184 = scalar_select %p183, %s19, 1
      %s185 = smul.addr %s184, 8
      %s186 = smul.addr %s182, 16
      %s187 = sadd.s32 %s185, %s186
      %s188 = smul.addr %s187, 4
      %s189 = scalar_lea.vmem %s0, %s188
      %p190 = pneg %p49
      %p191 = pneg %p46
      %p192 = scmp.lt.s32.totalorder %s18, 7
      %s193 = scalar_select %p192, %s18, 7
      %s194 = smul.addr %s193, 144
      %s195 = smul.addr %s194, 4
      %s196 = scalar_lea.vmem %s1, %s195
      %p197 = pneg %p75
      %p198 = pneg %p72
      %p199 = scmp.lt.s32.totalorder %s18, 7
      %s200 = scalar_select %p199, %s18, 7
      %s201 = scalar_lea.vmem %s2, %s200
      %p202 = pneg %p101
      %p203 = pneg %p98
      %p204 = pneg %p129
      %p205 = pneg %p126
      %p206 = scmp.lt.s32.totalorder %s18, 7
      %s207 = scalar_select %p206, %s18, 7
      %p208 = scmp.lt.s32.totalorder %s19, 1
      %s209 = scalar_select %p208, %s19, 1
      %s210 = smul.addr %s209, 8
      %s211 = smul.addr %s207, 16
      %s212 = sadd.s32 %s210, %s211
      %s213 = smul.addr %s212, 4
      %s214 = scalar_lea.vmem %s3, %s213
      %p215 = scmp.lt.s32.totalorder %s18, 7
      %s216 = scalar_select %p215, %s18, 7
      %p217 = scmp.lt.s32.totalorder %s19, 1
      %s218 = scalar_select %p217, %s19, 1
      %s219 = smul.addr %s218, 8
      %s220 = smul.addr %s216, 16
      %s221 = sadd.s32 %s219, %s220
      %s222 = smul.addr %s221, 4
      %s223 = scalar_lea.vmem %s0, %s222
      %p224 = scmp.lt.s32.totalorder %s18, 7
      %s225 = scalar_select %p224, %s18, 7
      %s226 = smul.addr %s225, 144
      %s227 = smul.addr %s226, 4
      %s228 = scalar_lea.vmem %s1, %s227
      %p229 = scmp.lt.s32.totalorder %s18, 7
      %s230 = scalar_select %p229, %s18, 7
      %s231 = scalar_lea.vmem %s2, %s230
      %p232 = scmp.lt.s32.totalorder %s18, 7
      %s233 = scalar_select %p232, %s18, 7
      %p234 = scmp.lt.s32.totalorder %s19, 1
      %s235 = scalar_select %p234, %s19, 1
      %s236 = smul.addr %s235, 8
      %s237 = smul.addr %s233, 16
      %s238 = sadd.s32 %s236, %s237
      %s239 = smul.addr %s238, 4
      %s240 = scalar_lea.vmem %s3, %s239
      %v242 = vld [vmem:[%s223] sm:$0xf]
      %v243 = vld [vmem:[%s223 + $0x4] sm:$0xf]
      %v244 = vld [vmem:[%s223 + $0x8] sm:$0xf]
      %v245 = vld [vmem:[%s223 + $0xc] sm:$0xf]
      %v246 = vld [vmem:[%s223 + $0x10] sm:$0xf]
      %v247 = vld [vmem:[%s223 + $0x14] sm:$0xf]
      %v248 = vld [vmem:[%s223 + $0x18] sm:$0xf]
      %v249 = vld [vmem:[%s223 + $0x1c] sm:$0xf]
      %v250 = vunpack.c.l.bf16 %v242
      %v251 = vunpack.c.l.bf16 %v243
      %v252 = vunpack.c.l.bf16 %v244
      %v253 = vunpack.c.l.bf16 %v245
      %v254 = vunpack.c.l.bf16 %v246
      %v255 = vunpack.c.l.bf16 %v247
      %v256 = vunpack.c.l.bf16 %v248
      %v257 = vunpack.c.l.bf16 %v249
      %v258 = vlaneseq
      %v259 = vshrl.u32 %v258, 7
      %v260 = vld [vmem:[%s228] sm:$0xf]
      %v261 = vld [vmem:[%s228 + $0x4] sm:$0xf]
      %v262 = vld [vmem:[%s228 + $0x8] sm:$0xf]
      %v263 = vld [vmem:[%s228 + $0xc] sm:$0xf]
      %v264 = vld [vmem:[%s228 + $0x10] sm:$0xf]
      %v265 = vld [vmem:[%s228 + $0x14] sm:$0xf]
      %v266 = vld [vmem:[%s228 + $0x18] sm:$0xf]
      %v267 = vld [vmem:[%s228 + $0x1c] sm:$0xf]
      %v268 = vld [vmem:[%s228 + $0x20] sm:$0xf]
      %v269 = vld [vmem:[%s228 + $0x24] sm:$0xf]
      %v270 = vld [vmem:[%s228 + $0x28] sm:$0xf]
      %v271 = vld [vmem:[%s228 + $0x2c] sm:$0xf]
      %v272 = vld [vmem:[%s228 + $0x30] sm:$0xf]
      %v273 = vld [vmem:[%s228 + $0x34] sm:$0xf]
      %v274 = vld [vmem:[%s228 + $0x38] sm:$0xf]
      %v275 = vld [vmem:[%s228 + $0x3c] sm:$0xf]
      %v276 = vld [vmem:[%s228 + $0x40] sm:$0xf]
      %v277 = vld [vmem:[%s228 + $0x44] sm:$0xf]
      %v278 = vld [vmem:[%s228 + $0x48] sm:$0xf]
      %v279 = vld [vmem:[%s228 + $0x4c] sm:$0xf]
      %v280 = vld [vmem:[%s228 + $0x50] sm:$0xf]
      %v281 = vld [vmem:[%s228 + $0x54] sm:$0xf]
      %v282 = vld [vmem:[%s228 + $0x58] sm:$0xf]
      %v283 = vld [vmem:[%s228 + $0x5c] sm:$0xf]
      %v284 = vld [vmem:[%s228 + $0x60] sm:$0xf]
      %v285 = vld [vmem:[%s228 + $0x64] sm:$0xf]
      %v286 = vld [vmem:[%s228 + $0x68] sm:$0xf]
      %v287 = vld [vmem:[%s228 + $0x6c] sm:$0xf]
      %v288 = vld [vmem:[%s228 + $0x70] sm:$0xf]
      %v289 = vld [vmem:[%s228 + $0x74] sm:$0xf]
      %v290 = vld [vmem:[%s228 + $0x78] sm:$0xf]
      %v291 = vld [vmem:[%s228 + $0x7c] sm:$0xf]
      %v292 = vld [vmem:[%s228 + $0x80] sm:$0xf]
      %v293 = vld [vmem:[%s228 + $0x84] sm:$0xf]
      %v294 = vld [vmem:[%s228 + $0x88] sm:$0xf]
      %v295 = vld [vmem:[%s228 + $0x8c] sm:$0xf]
      %v296 = vld [vmem:[%s228 + $0x90] sm:$0xf]
      %v297 = vld [vmem:[%s228 + $0x94] sm:$0xf]
      %v298 = vld [vmem:[%s228 + $0x98] sm:$0xf]
      %v299 = vld [vmem:[%s228 + $0x9c] sm:$0xf]
      %v300 = vld [vmem:[%s228 + $0xa0] sm:$0xf]
      %v301 = vld [vmem:[%s228 + $0xa4] sm:$0xf]
      %v302 = vld [vmem:[%s228 + $0xa8] sm:$0xf]
      %v303 = vld [vmem:[%s228 + $0xac] sm:$0xf]
      %v304 = vld [vmem:[%s228 + $0xb0] sm:$0xf]
      %v305 = vld [vmem:[%s228 + $0xb4] sm:$0xf]
      %v306 = vld [vmem:[%s228 + $0xb8] sm:$0xf]
      %v307 = vld [vmem:[%s228 + $0xbc] sm:$0xf]
      %v308 = vld [vmem:[%s228 + $0xc0] sm:$0xf]
      %v309 = vld [vmem:[%s228 + $0xc4] sm:$0xf]
      %v310 = vld [vmem:[%s228 + $0xc8] sm:$0xf]
      %v311 = vld [vmem:[%s228 + $0xcc] sm:$0xf]
      %v312 = vld [vmem:[%s228 + $0xd0] sm:$0xf]
      %v313 = vld [vmem:[%s228 + $0xd4] sm:$0xf]
      %v314 = vld [vmem:[%s228 + $0xd8] sm:$0xf]
      %v315 = vld [vmem:[%s228 + $0xdc] sm:$0xf]
      %v316 = vld [vmem:[%s228 + $0xe0] sm:$0xf]
      %v317 = vld [vmem:[%s228 + $0xe4] sm:$0xf]
      %v318 = vld [vmem:[%s228 + $0xe8] sm:$0xf]
      %v319 = vld [vmem:[%s228 + $0xec] sm:$0xf]
      %v320 = vld [vmem:[%s228 + $0xf0] sm:$0xf]
      %v321 = vld [vmem:[%s228 + $0xf4] sm:$0xf]
      %v322 = vld [vmem:[%s228 + $0xf8] sm:$0xf]
      %v323 = vld [vmem:[%s228 + $0xfc] sm:$0xf]
      %v324 = vld [vmem:[%s228 + $0x100] sm:$0xf]
      %v325 = vld [vmem:[%s228 + $0x104] sm:$0xf]
      %v326 = vld [vmem:[%s228 + $0x108] sm:$0xf]
      %v327 = vld [vmem:[%s228 + $0x10c] sm:$0xf]
      %v328 = vld [vmem:[%s228 + $0x110] sm:$0xf]
      %v329 = vld [vmem:[%s228 + $0x114] sm:$0xf]
      %v330 = vld [vmem:[%s228 + $0x118] sm:$0xf]
      %v331 = vld [vmem:[%s228 + $0x11c] sm:$0xf]
      %v332 = vld [vmem:[%s228 + $0x120] sm:$0xf]
      %v333 = vld [vmem:[%s228 + $0x124] sm:$0xf]
      %v334 = vld [vmem:[%s228 + $0x128] sm:$0xf]
      %v335 = vld [vmem:[%s228 + $0x12c] sm:$0xf]
      %v336 = vld [vmem:[%s228 + $0x130] sm:$0xf]
      %v337 = vld [vmem:[%s228 + $0x134] sm:$0xf]
      %v338 = vld [vmem:[%s228 + $0x138] sm:$0xf]
      %v339 = vld [vmem:[%s228 + $0x13c] sm:$0xf]
      %v340 = vld [vmem:[%s228 + $0x140] sm:$0xf]
      %v341 = vld [vmem:[%s228 + $0x144] sm:$0xf]
      %v342 = vld [vmem:[%s228 + $0x148] sm:$0xf]
      %v343 = vld [vmem:[%s228 + $0x14c] sm:$0xf]
      %v344 = vld [vmem:[%s228 + $0x150] sm:$0xf]
      %v345 = vld [vmem:[%s228 + $0x154] sm:$0xf]
      %v346 = vld [vmem:[%s228 + $0x158] sm:$0xf]
      %v347 = vld [vmem:[%s228 + $0x15c] sm:$0xf]
      %v348 = vld [vmem:[%s228 + $0x160] sm:$0xf]
      %v349 = vld [vmem:[%s228 + $0x164] sm:$0xf]
      %v350 = vld [vmem:[%s228 + $0x168] sm:$0xf]
      %v351 = vld [vmem:[%s228 + $0x16c] sm:$0xf]
      %v352 = vld [vmem:[%s228 + $0x170] sm:$0xf]
      %v353 = vld [vmem:[%s228 + $0x174] sm:$0xf]
      %v354 = vld [vmem:[%s228 + $0x178] sm:$0xf]
      %v355 = vld [vmem:[%s228 + $0x17c] sm:$0xf]
      %v356 = vld [vmem:[%s228 + $0x180] sm:$0xf]
      %v357 = vld [vmem:[%s228 + $0x184] sm:$0xf]
      %v358 = vld [vmem:[%s228 + $0x188] sm:$0xf]
      %v359 = vld [vmem:[%s228 + $0x18c] sm:$0xf]
      %v360 = vld [vmem:[%s228 + $0x190] sm:$0xf]
      %v361 = vld [vmem:[%s228 + $0x194] sm:$0xf]
      %v362 = vld [vmem:[%s228 + $0x198] sm:$0xf]
      %v363 = vld [vmem:[%s228 + $0x19c] sm:$0xf]
      %v364 = vld [vmem:[%s228 + $0x1a0] sm:$0xf]
      %v365 = vld [vmem:[%s228 + $0x1a4] sm:$0xf]
      %v366 = vld [vmem:[%s228 + $0x1a8] sm:$0xf]
      %v367 = vld [vmem:[%s228 + $0x1ac] sm:$0xf]
      %v368 = vld [vmem:[%s228 + $0x1b0] sm:$0xf]
      %v369 = vld [vmem:[%s228 + $0x1b4] sm:$0xf]
      %v370 = vld [vmem:[%s228 + $0x1b8] sm:$0xf]
      %v371 = vld [vmem:[%s228 + $0x1bc] sm:$0xf]
      %v372 = vld [vmem:[%s228 + $0x1c0] sm:$0xf]
      %v373 = vld [vmem:[%s228 + $0x1c4] sm:$0xf]
      %v374 = vld [vmem:[%s228 + $0x1c8] sm:$0xf]
      %v375 = vld [vmem:[%s228 + $0x1cc] sm:$0xf]
      %v376 = vld [vmem:[%s228 + $0x1d0] sm:$0xf]
      %v377 = vld [vmem:[%s228 + $0x1d4] sm:$0xf]
      %v378 = vld [vmem:[%s228 + $0x1d8] sm:$0xf]
      %v379 = vld [vmem:[%s228 + $0x1dc] sm:$0xf]
      %v380 = vld [vmem:[%s228 + $0x1e0] sm:$0xf]
      %v381 = vld [vmem:[%s228 + $0x1e4] sm:$0xf]
      %v382 = vld [vmem:[%s228 + $0x1e8] sm:$0xf]
      %v383 = vld [vmem:[%s228 + $0x1ec] sm:$0xf]
      %v384 = vld [vmem:[%s228 + $0x1f0] sm:$0xf]
      %v385 = vld [vmem:[%s228 + $0x1f4] sm:$0xf]
      %v386 = vld [vmem:[%s228 + $0x1f8] sm:$0xf]
      %v387 = vld [vmem:[%s228 + $0x1fc] sm:$0xf]
      %v388 = vld [vmem:[%s228 + $0x200] sm:$0xf]
      %v389 = vld [vmem:[%s228 + $0x204] sm:$0xf]
      %v390 = vld [vmem:[%s228 + $0x208] sm:$0xf]
      %v391 = vld [vmem:[%s228 + $0x20c] sm:$0xf]
      %v392 = vld [vmem:[%s228 + $0x210] sm:$0xf]
      %v393 = vld [vmem:[%s228 + $0x214] sm:$0xf]
      %v394 = vld [vmem:[%s228 + $0x218] sm:$0xf]
      %v395 = vld [vmem:[%s228 + $0x21c] sm:$0xf]
      %v396 = vld [vmem:[%s228 + $0x220] sm:$0xf]
      %v397 = vld [vmem:[%s228 + $0x224] sm:$0xf]
      %v398 = vld [vmem:[%s228 + $0x228] sm:$0xf]
      %v399 = vld [vmem:[%s228 + $0x22c] sm:$0xf]
      %v400 = vld [vmem:[%s228 + $0x230] sm:$0xf]
      %v401 = vld [vmem:[%s228 + $0x234] sm:$0xf]
      %v402 = vld [vmem:[%s228 + $0x238] sm:$0xf]
      %v403 = vld [vmem:[%s228 + $0x23c] sm:$0xf]
      %v405 = vrot.slane 0.0, 7
      %vm415 = vcmask 1040384
      %v416 = vrot.slane %v250, 7
      %v417 = vsel %vm415, %v405, %v416
      %v418 = vrot.slane %v251, 7
      %v419 = vsel %vm415, %v416, %v418
      %v420 = vrot.slane %v252, 7
      %v421 = vsel %vm415, %v418, %v420
      %v422 = vrot.slane %v253, 7
      %v423 = vsel %vm415, %v420, %v422
      %v424 = vrot.slane %v254, 7
      %v425 = vsel %vm415, %v422, %v424
      %v426 = vrot.slane %v255, 7
      %v427 = vsel %vm415, %v424, %v426
      %v428 = vrot.slane %v256, 7
      %v429 = vsel %vm415, %v426, %v428
      %v430 = vrot.slane %v257, 7
      %v431 = vsel %vm415, %v428, %v430
      %v432 = vsel %vm415, %v430, %v405
      %v442 = vsel %vm415, %v405, %v405
      %vm443 = vcmp.eq.s32.totalorder %v259, 0
      %v444 = vsel %vm443, 0.0, %v442
      %v445 = vsel %vm443, 0.0, %v417
      %v446 = vsel %vm443, 0.0, %v419
      %v447 = vsel %vm443, 0.0, %v421
      %v448 = vsel %vm443, 0.0, %v423
      %v449 = vsel %vm443, 0.0, %v425
      %v450 = vsel %vm443, 0.0, %v427
      %v451 = vsel %vm443, 0.0, %v429
      %v452 = vsel %vm443, 0.0, %v431
      %v453 = vsel %vm443, 0.0, %v432
      %v454 = vpack.c.bf16 %v445, %v444
      %v455 = vpack.c.bf16 %v447, %v446
      %v456 = vpack.c.bf16 %v449, %v448
      %v457 = vpack.c.bf16 %v451, %v450
      %v458 = vpack.c.bf16 %v453, %v452
      %v464 = vunpack.c.l.b16 %v454
      %v465 = vunpack.c.h.b16 %v454
      %v466 = vunpack.c.l.b16 %v455
      %v467 = vunpack.c.h.b16 %v455
      %v468 = vunpack.c.l.b16 %v456
      %v469 = vunpack.c.h.b16 %v456
      %v470 = vunpack.c.l.b16 %v457
      %v471 = vunpack.c.h.b16 %v457
      %v472 = vunpack.c.l.b16 %v458
      %v473 = vunpack.c.h.b16 %v458
      %v474 = vpack.c.b16 %v466, %v465
      %v475 = vpack.c.b16 %v468, %v467
      %v476 = vpack.c.b16 %v470, %v469
      %v477 = vpack.c.b16 %v472, %v471
      %v498 = vunpack.c.l.b16 %v308
      %v499 = vunpack.c.l.b16 %v309
      %v500 = vunpack.c.l.b16 %v310
      %v501 = vunpack.c.l.b16 %v311
      %v502 = vunpack.c.l.b16 %v312
      %v503 = vunpack.c.l.b16 %v313
      %v504 = vunpack.c.l.b16 %v314
      %v505 = vunpack.c.l.b16 %v315
      %v506 = vunpack.c.l.b16 %v316
      %v507 = vunpack.c.l.b16 %v317
      %v508 = vunpack.c.l.b16 %v318
      %v509 = vunpack.c.l.b16 %v319
      %v510 = vunpack.c.l.b16 %v320
      %v511 = vunpack.c.l.b16 %v321
      %v512 = vunpack.c.l.b16 %v322
      %v513 = vunpack.c.l.b16 %v323
      %v514 = vpack.c.b16 %v499, %v498
      %v515 = vpack.c.b16 %v501, %v500
      %v516 = vpack.c.b16 %v503, %v502
      %v517 = vpack.c.b16 %v505, %v504
      %v518 = vpack.c.b16 %v507, %v506
      %v519 = vpack.c.b16 %v509, %v508
      %v520 = vpack.c.b16 %v511, %v510
      %v521 = vpack.c.b16 %v513, %v512
      %530 = vmatprep.subr.bf16.mxu0 0
      %531 = vmatpush1.bf16.msra.mxu0 %v521
      %532 = vmatprep.subr.bf16.mxu0 0
      %533 = vmatpush1.bf16.msra.mxu0 %v520
      %534 = vmatprep.subr.bf16.mxu0 0
      %535 = vmatpush1.bf16.msra.mxu0 %v519
      %536 = vmatprep.subr.bf16.mxu0 0
      %537 = vmatpush1.bf16.msra.mxu0 %v518
      %538 = vmatprep.subr.bf16.mxu0 0
      %539 = vmatpush1.bf16.msra.mxu0 %v517
      %540 = vmatprep.subr.bf16.mxu0 0
      %541 = vmatpush1.bf16.msra.mxu0 %v516
      %542 = vmatprep.subr.bf16.mxu0 0
      %543 = vmatpush1.bf16.msra.mxu0 %v515
      %544 = vmatprep.subr.bf16.mxu0 0
      %545 = vmatpush1.bf16.msra.mxu0 %v514
      %546 = vmatprep.subr.bf16.mxu0 0
      %547 = vmatpush2.bf16.msra.mxu0 0
      %548 = vmatprep.subr.bf16.mxu0 0
      %549 = vmatpush2.bf16.msra.mxu0 0
      %550 = vmatprep.subr.bf16.mxu0 0
      %551 = vmatpush2.bf16.msra.mxu0 0
      %552 = vmatprep.subr.bf16.mxu0 0
      %553 = vmatpush2.bf16.msra.mxu0 0
      %554 = vmatprep.subr.bf16.mxu0 0
      %555 = vmatpush2.bf16.msra.mxu0 0
      %556 = vmatprep.subr.bf16.mxu0 0
      %557 = vmatpush2.bf16.msra.mxu0 0
      %558 = vmatprep.subr.bf16.mxu0 0
      %559 = vmatpush2.bf16.msra.mxu0 0
      %560 = vmatprep.subr.bf16.mxu0 0
      %561 = vmatpush2.bf16.msra.mxu0 0
      %562 = vmatprep.mubr.bf16.mxu0 0
      %563 = vmatmul.mubr.bf16.gmra.mxu0 %v474
      %v564 = vpop.f32.mrf.mxu0
      %v565 = vadd.f32 0.0, %v564
      %v566 = vpop.f32.mrf.mxu0
      %v567 = vpop.f32.mrf.mxu0
      %v568 = vadd.f32 0.0, %v567
      %v569 = vpop.f32.mrf.mxu0
      %570 = vmatprep.mubr.bf16.mxu0 0
      %571 = vmatmul.mubr.bf16.gmra.mxu0 %v475
      %v572 = vpop.f32.mrf.mxu0
      %v573 = vadd.f32 0.0, %v572
      %v574 = vpop.f32.mrf.mxu0
      %v575 = vpop.f32.mrf.mxu0
      %v576 = vadd.f32 0.0, %v575
      %v577 = vpop.f32.mrf.mxu0
      %578 = vmatprep.mubr.bf16.mxu0 0
      %579 = vmatmul.mubr.bf16.gmra.mxu0 %v476
      %v580 = vpop.f32.mrf.mxu0
      %v581 = vadd.f32 0.0, %v580
      %v582 = vpop.f32.mrf.mxu0
      %v583 = vpop.f32.mrf.mxu0
      %v584 = vadd.f32 0.0, %v583
      %v585 = vpop.f32.mrf.mxu0
      %586 = vmatprep.mubr.bf16.mxu0 0
      %587 = vmatmul.mubr.bf16.gmra.mxu0 %v477
      %v588 = vpop.f32.mrf.mxu0
      %v589 = vadd.f32 0.0, %v588
      %v590 = vpop.f32.mrf.mxu0
      %v591 = vpop.f32.mrf.mxu0
      %v592 = vadd.f32 0.0, %v591
      %v593 = vpop.f32.mrf.mxu0
      %594 = vdwg.mxu0
      %v595 = vpack.c.b16 %v465, %v464
      %v596 = vpack.c.b16 %v467, %v466
      %v597 = vpack.c.b16 %v469, %v468
      %v598 = vpack.c.b16 %v471, %v470
      %v619 = vunpack.c.l.b16 %v260
      %v620 = vunpack.c.l.b16 %v261
      %v621 = vunpack.c.l.b16 %v262
      %v622 = vunpack.c.l.b16 %v263
      %v623 = vunpack.c.l.b16 %v264
      %v624 = vunpack.c.l.b16 %v265
      %v625 = vunpack.c.l.b16 %v266
      %v626 = vunpack.c.l.b16 %v267
      %v627 = vunpack.c.l.b16 %v268
      %v628 = vunpack.c.l.b16 %v269
      %v629 = vunpack.c.l.b16 %v270
      %v630 = vunpack.c.l.b16 %v271
      %v631 = vunpack.c.l.b16 %v272
      %v632 = vunpack.c.l.b16 %v273
      %v633 = vunpack.c.l.b16 %v274
      %v634 = vunpack.c.l.b16 %v275
      %v635 = vpack.c.b16 %v620, %v619
      %v636 = vpack.c.b16 %v622, %v621
      %v637 = vpack.c.b16 %v624, %v623
      %v638 = vpack.c.b16 %v626, %v625
      %v639 = vpack.c.b16 %v628, %v627
      %v640 = vpack.c.b16 %v630, %v629
      %v641 = vpack.c.b16 %v632, %v631
      %v642 = vpack.c.b16 %v634, %v633
      %651 = vmatprep.subr.bf16.mxu0 0
      %652 = vmatpush1.bf16.msra.mxu0 %v642
      %653 = vmatprep.subr.bf16.mxu0 0
      %654 = vmatpush1.bf16.msra.mxu0 %v641
      %655 = vmatprep.subr.bf16.mxu0 0
      %656 = vmatpush1.bf16.msra.mxu0 %v640
      %657 = vmatprep.subr.bf16.mxu0 0
      %658 = vmatpush1.bf16.msra.mxu0 %v639
      %659 = vmatprep.subr.bf16.mxu0 0
      %660 = vmatpush1.bf16.msra.mxu0 %v638
      %661 = vmatprep.subr.bf16.mxu0 0
      %662 = vmatpush1.bf16.msra.mxu0 %v637
      %663 = vmatprep.subr.bf16.mxu0 0
      %664 = vmatpush1.bf16.msra.mxu0 %v636
      %665 = vmatprep.subr.bf16.mxu0 0
      %666 = vmatpush1.bf16.msra.mxu0 %v635
      %667 = vmatprep.subr.bf16.mxu0 0
      %668 = vmatpush2.bf16.msra.mxu0 0
      %669 = vmatprep.subr.bf16.mxu0 0
      %670 = vmatpush2.bf16.msra.mxu0 0
      %671 = vmatprep.subr.bf16.mxu0 0
      %672 = vmatpush2.bf16.msra.mxu0 0
      %673 = vmatprep.subr.bf16.mxu0 0
      %674 = vmatpush2.bf16.msra.mxu0 0
      %675 = vmatprep.subr.bf16.mxu0 0
      %676 = vmatpush2.bf16.msra.mxu0 0
      %677 = vmatprep.subr.bf16.mxu0 0
      %678 = vmatpush2.bf16.msra.mxu0 0
      %679 = vmatprep.subr.bf16.mxu0 0
      %680 = vmatpush2.bf16.msra.mxu0 0
      %681 = vmatprep.subr.bf16.mxu0 0
      %682 = vmatpush2.bf16.msra.mxu0 0
      %683 = vmatprep.mubr.bf16.mxu0 0
      %684 = vmatmul.mubr.bf16.gmra.mxu0 %v595
      %v685 = vpop.f32.mrf.mxu0
      %v686 = vadd.f32 %v565, %v685
      %v687 = vpop.f32.mrf.mxu0
      %v688 = vpop.f32.mrf.mxu0
      %v689 = vadd.f32 %v568, %v688
      %v690 = vpop.f32.mrf.mxu0
      %691 = vmatprep.mubr.bf16.mxu0 0
      %692 = vmatmul.mubr.bf16.gmra.mxu0 %v596
      %v693 = vpop.f32.mrf.mxu0
      %v694 = vadd.f32 %v573, %v693
      %v695 = vpop.f32.mrf.mxu0
      %v696 = vpop.f32.mrf.mxu0
      %v697 = vadd.f32 %v576, %v696
      %v698 = vpop.f32.mrf.mxu0
      %699 = vmatprep.mubr.bf16.mxu0 0
      %700 = vmatmul.mubr.bf16.gmra.mxu0 %v597
      %v701 = vpop.f32.mrf.mxu0
      %v702 = vadd.f32 %v581, %v701
      %v703 = vpop.f32.mrf.mxu0
      %v704 = vpop.f32.mrf.mxu0
      %v705 = vadd.f32 %v584, %v704
      %v706 = vpop.f32.mrf.mxu0
      %707 = vmatprep.mubr.bf16.mxu0 0
      %708 = vmatmul.mubr.bf16.gmra.mxu0 %v598
      %v709 = vpop.f32.mrf.mxu0
      %v710 = vadd.f32 %v589, %v709
      %v711 = vpop.f32.mrf.mxu0
      %v712 = vpop.f32.mrf.mxu0
      %v713 = vadd.f32 %v592, %v712
      %v714 = vpop.f32.mrf.mxu0
      %715 = vdwg.mxu0
      %v716 = vpack.c.b16 %v473, %v472
      %v734 = vunpack.c.l.b16 %v356
      %v735 = vunpack.c.l.b16 %v357
      %v736 = vunpack.c.l.b16 %v358
      %v737 = vunpack.c.l.b16 %v359
      %v738 = vunpack.c.l.b16 %v360
      %v739 = vunpack.c.l.b16 %v361
      %v740 = vunpack.c.l.b16 %v362
      %v741 = vunpack.c.l.b16 %v363
      %v742 = vunpack.c.l.b16 %v364
      %v743 = vunpack.c.l.b16 %v365
      %v744 = vunpack.c.l.b16 %v366
      %v745 = vunpack.c.l.b16 %v367
      %v746 = vunpack.c.l.b16 %v368
      %v747 = vunpack.c.l.b16 %v369
      %v748 = vunpack.c.l.b16 %v370
      %v749 = vunpack.c.l.b16 %v371
      %v750 = vpack.c.b16 %v735, %v734
      %v751 = vpack.c.b16 %v737, %v736
      %v752 = vpack.c.b16 %v739, %v738
      %v753 = vpack.c.b16 %v741, %v740
      %v754 = vpack.c.b16 %v743, %v742
      %v755 = vpack.c.b16 %v745, %v744
      %v756 = vpack.c.b16 %v747, %v746
      %v757 = vpack.c.b16 %v749, %v748
      %766 = vmatprep.subr.bf16.mxu0 0
      %767 = vmatpush1.bf16.msra.mxu0 %v757
      %768 = vmatprep.subr.bf16.mxu0 0
      %769 = vmatpush1.bf16.msra.mxu0 %v756
      %770 = vmatprep.subr.bf16.mxu0 0
      %771 = vmatpush1.bf16.msra.mxu0 %v755
      %772 = vmatprep.subr.bf16.mxu0 0
      %773 = vmatpush1.bf16.msra.mxu0 %v754
      %774 = vmatprep.subr.bf16.mxu0 0
      %775 = vmatpush1.bf16.msra.mxu0 %v753
      %776 = vmatprep.subr.bf16.mxu0 0
      %777 = vmatpush1.bf16.msra.mxu0 %v752
      %778 = vmatprep.subr.bf16.mxu0 0
      %779 = vmatpush1.bf16.msra.mxu0 %v751
      %780 = vmatprep.subr.bf16.mxu0 0
      %781 = vmatpush1.bf16.msra.mxu0 %v750
      %782 = vmatprep.subr.bf16.mxu0 0
      %783 = vmatpush2.bf16.msra.mxu0 0
      %784 = vmatprep.subr.bf16.mxu0 0
      %785 = vmatpush2.bf16.msra.mxu0 0
      %786 = vmatprep.subr.bf16.mxu0 0
      %787 = vmatpush2.bf16.msra.mxu0 0
      %788 = vmatprep.subr.bf16.mxu0 0
      %789 = vmatpush2.bf16.msra.mxu0 0
      %790 = vmatprep.subr.bf16.mxu0 0
      %791 = vmatpush2.bf16.msra.mxu0 0
      %792 = vmatprep.subr.bf16.mxu0 0
      %793 = vmatpush2.bf16.msra.mxu0 0
      %794 = vmatprep.subr.bf16.mxu0 0
      %795 = vmatpush2.bf16.msra.mxu0 0
      %796 = vmatprep.subr.bf16.mxu0 0
      %797 = vmatpush2.bf16.msra.mxu0 0
      %798 = vmatprep.mubr.bf16.mxu0 0
      %799 = vmatmul.mubr.bf16.gmra.mxu0 %v596
      %v800 = vpop.f32.mrf.mxu0
      %v801 = vadd.f32 0.0, %v800
      %v802 = vpop.f32.mrf.mxu0
      %v803 = vpop.f32.mrf.mxu0
      %v804 = vadd.f32 0.0, %v803
      %v805 = vpop.f32.mrf.mxu0
      %806 = vmatprep.mubr.bf16.mxu0 0
      %807 = vmatmul.mubr.bf16.gmra.mxu0 %v597
      %v808 = vpop.f32.mrf.mxu0
      %v809 = vadd.f32 0.0, %v808
      %v810 = vpop.f32.mrf.mxu0
      %v811 = vpop.f32.mrf.mxu0
      %v812 = vadd.f32 0.0, %v811
      %v813 = vpop.f32.mrf.mxu0
      %814 = vmatprep.mubr.bf16.mxu0 0
      %815 = vmatmul.mubr.bf16.gmra.mxu0 %v598
      %v816 = vpop.f32.mrf.mxu0
      %v817 = vadd.f32 0.0, %v816
      %v818 = vpop.f32.mrf.mxu0
      %v819 = vpop.f32.mrf.mxu0
      %v820 = vadd.f32 0.0, %v819
      %v821 = vpop.f32.mrf.mxu0
      %822 = vmatprep.mubr.bf16.mxu0 0
      %823 = vmatmul.mubr.bf16.gmra.mxu0 %v716
      %v824 = vpop.f32.mrf.mxu0
      %v825 = vadd.f32 0.0, %v824
      %v826 = vpop.f32.mrf.mxu0
      %v827 = vpop.f32.mrf.mxu0
      %v828 = vadd.f32 0.0, %v827
      %v829 = vpop.f32.mrf.mxu0
      %830 = vdwg.mxu0
      %v831 = vadd.f32 %v686, %v801
      %v832 = vadd.f32 %v689, %v804
      %v833 = vadd.f32 %v694, %v809
      %v834 = vadd.f32 %v697, %v812
      %v835 = vadd.f32 %v702, %v817
      %v836 = vadd.f32 %v705, %v820
      %v837 = vadd.f32 %v710, %v825
      %v838 = vadd.f32 %v713, %v828
      %v839 = vpack.c.bf16 %v250, 0.0
      %v840 = vpack.c.bf16 %v252, %v251
      %v841 = vpack.c.bf16 %v254, %v253
      %v842 = vpack.c.bf16 %v256, %v255
      %v843 = vpack.c.bf16 0.0, %v257
      %v849 = vunpack.c.l.b16 %v839
      %v850 = vunpack.c.h.b16 %v839
      %v851 = vunpack.c.l.b16 %v840
      %v852 = vunpack.c.h.b16 %v840
      %v853 = vunpack.c.l.b16 %v841
      %v854 = vunpack.c.h.b16 %v841
      %v855 = vunpack.c.l.b16 %v842
      %v856 = vunpack.c.h.b16 %v842
      %v857 = vunpack.c.l.b16 %v843
      %v858 = vunpack.c.h.b16 %v843
      %v859 = vpack.c.b16 %v850, %v849
      %v860 = vpack.c.b16 %v852, %v851
      %v861 = vpack.c.b16 %v854, %v853
      %v862 = vpack.c.b16 %v856, %v855
      %v883 = vunpack.c.l.b16 %v276
      %v884 = vunpack.c.l.b16 %v277
      %v885 = vunpack.c.l.b16 %v278
      %v886 = vunpack.c.l.b16 %v279
      %v887 = vunpack.c.l.b16 %v280
      %v888 = vunpack.c.l.b16 %v281
      %v889 = vunpack.c.l.b16 %v282
      %v890 = vunpack.c.l.b16 %v283
      %v891 = vunpack.c.l.b16 %v284
      %v892 = vunpack.c.l.b16 %v285
      %v893 = vunpack.c.l.b16 %v286
      %v894 = vunpack.c.l.b16 %v287
      %v895 = vunpack.c.l.b16 %v288
      %v896 = vunpack.c.l.b16 %v289
      %v897 = vunpack.c.l.b16 %v290
      %v898 = vunpack.c.l.b16 %v291
      %v899 = vpack.c.b16 %v884, %v883
      %v900 = vpack.c.b16 %v886, %v885
      %v901 = vpack.c.b16 %v888, %v887
      %v902 = vpack.c.b16 %v890, %v889
      %v903 = vpack.c.b16 %v892, %v891
      %v904 = vpack.c.b16 %v894, %v893
      %v905 = vpack.c.b16 %v896, %v895
      %v906 = vpack.c.b16 %v898, %v897
      %915 = vmatprep.subr.bf16.mxu0 0
      %916 = vmatpush1.bf16.msra.mxu0 %v906
      %917 = vmatprep.subr.bf16.mxu0 0
      %918 = vmatpush1.bf16.msra.mxu0 %v905
      %919 = vmatprep.subr.bf16.mxu0 0
      %920 = vmatpush1.bf16.msra.mxu0 %v904
      %921 = vmatprep.subr.bf16.mxu0 0
      %922 = vmatpush1.bf16.msra.mxu0 %v903
      %923 = vmatprep.subr.bf16.mxu0 0
      %924 = vmatpush1.bf16.msra.mxu0 %v902
      %925 = vmatprep.subr.bf16.mxu0 0
      %926 = vmatpush1.bf16.msra.mxu0 %v901
      %927 = vmatprep.subr.bf16.mxu0 0
      %928 = vmatpush1.bf16.msra.mxu0 %v900
      %929 = vmatprep.subr.bf16.mxu0 0
      %930 = vmatpush1.bf16.msra.mxu0 %v899
      %931 = vmatprep.subr.bf16.mxu0 0
      %932 = vmatpush2.bf16.msra.mxu0 0
      %933 = vmatprep.subr.bf16.mxu0 0
      %934 = vmatpush2.bf16.msra.mxu0 0
      %935 = vmatprep.subr.bf16.mxu0 0
      %936 = vmatpush2.bf16.msra.mxu0 0
      %937 = vmatprep.subr.bf16.mxu0 0
      %938 = vmatpush2.bf16.msra.mxu0 0
      %939 = vmatprep.subr.bf16.mxu0 0
      %940 = vmatpush2.bf16.msra.mxu0 0
      %941 = vmatprep.subr.bf16.mxu0 0
      %942 = vmatpush2.bf16.msra.mxu0 0
      %943 = vmatprep.subr.bf16.mxu0 0
      %944 = vmatpush2.bf16.msra.mxu0 0
      %945 = vmatprep.subr.bf16.mxu0 0
      %946 = vmatpush2.bf16.msra.mxu0 0
      %947 = vmatprep.mubr.bf16.mxu0 0
      %948 = vmatmul.mubr.bf16.gmra.mxu0 %v859
      %v949 = vpop.f32.mrf.mxu0
      %v950 = vadd.f32 0.0, %v949
      %v951 = vpop.f32.mrf.mxu0
      %v952 = vpop.f32.mrf.mxu0
      %v953 = vadd.f32 0.0, %v952
      %v954 = vpop.f32.mrf.mxu0
      %955 = vmatprep.mubr.bf16.mxu0 0
      %956 = vmatmul.mubr.bf16.gmra.mxu0 %v860
      %v957 = vpop.f32.mrf.mxu0
      %v958 = vadd.f32 0.0, %v957
      %v959 = vpop.f32.mrf.mxu0
      %v960 = vpop.f32.mrf.mxu0
      %v961 = vadd.f32 0.0, %v960
      %v962 = vpop.f32.mrf.mxu0
      %963 = vmatprep.mubr.bf16.mxu0 0
      %964 = vmatmul.mubr.bf16.gmra.mxu0 %v861
      %v965 = vpop.f32.mrf.mxu0
      %v966 = vadd.f32 0.0, %v965
      %v967 = vpop.f32.mrf.mxu0
      %v968 = vpop.f32.mrf.mxu0
      %v969 = vadd.f32 0.0, %v968
      %v970 = vpop.f32.mrf.mxu0
      %971 = vmatprep.mubr.bf16.mxu0 0
      %972 = vmatmul.mubr.bf16.gmra.mxu0 %v862
      %v973 = vpop.f32.mrf.mxu0
      %v974 = vadd.f32 0.0, %v973
      %v975 = vpop.f32.mrf.mxu0
      %v976 = vpop.f32.mrf.mxu0
      %v977 = vadd.f32 0.0, %v976
      %v978 = vpop.f32.mrf.mxu0
      %979 = vdwg.mxu0
      %v980 = vadd.f32 %v831, %v950
      %v981 = vadd.f32 %v832, %v953
      %v982 = vadd.f32 %v833, %v958
      %v983 = vadd.f32 %v834, %v961
      %v984 = vadd.f32 %v835, %v966
      %v985 = vadd.f32 %v836, %v969
      %v986 = vadd.f32 %v837, %v974
      %v987 = vadd.f32 %v838, %v977
      %v988 = vpack.c.b16 %v851, %v850
      %v989 = vpack.c.b16 %v853, %v852
      %v990 = vpack.c.b16 %v855, %v854
      %v991 = vpack.c.b16 %v857, %v856
      %v1012 = vunpack.c.l.b16 %v324
      %v1013 = vunpack.c.l.b16 %v325
      %v1014 = vunpack.c.l.b16 %v326
      %v1015 = vunpack.c.l.b16 %v327
      %v1016 = vunpack.c.l.b16 %v328
      %v1017 = vunpack.c.l.b16 %v329
      %v1018 = vunpack.c.l.b16 %v330
      %v1019 = vunpack.c.l.b16 %v331
      %v1020 = vunpack.c.l.b16 %v332
      %v1021 = vunpack.c.l.b16 %v333
      %v1022 = vunpack.c.l.b16 %v334
      %v1023 = vunpack.c.l.b16 %v335
      %v1024 = vunpack.c.l.b16 %v336
      %v1025 = vunpack.c.l.b16 %v337
      %v1026 = vunpack.c.l.b16 %v338
      %v1027 = vunpack.c.l.b16 %v339
      %v1028 = vpack.c.b16 %v1013, %v1012
      %v1029 = vpack.c.b16 %v1015, %v1014
      %v1030 = vpack.c.b16 %v1017, %v1016
      %v1031 = vpack.c.b16 %v1019, %v1018
      %v1032 = vpack.c.b16 %v1021, %v1020
      %v1033 = vpack.c.b16 %v1023, %v1022
      %v1034 = vpack.c.b16 %v1025, %v1024
      %v1035 = vpack.c.b16 %v1027, %v1026
      %1044 = vmatprep.subr.bf16.mxu0 0
      %1045 = vmatpush1.bf16.msra.mxu0 %v1035
      %1046 = vmatprep.subr.bf16.mxu0 0
      %1047 = vmatpush1.bf16.msra.mxu0 %v1034
      %1048 = vmatprep.subr.bf16.mxu0 0
      %1049 = vmatpush1.bf16.msra.mxu0 %v1033
      %1050 = vmatprep.subr.bf16.mxu0 0
      %1051 = vmatpush1.bf16.msra.mxu0 %v1032
      %1052 = vmatprep.subr.bf16.mxu0 0
      %1053 = vmatpush1.bf16.msra.mxu0 %v1031
      %1054 = vmatprep.subr.bf16.mxu0 0
      %1055 = vmatpush1.bf16.msra.mxu0 %v1030
      %1056 = vmatprep.subr.bf16.mxu0 0
      %1057 = vmatpush1.bf16.msra.mxu0 %v1029
      %1058 = vmatprep.subr.bf16.mxu0 0
      %1059 = vmatpush1.bf16.msra.mxu0 %v1028
      %1060 = vmatprep.subr.bf16.mxu0 0
      %1061 = vmatpush2.bf16.msra.mxu0 0
      %1062 = vmatprep.subr.bf16.mxu0 0
      %1063 = vmatpush2.bf16.msra.mxu0 0
      %1064 = vmatprep.subr.bf16.mxu0 0
      %1065 = vmatpush2.bf16.msra.mxu0 0
      %1066 = vmatprep.subr.bf16.mxu0 0
      %1067 = vmatpush2.bf16.msra.mxu0 0
      %1068 = vmatprep.subr.bf16.mxu0 0
      %1069 = vmatpush2.bf16.msra.mxu0 0
      %1070 = vmatprep.subr.bf16.mxu0 0
      %1071 = vmatpush2.bf16.msra.mxu0 0
      %1072 = vmatprep.subr.bf16.mxu0 0
      %1073 = vmatpush2.bf16.msra.mxu0 0
      %1074 = vmatprep.subr.bf16.mxu0 0
      %1075 = vmatpush2.bf16.msra.mxu0 0
      %1076 = vmatprep.mubr.bf16.mxu0 0
      %1077 = vmatmul.mubr.bf16.gmra.mxu0 %v988
      %v1078 = vpop.f32.mrf.mxu0
      %v1079 = vadd.f32 0.0, %v1078
      %v1080 = vpop.f32.mrf.mxu0
      %v1081 = vpop.f32.mrf.mxu0
      %v1082 = vadd.f32 0.0, %v1081
      %v1083 = vpop.f32.mrf.mxu0
      %1084 = vmatprep.mubr.bf16.mxu0 0
      %1085 = vmatmul.mubr.bf16.gmra.mxu0 %v989
      %v1086 = vpop.f32.mrf.mxu0
      %v1087 = vadd.f32 0.0, %v1086
      %v1088 = vpop.f32.mrf.mxu0
      %v1089 = vpop.f32.mrf.mxu0
      %v1090 = vadd.f32 0.0, %v1089
      %v1091 = vpop.f32.mrf.mxu0
      %1092 = vmatprep.mubr.bf16.mxu0 0
      %1093 = vmatmul.mubr.bf16.gmra.mxu0 %v990
      %v1094 = vpop.f32.mrf.mxu0
      %v1095 = vadd.f32 0.0, %v1094
      %v1096 = vpop.f32.mrf.mxu0
      %v1097 = vpop.f32.mrf.mxu0
      %v1098 = vadd.f32 0.0, %v1097
      %v1099 = vpop.f32.mrf.mxu0
      %1100 = vmatprep.mubr.bf16.mxu0 0
      %1101 = vmatmul.mubr.bf16.gmra.mxu0 %v991
      %v1102 = vpop.f32.mrf.mxu0
      %v1103 = vadd.f32 0.0, %v1102
      %v1104 = vpop.f32.mrf.mxu0
      %v1105 = vpop.f32.mrf.mxu0
      %v1106 = vadd.f32 0.0, %v1105
      %v1107 = vpop.f32.mrf.mxu0
      %1108 = vdwg.mxu0
      %v1109 = vadd.f32 %v980, %v1079
      %v1110 = vadd.f32 %v981, %v1082
      %v1111 = vadd.f32 %v982, %v1087
      %v1112 = vadd.f32 %v983, %v1090
      %v1113 = vadd.f32 %v984, %v1095
      %v1114 = vadd.f32 %v985, %v1098
      %v1115 = vadd.f32 %v986, %v1103
      %v1116 = vadd.f32 %v987, %v1106
      %v1117 = vpack.c.b16 %v858, %v857
      %v1135 = vunpack.c.l.b16 %v372
      %v1136 = vunpack.c.l.b16 %v373
      %v1137 = vunpack.c.l.b16 %v374
      %v1138 = vunpack.c.l.b16 %v375
      %v1139 = vunpack.c.l.b16 %v376
      %v1140 = vunpack.c.l.b16 %v377
      %v1141 = vunpack.c.l.b16 %v378
      %v1142 = vunpack.c.l.b16 %v379
      %v1143 = vunpack.c.l.b16 %v380
      %v1144 = vunpack.c.l.b16 %v381
      %v1145 = vunpack.c.l.b16 %v382
      %v1146 = vunpack.c.l.b16 %v383
      %v1147 = vunpack.c.l.b16 %v384
      %v1148 = vunpack.c.l.b16 %v385
      %v1149 = vunpack.c.l.b16 %v386
      %v1150 = vunpack.c.l.b16 %v387
      %v1151 = vpack.c.b16 %v1136, %v1135
      %v1152 = vpack.c.b16 %v1138, %v1137
      %v1153 = vpack.c.b16 %v1140, %v1139
      %v1154 = vpack.c.b16 %v1142, %v1141
      %v1155 = vpack.c.b16 %v1144, %v1143
      %v1156 = vpack.c.b16 %v1146, %v1145
      %v1157 = vpack.c.b16 %v1148, %v1147
      %v1158 = vpack.c.b16 %v1150, %v1149
      %1167 = vmatprep.subr.bf16.mxu0 0
      %1168 = vmatpush1.bf16.msra.mxu0 %v1158
      %1169 = vmatprep.subr.bf16.mxu0 0
      %1170 = vmatpush1.bf16.msra.mxu0 %v1157
      %1171 = vmatprep.subr.bf16.mxu0 0
      %1172 = vmatpush1.bf16.msra.mxu0 %v1156
      %1173 = vmatprep.subr.bf16.mxu0 0
      %1174 = vmatpush1.bf16.msra.mxu0 %v1155
      %1175 = vmatprep.subr.bf16.mxu0 0
      %1176 = vmatpush1.bf16.msra.mxu0 %v1154
      %1177 = vmatprep.subr.bf16.mxu0 0
      %1178 = vmatpush1.bf16.msra.mxu0 %v1153
      %1179 = vmatprep.subr.bf16.mxu0 0
      %1180 = vmatpush1.bf16.msra.mxu0 %v1152
      %1181 = vmatprep.subr.bf16.mxu0 0
      %1182 = vmatpush1.bf16.msra.mxu0 %v1151
      %1183 = vmatprep.subr.bf16.mxu0 0
      %1184 = vmatpush2.bf16.msra.mxu0 0
      %1185 = vmatprep.subr.bf16.mxu0 0
      %1186 = vmatpush2.bf16.msra.mxu0 0
      %1187 = vmatprep.subr.bf16.mxu0 0
      %1188 = vmatpush2.bf16.msra.mxu0 0
      %1189 = vmatprep.subr.bf16.mxu0 0
      %1190 = vmatpush2.bf16.msra.mxu0 0
      %1191 = vmatprep.subr.bf16.mxu0 0
      %1192 = vmatpush2.bf16.msra.mxu0 0
      %1193 = vmatprep.subr.bf16.mxu0 0
      %1194 = vmatpush2.bf16.msra.mxu0 0
      %1195 = vmatprep.subr.bf16.mxu0 0
      %1196 = vmatpush2.bf16.msra.mxu0 0
      %1197 = vmatprep.subr.bf16.mxu0 0
      %1198 = vmatpush2.bf16.msra.mxu0 0
      %1199 = vmatprep.mubr.bf16.mxu0 0
      %1200 = vmatmul.mubr.bf16.gmra.mxu0 %v860
      %v1201 = vpop.f32.mrf.mxu0
      %v1202 = vadd.f32 0.0, %v1201
      %v1203 = vpop.f32.mrf.mxu0
      %v1204 = vpop.f32.mrf.mxu0
      %v1205 = vadd.f32 0.0, %v1204
      %v1206 = vpop.f32.mrf.mxu0
      %1207 = vmatprep.mubr.bf16.mxu0 0
      %1208 = vmatmul.mubr.bf16.gmra.mxu0 %v861
      %v1209 = vpop.f32.mrf.mxu0
      %v1210 = vadd.f32 0.0, %v1209
      %v1211 = vpop.f32.mrf.mxu0
      %v1212 = vpop.f32.mrf.mxu0
      %v1213 = vadd.f32 0.0, %v1212
      %v1214 = vpop.f32.mrf.mxu0
      %1215 = vmatprep.mubr.bf16.mxu0 0
      %1216 = vmatmul.mubr.bf16.gmra.mxu0 %v862
      %v1217 = vpop.f32.mrf.mxu0
      %v1218 = vadd.f32 0.0, %v1217
      %v1219 = vpop.f32.mrf.mxu0
      %v1220 = vpop.f32.mrf.mxu0
      %v1221 = vadd.f32 0.0, %v1220
      %v1222 = vpop.f32.mrf.mxu0
      %1223 = vmatprep.mubr.bf16.mxu0 0
      %1224 = vmatmul.mubr.bf16.gmra.mxu0 %v1117
      %v1225 = vpop.f32.mrf.mxu0
      %v1226 = vadd.f32 0.0, %v1225
      %v1227 = vpop.f32.mrf.mxu0
      %v1228 = vpop.f32.mrf.mxu0
      %v1229 = vadd.f32 0.0, %v1228
      %v1230 = vpop.f32.mrf.mxu0
      %1231 = vdwg.mxu0
      %v1232 = vadd.f32 %v1109, %v1202
      %v1233 = vadd.f32 %v1110, %v1205
      %v1234 = vadd.f32 %v1111, %v1210
      %v1235 = vadd.f32 %v1112, %v1213
      %v1236 = vadd.f32 %v1113, %v1218
      %v1237 = vadd.f32 %v1114, %v1221
      %v1238 = vadd.f32 %v1115, %v1226
      %v1239 = vadd.f32 %v1116, %v1229
      %vm1240 = vcmask 1046528
      %v1241 = vrot.slane 0.0, 1
      %v1242 = vrot.slane %v250, 1
      %v1243 = vsel %vm1240, %v1241, %v1242
      %v1244 = vrot.slane %v251, 1
      %v1245 = vsel %vm1240, %v1242, %v1244
      %v1246 = vrot.slane %v252, 1
      %v1247 = vsel %vm1240, %v1244, %v1246
      %v1248 = vrot.slane %v253, 1
      %v1249 = vsel %vm1240, %v1246, %v1248
      %v1250 = vrot.slane %v254, 1
      %v1251 = vsel %vm1240, %v1248, %v1250
      %v1252 = vrot.slane %v255, 1
      %v1253 = vsel %vm1240, %v1250, %v1252
      %v1254 = vrot.slane %v256, 1
      %v1255 = vsel %vm1240, %v1252, %v1254
      %v1256 = vrot.slane %v257, 1
      %v1257 = vsel %vm1240, %v1254, %v1256
      %v1258 = vsel %vm1240, %v1256, %v1241
      %v1269 = vsel %vm1240, %v1241, %v1241
      %vm1270 = vcmp.eq.s32.totalorder %v259, 7
      %v1271 = vsel %vm1270, 0.0, %v1243
      %v1272 = vsel %vm1270, 0.0, %v1245
      %v1273 = vsel %vm1270, 0.0, %v1247
      %v1274 = vsel %vm1270, 0.0, %v1249
      %v1275 = vsel %vm1270, 0.0, %v1251
      %v1276 = vsel %vm1270, 0.0, %v1253
      %v1277 = vsel %vm1270, 0.0, %v1255
      %v1278 = vsel %vm1270, 0.0, %v1257
      %v1279 = vsel %vm1270, 0.0, %v1258
      %v1280 = vsel %vm1270, 0.0, %v1269
      %v1281 = vpack.c.bf16 %v1272, %v1271
      %v1282 = vpack.c.bf16 %v1274, %v1273
      %v1283 = vpack.c.bf16 %v1276, %v1275
      %v1284 = vpack.c.bf16 %v1278, %v1277
      %v1285 = vpack.c.bf16 %v1280, %v1279
      %v1291 = vunpack.c.l.b16 %v1281
      %v1292 = vunpack.c.h.b16 %v1281
      %v1293 = vunpack.c.l.b16 %v1282
      %v1294 = vunpack.c.h.b16 %v1282
      %v1295 = vunpack.c.l.b16 %v1283
      %v1296 = vunpack.c.h.b16 %v1283
      %v1297 = vunpack.c.l.b16 %v1284
      %v1298 = vunpack.c.h.b16 %v1284
      %v1299 = vunpack.c.l.b16 %v1285
      %v1300 = vunpack.c.h.b16 %v1285
      %v1301 = vpack.c.b16 %v1292, %v1291
      %v1302 = vpack.c.b16 %v1294, %v1293
      %v1303 = vpack.c.b16 %v1296, %v1295
      %v1304 = vpack.c.b16 %v1298, %v1297
      %v1325 = vunpack.c.l.b16 %v292
      %v1326 = vunpack.c.l.b16 %v293
      %v1327 = vunpack.c.l.b16 %v294
      %v1328 = vunpack.c.l.b16 %v295
      %v1329 = vunpack.c.l.b16 %v296
      %v1330 = vunpack.c.l.b16 %v297
      %v1331 = vunpack.c.l.b16 %v298
      %v1332 = vunpack.c.l.b16 %v299
      %v1333 = vunpack.c.l.b16 %v300
      %v1334 = vunpack.c.l.b16 %v301
      %v1335 = vunpack.c.l.b16 %v302
      %v1336 = vunpack.c.l.b16 %v303
      %v1337 = vunpack.c.l.b16 %v304
      %v1338 = vunpack.c.l.b16 %v305
      %v1339 = vunpack.c.l.b16 %v306
      %v1340 = vunpack.c.l.b16 %v307
      %v1341 = vpack.c.b16 %v1326, %v1325
      %v1342 = vpack.c.b16 %v1328, %v1327
      %v1343 = vpack.c.b16 %v1330, %v1329
      %v1344 = vpack.c.b16 %v1332, %v1331
      %v1345 = vpack.c.b16 %v1334, %v1333
      %v1346 = vpack.c.b16 %v1336, %v1335
      %v1347 = vpack.c.b16 %v1338, %v1337
      %v1348 = vpack.c.b16 %v1340, %v1339
      %1357 = vmatprep.subr.bf16.mxu0 0
      %1358 = vmatpush1.bf16.msra.mxu0 %v1348
      %1359 = vmatprep.subr.bf16.mxu0 0
      %1360 = vmatpush1.bf16.msra.mxu0 %v1347
      %1361 = vmatprep.subr.bf16.mxu0 0
      %1362 = vmatpush1.bf16.msra.mxu0 %v1346
      %1363 = vmatprep.subr.bf16.mxu0 0
      %1364 = vmatpush1.bf16.msra.mxu0 %v1345
      %1365 = vmatprep.subr.bf16.mxu0 0
      %1366 = vmatpush1.bf16.msra.mxu0 %v1344
      %1367 = vmatprep.subr.bf16.mxu0 0
      %1368 = vmatpush1.bf16.msra.mxu0 %v1343
      %1369 = vmatprep.subr.bf16.mxu0 0
      %1370 = vmatpush1.bf16.msra.mxu0 %v1342
      %1371 = vmatprep.subr.bf16.mxu0 0
      %1372 = vmatpush1.bf16.msra.mxu0 %v1341
      %1373 = vmatprep.subr.bf16.mxu0 0
      %1374 = vmatpush2.bf16.msra.mxu0 0
      %1375 = vmatprep.subr.bf16.mxu0 0
      %1376 = vmatpush2.bf16.msra.mxu0 0
      %1377 = vmatprep.subr.bf16.mxu0 0
      %1378 = vmatpush2.bf16.msra.mxu0 0
      %1379 = vmatprep.subr.bf16.mxu0 0
      %1380 = vmatpush2.bf16.msra.mxu0 0
      %1381 = vmatprep.subr.bf16.mxu0 0
      %1382 = vmatpush2.bf16.msra.mxu0 0
      %1383 = vmatprep.subr.bf16.mxu0 0
      %1384 = vmatpush2.bf16.msra.mxu0 0
      %1385 = vmatprep.subr.bf16.mxu0 0
      %1386 = vmatpush2.bf16.msra.mxu0 0
      %1387 = vmatprep.subr.bf16.mxu0 0
      %1388 = vmatpush2.bf16.msra.mxu0 0
      %1389 = vmatprep.mubr.bf16.mxu0 0
      %1390 = vmatmul.mubr.bf16.gmra.mxu0 %v1301
      %v1391 = vpop.f32.mrf.mxu0
      %v1392 = vadd.f32 0.0, %v1391
      %v1393 = vpop.f32.mrf.mxu0
      %v1394 = vpop.f32.mrf.mxu0
      %v1395 = vadd.f32 0.0, %v1394
      %v1396 = vpop.f32.mrf.mxu0
      %1397 = vmatprep.mubr.bf16.mxu0 0
      %1398 = vmatmul.mubr.bf16.gmra.mxu0 %v1302
      %v1399 = vpop.f32.mrf.mxu0
      %v1400 = vadd.f32 0.0, %v1399
      %v1401 = vpop.f32.mrf.mxu0
      %v1402 = vpop.f32.mrf.mxu0
      %v1403 = vadd.f32 0.0, %v1402
      %v1404 = vpop.f32.mrf.mxu0
      %1405 = vmatprep.mubr.bf16.mxu0 0
      %1406 = vmatmul.mubr.bf16.gmra.mxu0 %v1303
      %v1407 = vpop.f32.mrf.mxu0
      %v1408 = vadd.f32 0.0, %v1407
      %v1409 = vpop.f32.mrf.mxu0
      %v1410 = vpop.f32.mrf.mxu0
      %v1411 = vadd.f32 0.0, %v1410
      %v1412 = vpop.f32.mrf.mxu0
      %1413 = vmatprep.mubr.bf16.mxu0 0
      %1414 = vmatmul.mubr.bf16.gmra.mxu0 %v1304
      %v1415 = vpop.f32.mrf.mxu0
      %v1416 = vadd.f32 0.0, %v1415
      %v1417 = vpop.f32.mrf.mxu0
      %v1418 = vpop.f32.mrf.mxu0
      %v1419 = vadd.f32 0.0, %v1418
      %v1420 = vpop.f32.mrf.mxu0
      %1421 = vdwg.mxu0
      %v1422 = vadd.f32 %v1232, %v1392
      %v1423 = vadd.f32 %v1233, %v1395
      %v1424 = vadd.f32 %v1234, %v1400
      %v1425 = vadd.f32 %v1235, %v1403
      %v1426 = vadd.f32 %v1236, %v1408
      %v1427 = vadd.f32 %v1237, %v1411
      %v1428 = vadd.f32 %v1238, %v1416
      %v1429 = vadd.f32 %v1239, %v1419
      %v1430 = vpack.c.b16 %v1293, %v1292
      %v1431 = vpack.c.b16 %v1295, %v1294
      %v1432 = vpack.c.b16 %v1297, %v1296
      %v1433 = vpack.c.b16 %v1299, %v1298
      %v1454 = vunpack.c.l.b16 %v340
      %v1455 = vunpack.c.l.b16 %v341
      %v1456 = vunpack.c.l.b16 %v342
      %v1457 = vunpack.c.l.b16 %v343
      %v1458 = vunpack.c.l.b16 %v344
      %v1459 = vunpack.c.l.b16 %v345
      %v1460 = vunpack.c.l.b16 %v346
      %v1461 = vunpack.c.l.b16 %v347
      %v1462 = vunpack.c.l.b16 %v348
      %v1463 = vunpack.c.l.b16 %v349
      %v1464 = vunpack.c.l.b16 %v350
      %v1465 = vunpack.c.l.b16 %v351
      %v1466 = vunpack.c.l.b16 %v352
      %v1467 = vunpack.c.l.b16 %v353
      %v1468 = vunpack.c.l.b16 %v354
      %v1469 = vunpack.c.l.b16 %v355
      %v1470 = vpack.c.b16 %v1455, %v1454
      %v1471 = vpack.c.b16 %v1457, %v1456
      %v1472 = vpack.c.b16 %v1459, %v1458
      %v1473 = vpack.c.b16 %v1461, %v1460
      %v1474 = vpack.c.b16 %v1463, %v1462
      %v1475 = vpack.c.b16 %v1465, %v1464
      %v1476 = vpack.c.b16 %v1467, %v1466
      %v1477 = vpack.c.b16 %v1469, %v1468
      %1486 = vmatprep.subr.bf16.mxu0 0
      %1487 = vmatpush1.bf16.msra.mxu0 %v1477
      %1488 = vmatprep.subr.bf16.mxu0 0
      %1489 = vmatpush1.bf16.msra.mxu0 %v1476
      %1490 = vmatprep.subr.bf16.mxu0 0
      %1491 = vmatpush1.bf16.msra.mxu0 %v1475
      %1492 = vmatprep.subr.bf16.mxu0 0
      %1493 = vmatpush1.bf16.msra.mxu0 %v1474
      %1494 = vmatprep.subr.bf16.mxu0 0
      %1495 = vmatpush1.bf16.msra.mxu0 %v1473
      %1496 = vmatprep.subr.bf16.mxu0 0
      %1497 = vmatpush1.bf16.msra.mxu0 %v1472
      %1498 = vmatprep.subr.bf16.mxu0 0
      %1499 = vmatpush1.bf16.msra.mxu0 %v1471
      %1500 = vmatprep.subr.bf16.mxu0 0
      %1501 = vmatpush1.bf16.msra.mxu0 %v1470
      %1502 = vmatprep.subr.bf16.mxu0 0
      %1503 = vmatpush2.bf16.msra.mxu0 0
      %1504 = vmatprep.subr.bf16.mxu0 0
      %1505 = vmatpush2.bf16.msra.mxu0 0
      %1506 = vmatprep.subr.bf16.mxu0 0
      %1507 = vmatpush2.bf16.msra.mxu0 0
      %1508 = vmatprep.subr.bf16.mxu0 0
      %1509 = vmatpush2.bf16.msra.mxu0 0
      %1510 = vmatprep.subr.bf16.mxu0 0
      %1511 = vmatpush2.bf16.msra.mxu0 0
      %1512 = vmatprep.subr.bf16.mxu0 0
      %1513 = vmatpush2.bf16.msra.mxu0 0
      %1514 = vmatprep.subr.bf16.mxu0 0
      %1515 = vmatpush2.bf16.msra.mxu0 0
      %1516 = vmatprep.subr.bf16.mxu0 0
      %1517 = vmatpush2.bf16.msra.mxu0 0
      %1518 = vmatprep.mubr.bf16.mxu0 0
      %1519 = vmatmul.mubr.bf16.gmra.mxu0 %v1430
      %v1520 = vpop.f32.mrf.mxu0
      %v1521 = vadd.f32 0.0, %v1520
      %v1522 = vpop.f32.mrf.mxu0
      %v1523 = vpop.f32.mrf.mxu0
      %v1524 = vadd.f32 0.0, %v1523
      %v1525 = vpop.f32.mrf.mxu0
      %1526 = vmatprep.mubr.bf16.mxu0 0
      %1527 = vmatmul.mubr.bf16.gmra.mxu0 %v1431
      %v1528 = vpop.f32.mrf.mxu0
      %v1529 = vadd.f32 0.0, %v1528
      %v1530 = vpop.f32.mrf.mxu0
      %v1531 = vpop.f32.mrf.mxu0
      %v1532 = vadd.f32 0.0, %v1531
      %v1533 = vpop.f32.mrf.mxu0
      %1534 = vmatprep.mubr.bf16.mxu0 0
      %1535 = vmatmul.mubr.bf16.gmra.mxu0 %v1432
      %v1536 = vpop.f32.mrf.mxu0
      %v1537 = vadd.f32 0.0, %v1536
      %v1538 = vpop.f32.mrf.mxu0
      %v1539 = vpop.f32.mrf.mxu0
      %v1540 = vadd.f32 0.0, %v1539
      %v1541 = vpop.f32.mrf.mxu0
      %1542 = vmatprep.mubr.bf16.mxu0 0
      %1543 = vmatmul.mubr.bf16.gmra.mxu0 %v1433
      %v1544 = vpop.f32.mrf.mxu0
      %v1545 = vadd.f32 0.0, %v1544
      %v1546 = vpop.f32.mrf.mxu0
      %v1547 = vpop.f32.mrf.mxu0
      %v1548 = vadd.f32 0.0, %v1547
      %v1549 = vpop.f32.mrf.mxu0
      %1550 = vdwg.mxu0
      %v1551 = vadd.f32 %v1422, %v1521
      %v1552 = vadd.f32 %v1423, %v1524
      %v1553 = vadd.f32 %v1424, %v1529
      %v1554 = vadd.f32 %v1425, %v1532
      %v1555 = vadd.f32 %v1426, %v1537
      %v1556 = vadd.f32 %v1427, %v1540
      %v1557 = vadd.f32 %v1428, %v1545
      %v1558 = vadd.f32 %v1429, %v1548
      %v1559 = vpack.c.b16 %v1300, %v1299
      %v1577 = vunpack.c.l.b16 %v388
      %v1578 = vunpack.c.l.b16 %v389
      %v1579 = vunpack.c.l.b16 %v390
      %v1580 = vunpack.c.l.b16 %v391
      %v1581 = vunpack.c.l.b16 %v392
      %v1582 = vunpack.c.l.b16 %v393
      %v1583 = vunpack.c.l.b16 %v394
      %v1584 = vunpack.c.l.b16 %v395
      %v1585 = vunpack.c.l.b16 %v396
      %v1586 = vunpack.c.l.b16 %v397
      %v1587 = vunpack.c.l.b16 %v398
      %v1588 = vunpack.c.l.b16 %v399
      %v1589 = vunpack.c.l.b16 %v400
      %v1590 = vunpack.c.l.b16 %v401
      %v1591 = vunpack.c.l.b16 %v402
      %v1592 = vunpack.c.l.b16 %v403
      %v1593 = vpack.c.b16 %v1578, %v1577
      %v1594 = vpack.c.b16 %v1580, %v1579
      %v1595 = vpack.c.b16 %v1582, %v1581
      %v1596 = vpack.c.b16 %v1584, %v1583
      %v1597 = vpack.c.b16 %v1586, %v1585
      %v1598 = vpack.c.b16 %v1588, %v1587
      %v1599 = vpack.c.b16 %v1590, %v1589
      %v1600 = vpack.c.b16 %v1592, %v1591
      %1609 = vmatprep.subr.bf16.mxu0 0
      %1610 = vmatpush1.bf16.msra.mxu0 %v1600
      %1611 = vmatprep.subr.bf16.mxu0 0
      %1612 = vmatpush1.bf16.msra.mxu0 %v1599
      %1613 = vmatprep.subr.bf16.mxu0 0
      %1614 = vmatpush1.bf16.msra.mxu0 %v1598
      %1615 = vmatprep.subr.bf16.mxu0 0
      %1616 = vmatpush1.bf16.msra.mxu0 %v1597
      %1617 = vmatprep.subr.bf16.mxu0 0
      %1618 = vmatpush1.bf16.msra.mxu0 %v1596
      %1619 = vmatprep.subr.bf16.mxu0 0
      %1620 = vmatpush1.bf16.msra.mxu0 %v1595
      %1621 = vmatprep.subr.bf16.mxu0 0
      %1622 = vmatpush1.bf16.msra.mxu0 %v1594
      %1623 = vmatprep.subr.bf16.mxu0 0
      %1624 = vmatpush1.bf16.msra.mxu0 %v1593
      %1625 = vmatprep.subr.bf16.mxu0 0
      %1626 = vmatpush2.bf16.msra.mxu0 0
      %1627 = vmatprep.subr.bf16.mxu0 0
      %1628 = vmatpush2.bf16.msra.mxu0 0
      %1629 = vmatprep.subr.bf16.mxu0 0
      %1630 = vmatpush2.bf16.msra.mxu0 0
      %1631 = vmatprep.subr.bf16.mxu0 0
      %1632 = vmatpush2.bf16.msra.mxu0 0
      %1633 = vmatprep.subr.bf16.mxu0 0
      %1634 = vmatpush2.bf16.msra.mxu0 0
      %1635 = vmatprep.subr.bf16.mxu0 0
      %1636 = vmatpush2.bf16.msra.mxu0 0
      %1637 = vmatprep.subr.bf16.mxu0 0
      %1638 = vmatpush2.bf16.msra.mxu0 0
      %1639 = vmatprep.subr.bf16.mxu0 0
      %1640 = vmatpush2.bf16.msra.mxu0 0
      %1641 = vmatprep.mubr.bf16.mxu0 0
      %1642 = vmatmul.mubr.bf16.gmra.mxu0 %v1302
      %v1643 = vpop.f32.mrf.mxu0
      %v1644 = vadd.f32 0.0, %v1643
      %v1645 = vpop.f32.mrf.mxu0
      %v1646 = vpop.f32.mrf.mxu0
      %v1647 = vadd.f32 0.0, %v1646
      %v1648 = vpop.f32.mrf.mxu0
      %1649 = vmatprep.mubr.bf16.mxu0 0
      %1650 = vmatmul.mubr.bf16.gmra.mxu0 %v1303
      %v1651 = vpop.f32.mrf.mxu0
      %v1652 = vadd.f32 0.0, %v1651
      %v1653 = vpop.f32.mrf.mxu0
      %v1654 = vpop.f32.mrf.mxu0
      %v1655 = vadd.f32 0.0, %v1654
      %v1656 = vpop.f32.mrf.mxu0
      %1657 = vmatprep.mubr.bf16.mxu0 0
      %1658 = vmatmul.mubr.bf16.gmra.mxu0 %v1304
      %v1659 = vpop.f32.mrf.mxu0
      %v1660 = vadd.f32 0.0, %v1659
      %v1661 = vpop.f32.mrf.mxu0
      %v1662 = vpop.f32.mrf.mxu0
      %v1663 = vadd.f32 0.0, %v1662
      %v1664 = vpop.f32.mrf.mxu0
      %1665 = vmatprep.mubr.bf16.mxu0 0
      %1666 = vmatmul.mubr.bf16.gmra.mxu0 %v1559
      %v1667 = vpop.f32.mrf.mxu0
      %v1668 = vadd.f32 0.0, %v1667
      %v1669 = vpop.f32.mrf.mxu0
      %v1670 = vpop.f32.mrf.mxu0
      %v1671 = vadd.f32 0.0, %v1670
      %v1672 = vpop.f32.mrf.mxu0
      %1673 = vdwg.mxu0
      %v1674 = vadd.f32 %v1551, %v1644
      %v1675 = vadd.f32 %v1552, %v1647
      %v1676 = vadd.f32 %v1553, %v1652
      %v1677 = vadd.f32 %v1554, %v1655
      %v1678 = vadd.f32 %v1555, %v1660
      %v1679 = vadd.f32 %v1556, %v1663
      %v1680 = vadd.f32 %v1557, %v1668
      %v1681 = vadd.f32 %v1558, %v1671
      %v1682 = vld [vmem:[%s231] sm:$0x1]
      %v1684 = vlaneseq
      %v1685 = vshrl.u32 %v1684, 7
      %v1686 = vsub.s32 0, %v1685
      %v1687 = vrot.slane %v1682, %v1686
      %v1689 = vadd.f32 %v1674, %v1687
      %v1690 = vadd.f32 %v1675, %v1687
      %v1691 = vadd.f32 %v1676, %v1687
      %v1692 = vadd.f32 %v1677, %v1687
      %v1693 = vadd.f32 %v1678, %v1687
      %v1694 = vadd.f32 %v1679, %v1687
      %v1695 = vadd.f32 %v1680, %v1687
      %v1696 = vadd.f32 %v1681, %v1687
      %v1697 = vmax.f32 %v1689, 0.0
      %v1698 = vmax.f32 %v1690, 0.0
      %v1699 = vmax.f32 %v1691, 0.0
      %v1700 = vmax.f32 %v1692, 0.0
      %v1701 = vmax.f32 %v1693, 0.0
      %v1702 = vmax.f32 %v1694, 0.0
      %v1703 = vmax.f32 %v1695, 0.0
      %v1704 = vmax.f32 %v1696, 0.0
      %v1705 = vpack.c.bf16 %v1697, %v1697
      %v1706 = vpack.c.bf16 %v1698, %v1698
      %v1707 = vpack.c.bf16 %v1699, %v1699
      %v1708 = vpack.c.bf16 %v1700, %v1700
      %v1709 = vpack.c.bf16 %v1701, %v1701
      %v1710 = vpack.c.bf16 %v1702, %v1702
      %v1711 = vpack.c.bf16 %v1703, %v1703
      %v1712 = vpack.c.bf16 %v1704, %v1704
      %1713 = vst [vmem:[%s240] sm:$0xf] %v1705
      %1714 = vst [vmem:[%s240 + $0x4] sm:$0xf] %v1706
      %1715 = vst [vmem:[%s240 + $0x8] sm:$0xf] %v1707
      %1716 = vst [vmem:[%s240 + $0xc] sm:$0xf] %v1708
      %1717 = vst [vmem:[%s240 + $0x10] sm:$0xf] %v1709
      %1718 = vst [vmem:[%s240 + $0x14] sm:$0xf] %v1710
      %1719 = vst [vmem:[%s240 + $0x18] sm:$0xf] %v1711
      %1720 = vst [vmem:[%s240 + $0x1c] sm:$0xf] %v1712
      %p1721 = scmp.lt.s32.totalorder %s18, 7
      %s1722 = scalar_select %p1721, %s18, 7
      %p1723 = scmp.lt.s32.totalorder %s19, 1
      %s1724 = scalar_select %p1723, %s19, 1
      %s1725 = smul.addr %s1724, 8
      %s1726 = smul.addr %s1722, 16
      %s1727 = sadd.s32 %s1725, %s1726
      %s1728 = smul.addr %s1727, 4
      %s1729 = scalar_lea.vmem %s3, %s1728
      // Predicated region
      $region33: #{conv_bimla_forward.3} parent=31 // pred_check
        %p1730 = pneg %p126
      $region34: #{conv_bimla_forward.3} parent=31 // pred_check_branch
        %1732 = sbr.rel (%p1730) target = $region36
      $region35: #{conv_bimla_forward.3} parent=31 // pred_region
        _
      $region36: #{conv_bimla_forward.3} parent=31 // pred_fallthru
        _
    $region32: #{conv_bimla_forward.3} parent=5 // pred_fallthru
      _
    %p1733 = scmp.le.s32.totalorder 2, %s9
    // Predicated region
    $region37: #{conv_bimla_forward.3} parent=5 // pred_check
      %p1734 = pneg %p1733
    $region38: #{conv_bimla_forward.3} parent=5 // pred_check_branch
      %1736 = sbr.rel (%p1734) target = $region40
    $region39: #{conv_bimla_forward.3} parent=5 // pred_region
      %s1737 = ssub.s32 %s9, 2
      // Predicated region
      $region41: #{conv_bimla_forward.3} parent=39 // pred_check
        %p1738 = pneg %p132
      $region42: #{conv_bimla_forward.3} parent=39 // pred_check_branch
        %1740 = sbr.rel (%p1738) target = $region44
      $region43: #{conv_bimla_forward.3} parent=39 // pred_region
        %p1741 = scmp.lt.s32.totalorder %s20, 7
        %s1742 = scalar_select %p1741, %s20, 7
        %p1743 = scmp.lt.s32.totalorder %s21, 1
        %s1744 = scalar_select %p1743, %s21, 1
        %s1745 = smul.addr %s1744, 8
        %s1746 = smul.addr %s1742, 16
        %s1747 = sadd.s32 %s1745, %s1746
        %s1748 = smul.addr %s1747, 4
        %s1749 = scalar_lea.vmem %s3, %s1748
      $region44: #{conv_bimla_forward.3} parent=39 // pred_fallthru
        _
    $region40: #{conv_bimla_forward.3} parent=5 // pred_fallthru
      _
  $region6: #{conv_bimla_forward.3} parent=0 // loop_footer
    %s13 = sadd.s32 1, %s9
  $region7: #{conv_bimla_forward.3} parent=0 // loop_footer_branch
    %8 = sbr.rel target = $region3
  $region8: #{conv_bimla_forward.3} parent=0 // loop_exit
    _

</llo_original>
